<compile_context>
chip_gen: v6e
topology: v6e:2x2x1
jax: 0.10.0
libtpu: 0.0.40
codegen_flags: <defaults>
</compile_context>

<pallas_src>
import functools
import math

import jax
import jax.numpy as jnp
from jax import lax
from jax.experimental import pallas as pl
from jax.experimental.pallas import tpu as pltpu


def _flash_self_attention_kernel(
    xq_ref, xkv_ref,             # activations: (1, bq, H), (1, bk, H)
    wq_ref, wkv_ref,             # weights (bf16): (H, H), (H, 2H) = [Wk | Wv]
    bq_ref, bv_ref,              # biases (f32): (1, H) each (K bias cancels in softmax)
    o_ref,                       # output: (1, bq, H)
    q_sc, m_sc, l_sc, acc_sc,    # per-query-tile scratch
    k_cache, v_cache,            # (S, H) bf16 projected K/V caches (filled at qi == 0)
    *, sm_scale, block_k,
):
    qi = pl.program_id(1)
    ki = pl.program_id(2)
    hidden = q_sc.shape[1]

    @pl.when(ki == 0)
    def _init_q_tile():
        # Project Q for this query tile once; fold the 1/sqrt(H) scale into q.
        xq = xq_ref[0].astype(jnp.bfloat16)
        q = jnp.dot(xq, wq_ref[...], preferred_element_type=jnp.float32) + bq_ref[...]
        q_sc[...] = (q * sm_scale).astype(jnp.bfloat16)
        m_sc[...] = jnp.full(m_sc.shape, -jnp.inf, dtype=m_sc.dtype)
        l_sc[...] = jnp.zeros(l_sc.shape, dtype=l_sc.dtype)
        acc_sc[...] = jnp.zeros(acc_sc.shape, dtype=acc_sc.dtype)

    @pl.when(qi == 0)
    def _fill_kv_cache():
        # Project K and V for this kv tile once per batch element with a single
        # fused (bk, H) x (H, 2H) matmul; cache the bf16 results in VMEM.
        # K bias dropped (constant over keys -> cancels in softmax); V bias is
        # applied post-normalization in the finalize step.
        xkv = xkv_ref[0].astype(jnp.bfloat16)
        kv = jnp.dot(xkv, wkv_ref[...], preferred_element_type=jnp.float32)
        off = pl.multiple_of(ki * block_k, block_k)
        k_cache[pl.ds(off, block_k), :] = kv[:, :hidden].astype(jnp.bfloat16)
        v_cache[pl.ds(off, block_k), :] = kv[:, hidden:].astype(jnp.bfloat16)

    off = pl.multiple_of(ki * block_k, block_k)
    k = k_cache[pl.ds(off, block_k), :]
    v = v_cache[pl.ds(off, block_k), :]

    # Scores: contract the last dims of q and k directly (no k.T materialization).
    s = lax.dot_general(q_sc[...], k, (((1,), (1,)), ((), ())),
                        preferred_element_type=jnp.float32)        # (bq, bk)

    # Online (streaming) softmax update.
    m_prev = m_sc[...]
    m_new = jnp.maximum(m_prev, jnp.max(s, axis=-1, keepdims=True))
    alpha = jnp.exp(m_prev - m_new)                                 # rescale factor
    p = jnp.exp(s - m_new)                                          # unnormalized probs
    l_sc[...] = alpha * l_sc[...] + jnp.sum(p, axis=-1, keepdims=True)
    acc_sc[...] = alpha * acc_sc[...] + jnp.dot(
        p.astype(jnp.bfloat16), v, preferred_element_type=jnp.float32)
    m_sc[...] = m_new

    # TODO(synk): nn.Dropout(0.1) on the attention weights is identity in eval mode;
    # training-mode stochastic dropout (pltpu.prng_random_bits + mask/scale) omitted.
    # TODO(synk): the optional `mask` argument of the PyTorch forward (and its debug
    # print of the softmax) are not implemented; this is the mask=None path.

    @pl.when(ki == pl.num_programs(2) - 1)
    def _finalize():
        inv_l = pl.reciprocal(l_sc[...], approx=True)               # EUP, co-issues
        # V bias added exactly here since sum_j softmax_ij = 1.
        o_ref[0] = (acc_sc[...] * inv_l + bv_ref[...]).astype(o_ref.dtype)


def prepare_qkv_params(w_qkv, b_qkv):
    """One-time prep (hoisted out of the per-call path): split + bf16-cast weights.

    w_qkv: (H, 3H) pre-transposed nn.Linear weight; b_qkv: (3H,).
    Returns (wq_bf16, wkv_bf16, bq_f32, bv_f32). The K bias is dropped because
    q . b_k is constant across keys and cancels in the softmax.
    """
    H = w_qkv.shape[1] // 3
    wq = w_qkv[:, :H].astype(jnp.bfloat16)
    wkv = w_qkv[:, H:].astype(jnp.bfloat16)                 # (H, 2H): [Wk | Wv]
    bq = b_qkv[:H].reshape(1, H).astype(jnp.float32)
    bv = b_qkv[2 * H:].reshape(1, H).astype(jnp.float32)
    return wq, wkv, bq, bv


def self_attention(x, wq, wkv, bq, bv, *, block_q=256, block_k=256):
    """x: (B, S, H) f32; prepared params from prepare_qkv_params -> (B, S, H)."""
    B, S, H = x.shape
    assert wq.shape == (H, H) and wkv.shape == (H, 2 * H)
    assert bq.shape == (1, H) and bv.shape == (1, H)
    block_q = min(block_q, S)
    block_k = min(block_k, S)
    assert S % block_q == 0 and S % block_k == 0, "S must divide by the tile sizes"

    grid = (B, S // block_q, S // block_k)
    kernel = functools.partial(_flash_self_attention_kernel,
                               sm_scale=1.0 / math.sqrt(H), block_k=block_k)
    const = lambda b, qi, ki: (0, 0)

    return pl.pallas_call(
        kernel,
        out_shape=jax.ShapeDtypeStruct((B, S, H), x.dtype),
        grid_spec=pltpu.PrefetchScalarGridSpec(
            num_scalar_prefetch=0,
            grid=grid,
            in_specs=[
                # x (query rows)
                pl.BlockSpec((1, block_q, H), lambda b, qi, ki: (b, qi, 0)),
                # x (kv rows): only consumed on the qi == 0 cache-fill pass, so the
                # index collapses to block 0 afterwards and the pipeline skips the
                # redundant HBM re-fetches.
                pl.BlockSpec((1, block_k, H),
                             lambda b, qi, ki: (b, jnp.where(qi == 0, ki, 0), 0)),
                pl.BlockSpec((H, H), const),          # Wq
                pl.BlockSpec((H, 2 * H), const),      # Wkv (fused K|V)
                pl.BlockSpec((1, H), const),          # bq
                pl.BlockSpec((1, H), const),          # bv
            ],
            out_specs=pl.BlockSpec((1, block_q, H), lambda b, qi, ki: (b, qi, 0)),
            scratch_shapes=[
                pltpu.VMEM((block_q, H), jnp.bfloat16),   # cached scaled q tile
                pltpu.VMEM((block_q, 1), jnp.float32),    # running max
                pltpu.VMEM((block_q, 1), jnp.float32),    # running sum
                pltpu.VMEM((block_q, H), jnp.float32),    # output accumulator
                pltpu.VMEM((S, H), jnp.bfloat16),         # projected K cache
                pltpu.VMEM((S, H), jnp.bfloat16),         # projected V cache
            ],
        ),
        compiler_params=pltpu.CompilerParams(
            # qi must stay sequential (K/V cache filled at qi == 0 and reused later);
            # batch axis can still shard across TensorCores.
            dimension_semantics=("parallel", "arbitrary", "arbitrary"),
            vmem_limit_bytes=32 * 1024 * 1024,
        ),
    )(x, x, wq, wkv, bq, bv)


def reference_self_attention(x, w_qkv, b_qkv):
    # Pure-JAX f32 reference matching the PyTorch module in eval mode (mask=None).
    H = x.shape[-1]
    qkv = x @ w_qkv + b_qkv
    q, k, v = qkv[..., :H], qkv[..., H:2 * H], qkv[..., 2 * H:]
    score = jnp.einsum("bqd,bkd->bqk", q, k) / math.sqrt(H)
    attn = jax.nn.softmax(score, axis=-1)
    return jnp.einsum("bqk,bkd->bqd", attn, v)


if __name__ == "__main__":
    # TPU-friendly shapes: lane-dense hidden dim (H = 128); S = 512 with 256-tiles
    # gives grid (B, 2, 2), exercising both the qi == 0 cache-fill / qi == 1 reuse
    # path and the multi-tile online-softmax accumulation path.
    B, S, H = 2, 512, 128
    key = jax.random.PRNGKey(0)
    kx, kw, kb = jax.random.split(key, 3)

    x = jax.random.normal(kx, (B, S, H), dtype=jnp.float32)
    # Deterministic init mirroring nn.Linear(hidden_dim, 3*hidden_dim):
    # PyTorch weight is (3H, H); we keep it pre-transposed as (H, 3H).
    bound = 1.0 / math.sqrt(H)
    w_qkv = jax.random.uniform(kw, (H, 3 * H), minval=-bound, maxval=bound,
                               dtype=jnp.float32)
    b_qkv = jax.random.uniform(kb, (3 * H,), minval=-bound, maxval=bound,
                               dtype=jnp.float32)

    params = prepare_qkv_params(w_qkv, b_qkv)      # hoisted one-time weight prep
    out = self_attention(x, *params)
    out = jax.block_until_ready(out)

    ref = reference_self_attention(x, w_qkv, b_qkv)
    assert out.shape == (B, S, H)
    # bf16 MXU inputs + approx reciprocal -> compare with a correspondingly
    # loosened (but still tight) tolerance against the f32 reference.
    assert jnp.allclose(out, ref, atol=2e-2, rtol=2e-2), "mismatch vs reference"

    print("KERNEL_OK")
</pallas_src>

<mosaic_0001>
module attributes {stable_mosaic.version = 11 : i64} {
  func.func @_flash_self_attention_kernel(%arg0: i32, %arg1: i32, %arg2: i32, %arg3: memref<1x256x128xf32, #tpu.memory_space<vmem>>, %arg4: memref<1x256x128xf32, #tpu.memory_space<vmem>>, %arg5: memref<128x128xbf16, #tpu.memory_space<vmem>>, %arg6: memref<128x256xbf16, #tpu.memory_space<vmem>>, %arg7: memref<1x128xf32, #tpu.memory_space<vmem>>, %arg8: memref<1x128xf32, #tpu.memory_space<vmem>>, %arg9: memref<1x256x128xf32, #tpu.memory_space<vmem>>, %arg10: memref<256x128xbf16, #tpu.memory_space<vmem>>, %arg11: memref<256x1xf32, #tpu.memory_space<vmem>>, %arg12: memref<256x1xf32, #tpu.memory_space<vmem>>, %arg13: memref<256x128xf32, #tpu.memory_space<vmem>>, %arg14: memref<512x128xbf16, #tpu.memory_space<vmem>>, %arg15: memref<512x128xbf16, #tpu.memory_space<vmem>>) attributes {dimension_semantics = [#tpu.dimension_semantics<parallel>, #tpu.dimension_semantics<arbitrary>, #tpu.dimension_semantics<arbitrary>], iteration_bounds = array<i64: 2, 2, 2>, scalar_prefetch = 0 : i64, scratch_operands = 6 : i64, tpu.core_type = #tpu.core_type<tc>, window_params = [{transform_indices = @transform_0, window_bounds = array<i64: 1, 256, 128>}, {transform_indices = @transform_1, window_bounds = array<i64: 1, 256, 128>}, {pipeline_mode = #tpu.pipeline_mode<synchronous>, transform_indices = @transform_2, window_bounds = array<i64: 128, 128>}, {pipeline_mode = #tpu.pipeline_mode<synchronous>, transform_indices = @transform_3, window_bounds = array<i64: 128, 256>}, {pipeline_mode = #tpu.pipeline_mode<synchronous>, transform_indices = @transform_4, window_bounds = array<i64: 1, 128>}, {pipeline_mode = #tpu.pipeline_mode<synchronous>, transform_indices = @transform_5, window_bounds = array<i64: 1, 128>}, {transform_indices = @transform_6, window_bounds = array<i64: 1, 256, 128>}]} {
    %c0_i32 = arith.constant 0 : i32
    %0 = arith.cmpi eq, %arg2, %c0_i32 : i32
    %1 = arith.extui %0 : i1 to i32
    %c0_i32_0 = arith.constant 0 : i32
    %2 = arith.cmpi ne, %1, %c0_i32_0 : i32
    scf.if %2 {
      %c0_22 = arith.constant 0 : index
      %c0_23 = arith.constant 0 : index
      %c0_24 = arith.constant 0 : index
      %40 = vector.load %arg3[%c0_22, %c0_23, %c0_24] : memref<1x256x128xf32, #tpu.memory_space<vmem>>, vector<1x256x128xf32>
      %41 = vector.shape_cast %40 : vector<1x256x128xf32> to vector<256x128xf32>
      %42 = arith.truncf %41 : vector<256x128xf32> to vector<256x128xbf16>
      %c0_25 = arith.constant 0 : index
      %c0_26 = arith.constant 0 : index
      %43 = vector.load %arg5[%c0_25, %c0_26] : memref<128x128xbf16, #tpu.memory_space<vmem>>, vector<128x128xbf16>
      %cst_27 = arith.constant dense<0.000000e+00> : vector<256x128xf32>
      %44 = tpu.matmul %42, %43, %cst_27 {dimension_numbers = #tpu.dot_dimension_numbers<[1], [0], [0], [1], [0, 0, 1, 1], [], []>} : vector<256x128xbf16>, vector<128x128xbf16>, vector<256x128xf32> -> vector<256x128xf32>
      %c0_28 = arith.constant 0 : index
      %c0_29 = arith.constant 0 : index
      %45 = vector.load %arg7[%c0_28, %c0_29] : memref<1x128xf32, #tpu.memory_space<vmem>>, vector<1x128xf32>
      %46 = vector.broadcast %45 : vector<1x128xf32> to vector<256x128xf32>
      %47 = arith.addf %44, %46 : vector<256x128xf32>
      %cst_30 = arith.constant 0.0883883461 : f32
      %48 = vector.broadcast %cst_30 : f32 to vector<256x128xf32>
      %49 = arith.mulf %47, %48 : vector<256x128xf32>
      %50 = arith.truncf %49 : vector<256x128xf32> to vector<256x128xbf16>
      %c0_31 = arith.constant 0 : index
      %c0_32 = arith.constant 0 : index
      %51 = vector.load %arg10[%c0_31, %c0_32] : memref<256x128xbf16, #tpu.memory_space<vmem>>, vector<256x128xbf16>
      tpu.vector_store %arg10[%c0_31, %c0_32], %50 {strides = array<i32>} : memref<256x128xbf16, #tpu.memory_space<vmem>>, vector<256x128xbf16>,
      %cst_33 = arith.constant 0xFF800000 : f32
      %52 = vector.broadcast %cst_33 : f32 to vector<256x1xf32>
      %c0_34 = arith.constant 0 : index
      %c0_35 = arith.constant 0 : index
      %53 = vector.load %arg11[%c0_34, %c0_35] : memref<256x1xf32, #tpu.memory_space<vmem>>, vector<256x1xf32>
      tpu.vector_store %arg11[%c0_34, %c0_35], %52 {strides = array<i32>} : memref<256x1xf32, #tpu.memory_space<vmem>>, vector<256x1xf32>,
      %cst_36 = arith.constant 0.000000e+00 : f32
      %54 = vector.broadcast %cst_36 : f32 to vector<256x1xf32>
      %c0_37 = arith.constant 0 : index
      %c0_38 = arith.constant 0 : index
      %55 = vector.load %arg12[%c0_37, %c0_38] : memref<256x1xf32, #tpu.memory_space<vmem>>, vector<256x1xf32>
      tpu.vector_store %arg12[%c0_37, %c0_38], %54 {strides = array<i32>} : memref<256x1xf32, #tpu.memory_space<vmem>>, vector<256x1xf32>,
      %cst_39 = arith.constant 0.000000e+00 : f32
      %56 = vector.broadcast %cst_39 : f32 to vector<256x128xf32>
      %c0_40 = arith.constant 0 : index
      %c0_41 = arith.constant 0 : index
      %57 = vector.load %arg13[%c0_40, %c0_41] : memref<256x128xf32, #tpu.memory_space<vmem>>, vector<256x128xf32>
      tpu.vector_store %arg13[%c0_40, %c0_41], %56 {strides = array<i32>} : memref<256x128xf32, #tpu.memory_space<vmem>>, vector<256x128xf32>,
    } else {
    }
    %c0_i32_1 = arith.constant 0 : i32
    %3 = arith.cmpi eq, %arg1, %c0_i32_1 : i32
    %4 = arith.extui %3 : i1 to i32
    %c0_i32_2 = arith.constant 0 : i32
    %5 = arith.cmpi ne, %4, %c0_i32_2 : i32
    scf.if %5 {
      %c0_22 = arith.constant 0 : index
      %c0_23 = arith.constant 0 : index
      %c0_24 = arith.constant 0 : index
      %40 = vector.load %arg4[%c0_22, %c0_23, %c0_24] : memref<1x256x128xf32, #tpu.memory_space<vmem>>, vector<1x256x128xf32>
      %41 = vector.shape_cast %40 : vector<1x256x128xf32> to vector<256x128xf32>
      %42 = arith.truncf %41 : vector<256x128xf32> to vector<256x128xbf16>
      %c0_25 = arith.constant 0 : index
      %c0_26 = arith.constant 0 : index
      %43 = vector.load %arg6[%c0_25, %c0_26] : memref<128x256xbf16, #tpu.memory_space<vmem>>, vector<128x256xbf16>
      %cst_27 = arith.constant dense<0.000000e+00> : vector<256x256xf32>
      %44 = tpu.matmul %42, %43, %cst_27 {dimension_numbers = #tpu.dot_dimension_numbers<[1], [0], [0], [1], [0, 0, 1, 1], [], []>} : vector<256x128xbf16>, vector<128x256xbf16>, vector<256x256xf32> -> vector<256x256xf32>
      %c256_i32_28 = arith.constant 256 : i32
      %45 = arith.muli %arg2, %c256_i32_28 : i32
      %46 = tpu.assume_multiple %45, 256 : i32
      %47 = vector.extract_strided_slice %44 {offsets = [0, 0], sizes = [256, 128], strides = [1, 1]} : vector<256x256xf32> to vector<256x128xf32>
      %48 = arith.truncf %47 : vector<256x128xf32> to vector<256x128xbf16>
      %49 = arith.index_cast %46 : i32 to index
      %c0_29 = arith.constant 0 : index
      %50 = vector.load %arg14[%49, %c0_29] : memref<512x128xbf16, #tpu.memory_space<vmem>>, vector<256x128xbf16>
      tpu.vector_store %arg14[%49, %c0_29], %48 {strides = array<i32>} : memref<512x128xbf16, #tpu.memory_space<vmem>>, vector<256x128xbf16>,
      %51 = vector.extract_strided_slice %44 {offsets = [0, 128], sizes = [256, 128], strides = [1, 1]} : vector<256x256xf32> to vector<256x128xf32>
      %52 = arith.truncf %51 : vector<256x128xf32> to vector<256x128xbf16>
      %53 = arith.index_cast %46 : i32 to index
      %c0_30 = arith.constant 0 : index
      %54 = vector.load %arg15[%53, %c0_30] : memref<512x128xbf16, #tpu.memory_space<vmem>>, vector<256x128xbf16>
      tpu.vector_store %arg15[%53, %c0_30], %52 {strides = array<i32>} : memref<512x128xbf16, #tpu.memory_space<vmem>>, vector<256x128xbf16>,
    } else {
    }
    %c256_i32 = arith.constant 256 : i32
    %6 = arith.muli %arg2, %c256_i32 : i32
    %7 = tpu.assume_multiple %6, 256 : i32
    %8 = arith.index_cast %7 : i32 to index
    %c0 = arith.constant 0 : index
    %9 = vector.load %arg14[%8, %c0] : memref<512x128xbf16, #tpu.memory_space<vmem>>, vector<256x128xbf16>
    %10 = arith.index_cast %7 : i32 to index
    %c0_3 = arith.constant 0 : index
    %11 = vector.load %arg15[%10, %c0_3] : memref<512x128xbf16, #tpu.memory_space<vmem>>, vector<256x128xbf16>
    %c0_4 = arith.constant 0 : index
    %c0_5 = arith.constant 0 : index
    %12 = vector.load %arg10[%c0_4, %c0_5] : memref<256x128xbf16, #tpu.memory_space<vmem>>, vector<256x128xbf16>
    %cst = arith.constant dense<0.000000e+00> : vector<256x256xf32>
    %13 = tpu.matmul %12, %9, %cst {dimension_numbers = #tpu.dot_dimension_numbers<[1], [1], [0], [0], [0, 0, 1, 0], [], []>} : vector<256x128xbf16>, vector<256x128xbf16>, vector<256x256xf32> -> vector<256x256xf32>
    %c0_6 = arith.constant 0 : index
    %c0_7 = arith.constant 0 : index
    %14 = vector.load %arg11[%c0_6, %c0_7] : memref<256x1xf32, #tpu.memory_space<vmem>>, vector<256x1xf32>
    %cst_8 = arith.constant dense<0xFF800000> : vector<256xf32>
    %15 = vector.multi_reduction <maximumf>, %13, %cst_8 [1] : vector<256x256xf32> to vector<256xf32>
    %16 = vector.shape_cast %15 : vector<256xf32> to vector<256x1xf32>
    %17 = arith.maximumf %14, %16 : vector<256x1xf32>
    %18 = arith.subf %14, %17 : vector<256x1xf32>
    %19 = math.exp %18 : vector<256x1xf32>
    %20 = vector.broadcast %17 : vector<256x1xf32> to vector<256x256xf32>
    %21 = arith.subf %13, %20 : vector<256x256xf32>
    %22 = math.exp %21 : vector<256x256xf32>
    %c0_9 = arith.constant 0 : index
    %c0_10 = arith.constant 0 : index
    %23 = vector.load %arg12[%c0_9, %c0_10] : memref<256x1xf32, #tpu.memory_space<vmem>>, vector<256x1xf32>
    %24 = arith.mulf %19, %23 : vector<256x1xf32>
    %cst_11 = arith.constant dense<0.000000e+00> : vector<256xf32>
    %25 = vector.multi_reduction <add>, %22, %cst_11 [1] : vector<256x256xf32> to vector<256xf32>
    %26 = vector.shape_cast %25 : vector<256xf32> to vector<256x1xf32>
    %27 = arith.addf %24, %26 : vector<256x1xf32>
    %c0_12 = arith.constant 0 : index
    %c0_13 = arith.constant 0 : index
    %28 = vector.load %arg12[%c0_12, %c0_13] : memref<256x1xf32, #tpu.memory_space<vmem>>, vector<256x1xf32>
    tpu.vector_store %arg12[%c0_12, %c0_13], %27 {strides = array<i32>} : memref<256x1xf32, #tpu.memory_space<vmem>>, vector<256x1xf32>,
    %c0_14 = arith.constant 0 : index
    %c0_15 = arith.constant 0 : index
    %29 = vector.load %arg13[%c0_14, %c0_15] : memref<256x128xf32, #tpu.memory_space<vmem>>, vector<256x128xf32>
    %30 = vector.broadcast %19 : vector<256x1xf32> to vector<256x128xf32>
    %31 = arith.mulf %30, %29 : vector<256x128xf32>
    %32 = arith.truncf %22 : vector<256x256xf32> to vector<256x256xbf16>
    %cst_16 = arith.constant dense<0.000000e+00> : vector<256x128xf32>
    %33 = tpu.matmul %32, %11, %cst_16 {dimension_numbers = #tpu.dot_dimension_numbers<[1], [0], [0], [1], [0, 0, 1, 1], [], []>} : vector<256x256xbf16>, vector<256x128xbf16>, vector<256x128xf32> -> vector<256x128xf32>
    %34 = arith.addf %31, %33 : vector<256x128xf32>
    %c0_17 = arith.constant 0 : index
    %c0_18 = arith.constant 0 : index
    %35 = vector.load %arg13[%c0_17, %c0_18] : memref<256x128xf32, #tpu.memory_space<vmem>>, vector<256x128xf32>
    tpu.vector_store %arg13[%c0_17, %c0_18], %34 {strides = array<i32>} : memref<256x128xf32, #tpu.memory_space<vmem>>, vector<256x128xf32>,
    %c0_19 = arith.constant 0 : index
    %c0_20 = arith.constant 0 : index
    %36 = vector.load %arg11[%c0_19, %c0_20] : memref<256x1xf32, #tpu.memory_space<vmem>>, vector<256x1xf32>
    tpu.vector_store %arg11[%c0_19, %c0_20], %17 {strides = array<i32>} : memref<256x1xf32, #tpu.memory_space<vmem>>, vector<256x1xf32>,
    %c1_i32 = arith.constant 1 : i32
    %37 = arith.cmpi eq, %arg2, %c1_i32 : i32
    %38 = arith.extui %37 : i1 to i32
    %c0_i32_21 = arith.constant 0 : i32
    %39 = arith.cmpi ne, %38, %c0_i32_21 : i32
    scf.if %39 {
      %c0_22 = arith.constant 0 : index
      %c0_23 = arith.constant 0 : index
      %40 = vector.load %arg12[%c0_22, %c0_23] : memref<256x1xf32, #tpu.memory_space<vmem>>, vector<256x1xf32>
      %41 = tpu.reciprocal %40 {approx = true} : vector<256x1xf32> -> vector<256x1xf32>
      %c0_24 = arith.constant 0 : index
      %c0_25 = arith.constant 0 : index
      %42 = vector.load %arg13[%c0_24, %c0_25] : memref<256x128xf32, #tpu.memory_space<vmem>>, vector<256x128xf32>
      %43 = vector.broadcast %41 : vector<256x1xf32> to vector<256x128xf32>
      %44 = arith.mulf %42, %43 : vector<256x128xf32>
      %c0_26 = arith.constant 0 : index
      %c0_27 = arith.constant 0 : index
      %45 = vector.load %arg8[%c0_26, %c0_27] : memref<1x128xf32, #tpu.memory_space<vmem>>, vector<1x128xf32>
      %46 = vector.broadcast %45 : vector<1x128xf32> to vector<256x128xf32>
      %47 = arith.addf %44, %46 : vector<256x128xf32>
      %c0_28 = arith.constant 0 : index
      %c0_29 = arith.constant 0 : index
      %c0_30 = arith.constant 0 : index
      %48 = vector.load %arg9[%c0_28, %c0_29, %c0_30] : memref<1x256x128xf32, #tpu.memory_space<vmem>>, vector<1x256x128xf32>
      %49 = vector.shape_cast %48 : vector<1x256x128xf32> to vector<256x128xf32>
      %50 = vector.shape_cast %47 : vector<256x128xf32> to vector<1x256x128xf32>
      tpu.vector_store %arg9[%c0_28, %c0_29, %c0_30], %50 {strides = array<i32>} : memref<1x256x128xf32, #tpu.memory_space<vmem>>, vector<1x256x128xf32>,
    } else {
    }
    return
  }
  func.func @transform_0(%arg0: i32, %arg1: i32, %arg2: i32) -> (i32, i32, i32) {
    %c0_i32 = arith.constant 0 : i32
    %c0_i32_0 = arith.constant 0 : i32
    return %arg0, %arg1, %c0_i32 : i32, i32, i32
  }
  func.func @transform_1(%arg0: i32, %arg1: i32, %arg2: i32) -> (i32, i32, i32) {
    %c0_i32 = arith.constant 0 : i32
    %0 = arith.cmpi eq, %arg1, %c0_i32 : i32
    %c0_i32_0 = arith.constant 0 : i32
    %1 = arith.select %0, %arg2, %c0_i32_0 : i32
    %c0_i32_1 = arith.constant 0 : i32
    %c0_i32_2 = arith.constant 0 : i32
    return %arg0, %1, %c0_i32_1 : i32, i32, i32
  }
  func.func @transform_2(%arg0: i32, %arg1: i32, %arg2: i32) -> (i32, i32) {
    %c0_i32 = arith.constant 0 : i32
    %c0_i32_0 = arith.constant 0 : i32
    %c0_i32_1 = arith.constant 0 : i32
    return %c0_i32, %c0_i32_0 : i32, i32
  }
  func.func @transform_3(%arg0: i32, %arg1: i32, %arg2: i32) -> (i32, i32) {
    %c0_i32 = arith.constant 0 : i32
    %c0_i32_0 = arith.constant 0 : i32
    %c0_i32_1 = arith.constant 0 : i32
    return %c0_i32, %c0_i32_0 : i32, i32
  }
  func.func @transform_4(%arg0: i32, %arg1: i32, %arg2: i32) -> (i32, i32) {
    %c0_i32 = arith.constant 0 : i32
    %c0_i32_0 = arith.constant 0 : i32
    %c0_i32_1 = arith.constant 0 : i32
    return %c0_i32, %c0_i32_0 : i32, i32
  }
  func.func @transform_5(%arg0: i32, %arg1: i32, %arg2: i32) -> (i32, i32) {
    %c0_i32 = arith.constant 0 : i32
    %c0_i32_0 = arith.constant 0 : i32
    %c0_i32_1 = arith.constant 0 : i32
    return %c0_i32, %c0_i32_0 : i32, i32
  }
  func.func @transform_6(%arg0: i32, %arg1: i32, %arg2: i32) -> (i32, i32, i32) {
    %c0_i32 = arith.constant 0 : i32
    %c0_i32_0 = arith.constant 0 : i32
    return %arg0, %arg1, %c0_i32 : i32, i32, i32
  }
}

</mosaic_0001>

<llo_original>
// kernel: tpu_custom_call.1
$region0: #{tpu_custom_call.1}
  #allocation0 [shape = 'u32[]', space=smem, size = 0x4, offset = 0x4, fixed_abs, tag = 'smem constant byte address 0x4 - core index']
  #allocation1 [shape = 'u32[144,128]{1,0:T(1,128)}', space=vmem, size = 0x12000, scoped, tag = 'internal scratch']
  #allocation2 [shape = 'bf16[256,128]{1,0:T(8,128)(2,1)}', space=vmem, size = 0x10000, scoped, tag = 'scratch operand']
  #allocation3 [shape = 'f32[256,1]{1,0:T(8,128)}', space=vmem, size = 0x20000, scoped, tag = 'scratch operand']
  #allocation4 [shape = 'f32[256,1]{1,0:T(8,128)}', space=vmem, size = 0x20000, scoped, tag = 'scratch operand']
  #allocation5 [shape = 'f32[256,128]{1,0:T(8,128)}', space=vmem, size = 0x20000, scoped, tag = 'scratch operand']
  #allocation6 [shape = 'bf16[512,128]{1,0:T(8,128)(2,1)}', space=vmem, size = 0x20000, scoped, tag = 'scratch operand']
  #allocation7 [shape = 'bf16[512,128]{1,0:T(8,128)(2,1)}', space=vmem, size = 0x20000, scoped, tag = 'scratch operand']
  %s0 = inlined_call_operand.hbm [shape: f32[2,512,128], index: 0, kind: input, shape index: {}]
  %s1 = inlined_call_operand.hbm [shape: f32[2,512,128], index: 1, kind: input, shape index: {}]
  %s2 = inlined_call_operand.hbm [shape: bf16[128,128], index: 2, kind: input, shape index: {}]
  %s3 = inlined_call_operand.hbm [shape: bf16[128,256], index: 3, kind: input, shape index: {}]
  %s4 = inlined_call_operand.vmem [shape: f32[1,128], index: 4, kind: input, shape index: {}]
  %s5 = inlined_call_operand.vmem [shape: f32[1,128], index: 5, kind: input, shape index: {}]
  %s6 = inlined_call_operand.hbm [shape: f32[2,512,128], index: 6, kind: output, shape index: {}]
  %s7 = sld [smem:[#allocation0]]
  $region85: #{tpu_custom_call.1} parent=0
    _
  %s9 = ssub.s32 1, %s7
  %s10 = scalar_select 0, %s9, %s7
  $region1: #{tpu_custom_call.1} parent=0
    #allocation8 [shape = 'u8[262144]{0}', space=vmem, size = 0x40000, scoped, tag = 'input window, operand 0']
    #allocation9 [shape = 's32[2]{0}', space=sflag, size = 0x8, scoped, tag = 'scoped memory for tpu_custom_call.1']
    #allocation10 [shape = 's32[2]{0}', space=sflag, size = 0x8, scoped, tag = 'scoped memory for tpu_custom_call.1']
    #allocation11 [shape = 'u8[262144]{0}', space=vmem, size = 0x40000, scoped, tag = 'input window, operand 1']
    #allocation12 [shape = 's32[2]{0}', space=sflag, size = 0x8, scoped, tag = 'scoped memory for tpu_custom_call.1']
    #allocation13 [shape = 'u8[32768]{0}', space=vmem, size = 0x8000, scoped, tag = 'input window, operand 2, single buffered']
    #allocation14 [shape = 'u8[65536]{0}', space=vmem, size = 0x10000, scoped, tag = 'input window, operand 3, single buffered']
    #allocation15 [shape = 's32[1]{0}', space=sflag, size = 0x4, scoped, tag = 'scoped memory for tpu_custom_call.1']
    #allocation16 [shape = 'u8[262144]{0}', space=vmem, size = 0x40000, scoped, tag = 'output window, operand 0']
    %11 = vsyncpa [#allocation9], 0
    %s12 = scalar_lea.sflag [#allocation9], 1
    %13 = vsyncpa %s12, 0
    %14 = vsyncpa [#allocation12], 0
    %s15 = scalar_lea.sflag [#allocation12], 1
    %16 = vsyncpa %s15, 0
    %17 = vsyncpa [#allocation15], 0
    %18 = vsyncpa [#allocation10], 0
    %s19 = scalar_lea.sflag [#allocation10], 1
    %20 = vsyncpa %s19, 0
    loop: start=0, step=1, limit=10
    $region2: #{tpu_custom_call.1} parent=1 // loop_pre_header
      _
    $region3: #{tpu_custom_call.1} parent=1 // loop_header
      %s22 = sphi 0, %s26
      %p23 = scmp.ge.s32.totalorder %s22, 10
      %s29 = sphi 0, %s48
      %s30 = sphi 0, %s44
      %s31 = sphi 0, %s40
      %s32 = sphi 0, %s29
      %s33 = sphi 0, %s30
      %s34 = sphi 0, %s31
      %s35 = sphi 0, %s32
      %s36 = sphi 0, %s33
      %s37 = sphi 0, %s34
      %s53 = sphi 0, %s55
      %s56 = sphi 0, %s53
      %s57 = sphi 0, %s56
      %s73 = sphi 0, %s57
      %s85 = sphi 0, %s87
      %s88 = sphi 0, %s85
      %s89 = sphi 0, %s88
      %s105 = sphi 0, %s89
      %s109 = sphi 0, %s109
      %s111 = sphi 0, %s109
      %s112 = sphi 0, %s111
      %s126 = sphi 0, %s112
      %s130 = sphi 0, %s130
      %s132 = sphi 0, %s130
      %s133 = sphi 0, %s132
      %s147 = sphi 0, %s133
      %s151 = sphi 0, %s151
      %s153 = sphi 0, %s151
      %s154 = sphi 0, %s153
      %s168 = sphi 0, %s154
      %s172 = sphi 0, %s172
      %s174 = sphi 0, %s172
      %s175 = sphi 0, %s174
      %s189 = sphi 0, %s175
      %s197 = sphi 0, %s199
      %s200 = sphi 0, %s197
      %s201 = sphi 0, %s200
      %s217 = sphi 0, %s201
    $region4: #{tpu_custom_call.1} parent=1 // loop_header_branch
      %25 = sbr.rel (%p23) target = $region8
    $region5: #{tpu_custom_call.1} parent=1 // loop_body
      %s27 = ssub.s32 %s22, 1
      %s28 = ssub.s32 %s22, 2
      %s38 = sadd.s32 1, %s31
      %p39 = scmp.ge.s32.totalorder %s38, 2
      %s40 = scalar_select %p39, 0, %s38
      %s41 = sadd.s32 1, %s30
      %s42 = scalar_select %p39, %s41, %s30
      %p43 = scmp.ge.s32.totalorder %s42, 2
      %s44 = scalar_select %p43, 0, %s42
      %s45 = sadd.s32 1, %s29
      %s46 = scalar_select %p43, %s45, %s29
      %p47 = scmp.ge.s32.totalorder %s46, 2
      %s48 = scalar_select %p47, 0, %s46
      %s49 = ssub.s32 %s29, %s48
      %s50 = ssub.s32 %s30, %s44
      %s51 = sor.u32 %s49, %s50
      %p52 = scmp.eq.s32.totalorder %s51, 0
      %s54 = sadd.s32 %s53, 1
      %s55 = scalar_select %p52, %s53, %s54
      %p58 = pneg %p52
      %p59 = scmp.eq.s32.totalorder %s22, 7
      %p60 = por %p58, %p59
      %p61 = scmp.ne.s32.totalorder %s53, %s56
      %p62 = scmp.eq.s32.totalorder %s22, 0
      %p63 = por %p61, %p62
      %p64 = scmp.ne.s32.totalorder %s53, %s56
      %p65 = scmp.eq.s32.totalorder %s27, 7
      %p66 = por %p64, %p65
      %p67 = scmp.ne.s32.totalorder %s56, %s57
      %p68 = scmp.eq.s32.totalorder %s27, 0
      %p69 = por %p67, %p68
      %p70 = scmp.ne.s32.totalorder %s56, %s57
      %p71 = scmp.eq.s32.totalorder %s28, 7
      %p72 = por %p70, %p71
      %p74 = scmp.ne.s32.totalorder %s57, %s73
      %p75 = scmp.eq.s32.totalorder %s28, 0
      %p76 = por %p74, %p75
      %p77 = scmp.eq.s32.totalorder %s30, 0
      %s78 = scalar_select %p77, %s31, 0
      %p79 = scmp.eq.s32.totalorder %s44, 0
      %s80 = scalar_select %p79, %s40, 0
      %s81 = ssub.s32 %s29, %s48
      %s82 = ssub.s32 %s78, %s80
      %s83 = sor.u32 %s81, %s82
      %p84 = scmp.eq.s32.totalorder %s83, 0
      %s86 = sadd.s32 %s85, 1
      %s87 = scalar_select %p84, %s85, %s86
      %p90 = pneg %p84
      %p91 = scmp.eq.s32.totalorder %s22, 7
      %p92 = por %p90, %p91
      %p93 = scmp.ne.s32.totalorder %s85, %s88
      %p94 = scmp.eq.s32.totalorder %s22, 0
      %p95 = por %p93, %p94
      %p96 = scmp.ne.s32.totalorder %s85, %s88
      %p97 = scmp.eq.s32.totalorder %s27, 7
      %p98 = por %p96, %p97
      %p99 = scmp.ne.s32.totalorder %s88, %s89
      %p100 = scmp.eq.s32.totalorder %s27, 0
      %p101 = por %p99, %p100
      %p102 = scmp.ne.s32.totalorder %s88, %s89
      %p103 = scmp.eq.s32.totalorder %s28, 7
      %p104 = por %p102, %p103
      %p106 = scmp.ne.s32.totalorder %s89, %s105
      %p107 = scmp.eq.s32.totalorder %s28, 0
      %p108 = por %p106, %p107
      %s110 = sadd.s32 %s109, 1
      %p113 = scmp.eq.s32.totalorder %s22, 7
      %p114 = scmp.ne.s32.totalorder %s109, %s111
      %p115 = scmp.eq.s32.totalorder %s22, 0
      %p116 = por %p114, %p115
      %p117 = scmp.ne.s32.totalorder %s109, %s111
      %p118 = scmp.eq.s32.totalorder %s27, 7
      %p119 = por %p117, %p118
      %p120 = scmp.ne.s32.totalorder %s111, %s112
      %p121 = scmp.eq.s32.totalorder %s27, 0
      %p122 = por %p120, %p121
      %p123 = scmp.ne.s32.totalorder %s111, %s112
      %p124 = scmp.eq.s32.totalorder %s28, 7
      %p125 = por %p123, %p124
      %p127 = scmp.ne.s32.totalorder %s112, %s126
      %p128 = scmp.eq.s32.totalorder %s28, 0
      %p129 = por %p127, %p128
      %s131 = sadd.s32 %s130, 1
      %p134 = scmp.eq.s32.totalorder %s22, 7
      %p135 = scmp.ne.s32.totalorder %s130, %s132
      %p136 = scmp.eq.s32.totalorder %s22, 0
      %p137 = por %p135, %p136
      %p138 = scmp.ne.s32.totalorder %s130, %s132
      %p139 = scmp.eq.s32.totalorder %s27, 7
      %p140 = por %p138, %p139
      %p141 = scmp.ne.s32.totalorder %s132, %s133
      %p142 = scmp.eq.s32.totalorder %s27, 0
      %p143 = por %p141, %p142
      %p144 = scmp.ne.s32.totalorder %s132, %s133
      %p145 = scmp.eq.s32.totalorder %s28, 7
      %p146 = por %p144, %p145
      %p148 = scmp.ne.s32.totalorder %s133, %s147
      %p149 = scmp.eq.s32.totalorder %s28, 0
      %p150 = por %p148, %p149
      %s152 = sadd.s32 %s151, 1
      %p155 = scmp.eq.s32.totalorder %s22, 7
      %p156 = scmp.ne.s32.totalorder %s151, %s153
      %p157 = scmp.eq.s32.totalorder %s22, 0
      %p158 = por %p156, %p157
      %p159 = scmp.ne.s32.totalorder %s151, %s153
      %p160 = scmp.eq.s32.totalorder %s27, 7
      %p161 = por %p159, %p160
      %p162 = scmp.ne.s32.totalorder %s153, %s154
      %p163 = scmp.eq.s32.totalorder %s27, 0
      %p164 = por %p162, %p163
      %p165 = scmp.ne.s32.totalorder %s153, %s154
      %p166 = scmp.eq.s32.totalorder %s28, 7
      %p167 = por %p165, %p166
      %p169 = scmp.ne.s32.totalorder %s154, %s168
      %p170 = scmp.eq.s32.totalorder %s28, 0
      %p171 = por %p169, %p170
      %s173 = sadd.s32 %s172, 1
      %p176 = scmp.eq.s32.totalorder %s22, 7
      %p177 = scmp.ne.s32.totalorder %s172, %s174
      %p178 = scmp.eq.s32.totalorder %s22, 0
      %p179 = por %p177, %p178
      %p180 = scmp.ne.s32.totalorder %s172, %s174
      %p181 = scmp.eq.s32.totalorder %s27, 7
      %p182 = por %p180, %p181
      %p183 = scmp.ne.s32.totalorder %s174, %s175
      %p184 = scmp.eq.s32.totalorder %s27, 0
      %p185 = por %p183, %p184
      %p186 = scmp.ne.s32.totalorder %s174, %s175
      %p187 = scmp.eq.s32.totalorder %s28, 7
      %p188 = por %p186, %p187
      %p190 = scmp.ne.s32.totalorder %s175, %s189
      %p191 = scmp.eq.s32.totalorder %s28, 0
      %p192 = por %p190, %p191
      %s193 = ssub.s32 %s29, %s48
      %s194 = ssub.s32 %s30, %s44
      %s195 = sor.u32 %s193, %s194
      %p196 = scmp.eq.s32.totalorder %s195, 0
      %s198 = sadd.s32 %s197, 1
      %s199 = scalar_select %p196, %s197, %s198
      %p202 = pneg %p196
      %p203 = scmp.eq.s32.totalorder %s22, 7
      %p204 = por %p202, %p203
      %p205 = scmp.ne.s32.totalorder %s197, %s200
      %p206 = scmp.eq.s32.totalorder %s22, 0
      %p207 = por %p205, %p206
      %p208 = scmp.ne.s32.totalorder %s197, %s200
      %p209 = scmp.eq.s32.totalorder %s27, 7
      %p210 = por %p208, %p209
      %p211 = scmp.ne.s32.totalorder %s200, %s201
      %p212 = scmp.eq.s32.totalorder %s27, 0
      %p213 = por %p211, %p212
      %p214 = scmp.ne.s32.totalorder %s200, %s201
      %p215 = scmp.eq.s32.totalorder %s28, 7
      %p216 = por %p214, %p215
      %p218 = scmp.ne.s32.totalorder %s201, %s217
      %p219 = scmp.eq.s32.totalorder %s28, 0
      %p220 = por %p218, %p219
      %p221 = scmp.le.s32.totalorder 1, %s22
      %p222 = scmp.lt.s32.totalorder %s22, 9
      %p223 = pnand %p221, %p222
      %p224 = pneg %p223
      // Predicated region
      $region9: #{tpu_custom_call.1} parent=5 // pred_check
        _
      $region10: #{tpu_custom_call.1} parent=5 // pred_check_branch
        %226 = sbr.rel (%p223) target = $region12
      $region11: #{tpu_custom_call.1} parent=5 // pred_region
        %s227 = ssub.s32 %s22, 1
        // Predicated region
        $region13: #{tpu_custom_call.1} parent=11 // pred_check
          %p228 = pneg %p122
        $region14: #{tpu_custom_call.1} parent=11 // pred_check_branch
          %230 = sbr.rel (%p228) target = $region16
        $region15: #{tpu_custom_call.1} parent=11 // pred_region
          %s232 = ssub.s32 1024, 1024
          %233 = vsyncadd [#allocation12], %s232
          %s234 = sshll.u32 [#allocation13], 4
          %s235 = int_to_ptr.vmem [resolvable:$true] %s234
          %240 = dma.hbm_to_vmem [thread:$0]  %s2, 1024, %s235, [#allocation12], 64, 64, 4
        $region16: #{tpu_custom_call.1} parent=11 // pred_fallthru
          _
        // Predicated region
        $region17: #{tpu_custom_call.1} parent=11 // pred_check
          %p241 = pneg %p143
        $region18: #{tpu_custom_call.1} parent=11 // pred_check_branch
          %243 = sbr.rel (%p241) target = $region20
        $region19: #{tpu_custom_call.1} parent=11 // pred_region
          %s245 = ssub.s32 2048, 2048
          %246 = vsyncadd [#allocation15], %s245
          %s247 = sshll.u32 [#allocation14], 4
          %s248 = int_to_ptr.vmem [resolvable:$true] %s247
          %253 = dma.hbm_to_vmem [thread:$0]  %s3, 2048, %s248, [#allocation15], 128, 128, 8
        $region20: #{tpu_custom_call.1} parent=11 // pred_fallthru
          _
        // Predicated region
        $region21: #{tpu_custom_call.1} parent=11 // pred_check
          %p254 = pneg %p164
        $region22: #{tpu_custom_call.1} parent=11 // pred_check_branch
          %256 = sbr.rel (%p254) target = $region24
        $region23: #{tpu_custom_call.1} parent=11 // pred_region
          _
        $region24: #{tpu_custom_call.1} parent=11 // pred_fallthru
          _
        // Predicated region
        $region25: #{tpu_custom_call.1} parent=11 // pred_check
          %p257 = pneg %p185
        $region26: #{tpu_custom_call.1} parent=11 // pred_check_branch
          %259 = sbr.rel (%p257) target = $region28
        $region27: #{tpu_custom_call.1} parent=11 // pred_region
          _
        $region28: #{tpu_custom_call.1} parent=11 // pred_fallthru
          _
      $region12: #{tpu_custom_call.1} parent=5 // pred_fallthru
        _
      %p260 = scmp.lt.s32.totalorder %s22, 8
      // Predicated region
      $region29: #{tpu_custom_call.1} parent=5 // pred_check
        %p261 = pneg %p260
      $region30: #{tpu_custom_call.1} parent=5 // pred_check_branch
        %263 = sbr.rel (%p261) target = $region32
      $region31: #{tpu_custom_call.1} parent=5 // pred_region
        // Predicated region
        $region33: #{tpu_custom_call.1} parent=31 // pred_check
          %p264 = pneg %p63
        $region34: #{tpu_custom_call.1} parent=31 // pred_check_branch
          %266 = sbr.rel (%p264) target = $region36
        $region35: #{tpu_custom_call.1} parent=31 // pred_region
          %s267 = sand.u32 %s53, 1
          %s268 = scalar_lea.sflag [#allocation9], %s267
          %s269 = sand.u32 %s53, 1
          %s270 = smul.addr %s269, 256
          %s271 = scalar_lea.vmem [#allocation8], %s270
          %s272 = smul.u32 32, %s30
          %s274 = ssub.s32 4096, 4096
          %275 = vsyncadd %s268, %s274
          %s276 = smul.addr %s29, 64
          %s277 = sadd.s32 %s272, %s276
          %s278 = smul.addr %s277, 128
          %s279 = scalar_lea.hbm %s0, %s278
          %s280 = sshll.u32 %s271, 4
          %s281 = int_to_ptr.vmem [resolvable:$true] %s280
          %286 = dma.hbm_to_vmem [thread:$0]  %s279, 4096, %s281, %s268, 128, 128, 8
        $region36: #{tpu_custom_call.1} parent=31 // pred_fallthru
          _
        // Predicated region
        $region37: #{tpu_custom_call.1} parent=31 // pred_check
          %p287 = pneg %p95
        $region38: #{tpu_custom_call.1} parent=31 // pred_check_branch
          %289 = sbr.rel (%p287) target = $region40
        $region39: #{tpu_custom_call.1} parent=31 // pred_region
          %s290 = sand.u32 %s22, 1
          %s291 = scalar_lea.sflag [#allocation12], %s290
          %s292 = sand.u32 %s85, 1
          %s293 = smul.addr %s292, 256
          %s294 = scalar_lea.vmem [#allocation11], %s293
          %p295 = scmp.eq.s32.totalorder %s30, 0
          %s296 = scalar_select %p295, %s31, 0
          %s297 = smul.u32 32, %s296
          %s299 = ssub.s32 4096, 4096
          %300 = vsyncadd %s291, %s299
          %s301 = smul.addr %s29, 64
          %s302 = sadd.s32 %s297, %s301
          %s303 = smul.addr %s302, 128
          %s304 = scalar_lea.hbm %s1, %s303
          %s305 = sshll.u32 %s294, 4
          %s306 = int_to_ptr.vmem [resolvable:$true] %s305
          %311 = dma.hbm_to_vmem [thread:$0]  %s304, 4096, %s306, %s291, 128, 128, 8
        $region40: #{tpu_custom_call.1} parent=31 // pred_fallthru
          _
      $region32: #{tpu_custom_call.1} parent=5 // pred_fallthru
        _
      %p312 = scmp.le.s32.totalorder 1, %s22
      %p313 = scmp.lt.s32.totalorder %s22, 9
      %p314 = pnand %p312, %p313
      %p315 = pneg %p314
      // Predicated region
      $region41: #{tpu_custom_call.1} parent=5 // pred_check
        _
      $region42: #{tpu_custom_call.1} parent=5 // pred_check_branch
        %317 = sbr.rel (%p314) target = $region44
      $region43: #{tpu_custom_call.1} parent=5 // pred_region
        %s318 = ssub.s32 %s22, 1
        %s319 = sand.u32 %s56, 1
        %s320 = scalar_lea.sflag [#allocation9], %s319
        %s321 = sand.u32 %s56, 1
        %s322 = smul.addr %s321, 256
        %s323 = scalar_lea.vmem [#allocation8], %s322
        // Predicated region
        $region45: #{tpu_custom_call.1} parent=43 // pred_check
          %p324 = pneg %p69
        $region46: #{tpu_custom_call.1} parent=43 // pred_check_branch
          %326 = sbr.rel (%p324) target = $region48
        $region47: #{tpu_custom_call.1} parent=43 // pred_region
          %327 = dma.done %s320, 4096
        $region48: #{tpu_custom_call.1} parent=43 // pred_fallthru
          _
        %s328 = sand.u32 %s27, 1
        %s329 = scalar_lea.sflag [#allocation12], %s328
        %s330 = sand.u32 %s88, 1
        %s331 = smul.addr %s330, 256
        %s332 = scalar_lea.vmem [#allocation11], %s331
        // Predicated region
        $region49: #{tpu_custom_call.1} parent=43 // pred_check
          %p333 = pneg %p101
        $region50: #{tpu_custom_call.1} parent=43 // pred_check_branch
          %335 = sbr.rel (%p333) target = $region52
        $region51: #{tpu_custom_call.1} parent=43 // pred_region
          %336 = dma.done %s329, 4096
        $region52: #{tpu_custom_call.1} parent=43 // pred_fallthru
          _
        // Predicated region
        $region53: #{tpu_custom_call.1} parent=43 // pred_check
          %p337 = pneg %p122
        $region54: #{tpu_custom_call.1} parent=43 // pred_check_branch
          %339 = sbr.rel (%p337) target = $region56
        $region55: #{tpu_custom_call.1} parent=43 // pred_region
          %340 = dma.done [#allocation12], 1024
        $region56: #{tpu_custom_call.1} parent=43 // pred_fallthru
          _
        // Predicated region
        $region57: #{tpu_custom_call.1} parent=43 // pred_check
          %p341 = pneg %p143
        $region58: #{tpu_custom_call.1} parent=43 // pred_check_branch
          %343 = sbr.rel (%p341) target = $region60
        $region59: #{tpu_custom_call.1} parent=43 // pred_region
          %344 = dma.done [#allocation15], 2048
        $region60: #{tpu_custom_call.1} parent=43 // pred_fallthru
          _
        %s345 = sand.u32 %s56, 1
        %s346 = scalar_lea.sflag [#allocation9], %s345
        %s347 = sand.u32 %s56, 1
        %s348 = smul.addr %s347, 256
        %s349 = scalar_lea.vmem [#allocation8], %s348
        %p350 = pneg %p69
        %p351 = pneg %p66
        %s352 = sand.u32 %s27, 1
        %s353 = scalar_lea.sflag [#allocation12], %s352
        %s354 = sand.u32 %s88, 1
        %s355 = smul.addr %s354, 256
        %s356 = scalar_lea.vmem [#allocation11], %s355
        %p357 = pneg %p101
        %p358 = pneg %p98
        %p359 = pneg %p122
        %p360 = pneg %p119
        %p361 = pneg %p143
        %p362 = pneg %p140
        %p363 = pneg %p164
        %p364 = pneg %p161
        %p365 = pneg %p185
        %p366 = pneg %p182
        %p367 = pneg %p213
        %p368 = pneg %p210
        %s369 = sand.u32 %s200, 1
        %s370 = scalar_lea.sflag [#allocation10], %s369
        %s371 = sand.u32 %s200, 1
        %s372 = smul.addr %s371, 256
        %s373 = scalar_lea.vmem [#allocation16], %s372
        %s374 = smul.u32 32, %s33
        %p375 = scmp.eq.s32.totalorder %s33, 0
        %s376 = scalar_select %p375, %s34, 0
        %s377 = smul.u32 32, %s376
        %s378 = smul.u32 32, %s33
        %p380 = scmp.eq.s32.totalorder %s34, 0
        // Predicated region
        $region61: #{tpu_custom_call.1} parent=43 // pred_check
          %p381 = pneg %p380
        $region62: #{tpu_custom_call.1} parent=43 // pred_check_branch
          %383 = sbr.rel (%p381) target = $region64
        $region63: #{tpu_custom_call.1} parent=43 // pred_region
          %v384 = vld [vmem:[%s323] sm:$0xff]
          %v385 = vld [vmem:[%s323 + $0x8] sm:$0xff]
          %v386 = vld [vmem:[%s323 + $0x10] sm:$0xff]
          %v387 = vld [vmem:[%s323 + $0x18] sm:$0xff]
          %v388 = vld [vmem:[%s323 + $0x20] sm:$0xff]
          %v389 = vld [vmem:[%s323 + $0x28] sm:$0xff]
          %v390 = vld [vmem:[%s323 + $0x30] sm:$0xff]
          %v391 = vld [vmem:[%s323 + $0x38] sm:$0xff]
          %v392 = vld [vmem:[%s323 + $0x40] sm:$0xff]
          %v393 = vld [vmem:[%s323 + $0x48] sm:$0xff]
          %v394 = vld [vmem:[%s323 + $0x50] sm:$0xff]
          %v395 = vld [vmem:[%s323 + $0x58] sm:$0xff]
          %v396 = vld [vmem:[%s323 + $0x60] sm:$0xff]
          %v397 = vld [vmem:[%s323 + $0x68] sm:$0xff]
          %v398 = vld [vmem:[%s323 + $0x70] sm:$0xff]
          %v399 = vld [vmem:[%s323 + $0x78] sm:$0xff]
          %v400 = vld [vmem:[%s323 + $0x80] sm:$0xff]
          %v401 = vld [vmem:[%s323 + $0x88] sm:$0xff]
          %v402 = vld [vmem:[%s323 + $0x90] sm:$0xff]
          %v403 = vld [vmem:[%s323 + $0x98] sm:$0xff]
          %v404 = vld [vmem:[%s323 + $0xa0] sm:$0xff]
          %v405 = vld [vmem:[%s323 + $0xa8] sm:$0xff]
          %v406 = vld [vmem:[%s323 + $0xb0] sm:$0xff]
          %v407 = vld [vmem:[%s323 + $0xb8] sm:$0xff]
          %v408 = vld [vmem:[%s323 + $0xc0] sm:$0xff]
          %v409 = vld [vmem:[%s323 + $0xc8] sm:$0xff]
          %v410 = vld [vmem:[%s323 + $0xd0] sm:$0xff]
          %v411 = vld [vmem:[%s323 + $0xd8] sm:$0xff]
          %v412 = vld [vmem:[%s323 + $0xe0] sm:$0xff]
          %v413 = vld [vmem:[%s323 + $0xe8] sm:$0xff]
          %v414 = vld [vmem:[%s323 + $0xf0] sm:$0xff]
          %v415 = vld [vmem:[%s323 + $0xf8] sm:$0xff]
          %v416 = vpack.c.bf16 %v385, %v384
          %v417 = vpack.c.bf16 %v387, %v386
          %v418 = vpack.c.bf16 %v389, %v388
          %v419 = vpack.c.bf16 %v391, %v390
          %v420 = vpack.c.bf16 %v393, %v392
          %v421 = vpack.c.bf16 %v395, %v394
          %v422 = vpack.c.bf16 %v397, %v396
          %v423 = vpack.c.bf16 %v399, %v398
          %v424 = vpack.c.bf16 %v401, %v400
          %v425 = vpack.c.bf16 %v403, %v402
          %v426 = vpack.c.bf16 %v405, %v404
          %v427 = vpack.c.bf16 %v407, %v406
          %v428 = vpack.c.bf16 %v409, %v408
          %v429 = vpack.c.bf16 %v411, %v410
          %v430 = vpack.c.bf16 %v413, %v412
          %v431 = vpack.c.bf16 %v415, %v414
          %v432 = vld [vmem:[#allocation13] sm:$0xf]
          %v433 = vld [vmem:[#allocation13 + $0x4] sm:$0xf]
          %v434 = vld [vmem:[#allocation13 + $0x8] sm:$0xf]
          %v435 = vld [vmem:[#allocation13 + $0xc] sm:$0xf]
          %v436 = vld [vmem:[#allocation13 + $0x10] sm:$0xf]
          %v437 = vld [vmem:[#allocation13 + $0x14] sm:$0xf]
          %v438 = vld [vmem:[#allocation13 + $0x18] sm:$0xf]
          %v439 = vld [vmem:[#allocation13 + $0x1c] sm:$0xf]
          %v440 = vld [vmem:[#allocation13 + $0x20] sm:$0xf]
          %v441 = vld [vmem:[#allocation13 + $0x24] sm:$0xf]
          %v442 = vld [vmem:[#allocation13 + $0x28] sm:$0xf]
          %v443 = vld [vmem:[#allocation13 + $0x2c] sm:$0xf]
          %v444 = vld [vmem:[#allocation13 + $0x30] sm:$0xf]
          %v445 = vld [vmem:[#allocation13 + $0x34] sm:$0xf]
          %v446 = vld [vmem:[#allocation13 + $0x38] sm:$0xf]
          %v447 = vld [vmem:[#allocation13 + $0x3c] sm:$0xf]
          %v448 = vld [vmem:[%s4] sm:$0x1]
          %v450 = vlaneseq
          %v451 = vshrl.u32 %v450, 7
          %v452 = vsub.s32 0, %v451
          %v453 = vrot.slane %v448, %v452
          %v471 = vunpack.c.l.b16 %v432
          %v472 = vunpack.c.l.b16 %v433
          %v473 = vunpack.c.l.b16 %v434
          %v474 = vunpack.c.l.b16 %v435
          %v475 = vunpack.c.l.b16 %v436
          %v476 = vunpack.c.l.b16 %v437
          %v477 = vunpack.c.l.b16 %v438
          %v478 = vunpack.c.l.b16 %v439
          %v479 = vunpack.c.l.b16 %v440
          %v480 = vunpack.c.l.b16 %v441
          %v481 = vunpack.c.l.b16 %v442
          %v482 = vunpack.c.l.b16 %v443
          %v483 = vunpack.c.l.b16 %v444
          %v484 = vunpack.c.l.b16 %v445
          %v485 = vunpack.c.l.b16 %v446
          %v486 = vunpack.c.l.b16 %v447
          %v487 = vpack.c.b16 %v472, %v471
          %v488 = vpack.c.b16 %v474, %v473
          %v489 = vpack.c.b16 %v476, %v475
          %v490 = vpack.c.b16 %v478, %v477
          %v491 = vpack.c.b16 %v480, %v479
          %v492 = vpack.c.b16 %v482, %v481
          %v493 = vpack.c.b16 %v484, %v483
          %v494 = vpack.c.b16 %v486, %v485
          %503 = vmatprep.subr.bf16.mxu0 0
          %504 = vmatpush1.bf16.msra.mxu0 %v494
          %505 = vmatprep.subr.bf16.mxu0 0
          %506 = vmatpush1.bf16.msra.mxu0 %v493
          %507 = vmatprep.subr.bf16.mxu0 0
          %508 = vmatpush1.bf16.msra.mxu0 %v492
          %509 = vmatprep.subr.bf16.mxu0 0
          %510 = vmatpush1.bf16.msra.mxu0 %v491
          %511 = vmatprep.subr.bf16.mxu0 0
          %512 = vmatpush1.bf16.msra.mxu0 %v490
          %513 = vmatprep.subr.bf16.mxu0 0
          %514 = vmatpush1.bf16.msra.mxu0 %v489
          %515 = vmatprep.subr.bf16.mxu0 0
          %516 = vmatpush1.bf16.msra.mxu0 %v488
          %517 = vmatprep.subr.bf16.mxu0 0
          %518 = vmatpush1.bf16.msra.mxu0 %v487
          %519 = vmatprep.subr.bf16.mxu0 0
          %520 = vmatpush2.bf16.msra.mxu0 0
          %521 = vmatprep.subr.bf16.mxu0 0
          %522 = vmatpush2.bf16.msra.mxu0 0
          %523 = vmatprep.subr.bf16.mxu0 0
          %524 = vmatpush2.bf16.msra.mxu0 0
          %525 = vmatprep.subr.bf16.mxu0 0
          %526 = vmatpush2.bf16.msra.mxu0 0
          %527 = vmatprep.subr.bf16.mxu0 0
          %528 = vmatpush2.bf16.msra.mxu0 0
          %529 = vmatprep.subr.bf16.mxu0 0
          %530 = vmatpush2.bf16.msra.mxu0 0
          %531 = vmatprep.subr.bf16.mxu0 0
          %532 = vmatpush2.bf16.msra.mxu0 0
          %533 = vmatprep.subr.bf16.mxu0 0
          %534 = vmatpush2.bf16.msra.mxu0 0
          %535 = vmatprep.mubr.bf16.mxu0 0
          %536 = vmatmul.mubr.bf16.gmra.mxu0 %v416
          %v537 = vpop.f32.mrf.mxu0
          %v538 = vadd.f32 %v453, %v537
          %v539 = vpop.f32.mrf.mxu0
          %v540 = vpop.f32.mrf.mxu0
          %v541 = vadd.f32 %v453, %v540
          %v542 = vpop.f32.mrf.mxu0
          %543 = vmatprep.mubr.bf16.mxu0 0
          %544 = vmatmul.mubr.bf16.gmra.mxu0 %v417
          %v545 = vpop.f32.mrf.mxu0
          %v546 = vadd.f32 %v453, %v545
          %v547 = vpop.f32.mrf.mxu0
          %v548 = vpop.f32.mrf.mxu0
          %v549 = vadd.f32 %v453, %v548
          %v550 = vpop.f32.mrf.mxu0
          %551 = vmatprep.mubr.bf16.mxu0 0
          %552 = vmatmul.mubr.bf16.gmra.mxu0 %v418
          %v553 = vpop.f32.mrf.mxu0
          %v554 = vadd.f32 %v453, %v553
          %v555 = vpop.f32.mrf.mxu0
          %v556 = vpop.f32.mrf.mxu0
          %v557 = vadd.f32 %v453, %v556
          %v558 = vpop.f32.mrf.mxu0
          %559 = vmatprep.mubr.bf16.mxu0 0
          %560 = vmatmul.mubr.bf16.gmra.mxu0 %v419
          %v561 = vpop.f32.mrf.mxu0
          %v562 = vadd.f32 %v453, %v561
          %v563 = vpop.f32.mrf.mxu0
          %v564 = vpop.f32.mrf.mxu0
          %v565 = vadd.f32 %v453, %v564
          %v566 = vpop.f32.mrf.mxu0
          %567 = vmatprep.mubr.bf16.mxu0 0
          %568 = vmatmul.mubr.bf16.gmra.mxu0 %v420
          %v569 = vpop.f32.mrf.mxu0
          %v570 = vadd.f32 %v453, %v569
          %v571 = vpop.f32.mrf.mxu0
          %v572 = vpop.f32.mrf.mxu0
          %v573 = vadd.f32 %v453, %v572
          %v574 = vpop.f32.mrf.mxu0
          %575 = vmatprep.mubr.bf16.mxu0 0
          %576 = vmatmul.mubr.bf16.gmra.mxu0 %v421
          %v577 = vpop.f32.mrf.mxu0
          %v578 = vadd.f32 %v453, %v577
          %v579 = vpop.f32.mrf.mxu0
          %v580 = vpop.f32.mrf.mxu0
          %v581 = vadd.f32 %v453, %v580
          %v582 = vpop.f32.mrf.mxu0
          %583 = vmatprep.mubr.bf16.mxu0 0
          %584 = vmatmul.mubr.bf16.gmra.mxu0 %v422
          %v585 = vpop.f32.mrf.mxu0
          %v586 = vadd.f32 %v453, %v585
          %v587 = vpop.f32.mrf.mxu0
          %v588 = vpop.f32.mrf.mxu0
          %v589 = vadd.f32 %v453, %v588
          %v590 = vpop.f32.mrf.mxu0
          %591 = vmatprep.mubr.bf16.mxu0 0
          %592 = vmatmul.mubr.bf16.gmra.mxu0 %v423
          %v593 = vpop.f32.mrf.mxu0
          %v594 = vadd.f32 %v453, %v593
          %v595 = vpop.f32.mrf.mxu0
          %v596 = vpop.f32.mrf.mxu0
          %v597 = vadd.f32 %v453, %v596
          %v598 = vpop.f32.mrf.mxu0
          %599 = vmatprep.mubr.bf16.mxu0 0
          %600 = vmatmul.mubr.bf16.gmra.mxu0 %v424
          %v601 = vpop.f32.mrf.mxu0
          %v602 = vadd.f32 %v453, %v601
          %v603 = vpop.f32.mrf.mxu0
          %v604 = vpop.f32.mrf.mxu0
          %v605 = vadd.f32 %v453, %v604
          %v606 = vpop.f32.mrf.mxu0
          %607 = vmatprep.mubr.bf16.mxu0 0
          %608 = vmatmul.mubr.bf16.gmra.mxu0 %v425
          %v609 = vpop.f32.mrf.mxu0
          %v610 = vadd.f32 %v453, %v609
          %v611 = vpop.f32.mrf.mxu0
          %v612 = vpop.f32.mrf.mxu0
          %v613 = vadd.f32 %v453, %v612
          %v614 = vpop.f32.mrf.mxu0
          %615 = vmatprep.mubr.bf16.mxu0 0
          %616 = vmatmul.mubr.bf16.gmra.mxu0 %v426
          %v617 = vpop.f32.mrf.mxu0
          %v618 = vadd.f32 %v453, %v617
          %v619 = vpop.f32.mrf.mxu0
          %v620 = vpop.f32.mrf.mxu0
          %v621 = vadd.f32 %v453, %v620
          %v622 = vpop.f32.mrf.mxu0
          %623 = vmatprep.mubr.bf16.mxu0 0
          %624 = vmatmul.mubr.bf16.gmra.mxu0 %v427
          %v625 = vpop.f32.mrf.mxu0
          %v626 = vadd.f32 %v453, %v625
          %v627 = vpop.f32.mrf.mxu0
          %v628 = vpop.f32.mrf.mxu0
          %v629 = vadd.f32 %v453, %v628
          %v630 = vpop.f32.mrf.mxu0
          %631 = vmatprep.mubr.bf16.mxu0 0
          %632 = vmatmul.mubr.bf16.gmra.mxu0 %v428
          %v633 = vpop.f32.mrf.mxu0
          %v634 = vadd.f32 %v453, %v633
          %v635 = vpop.f32.mrf.mxu0
          %v636 = vpop.f32.mrf.mxu0
          %v637 = vadd.f32 %v453, %v636
          %v638 = vpop.f32.mrf.mxu0
          %639 = vmatprep.mubr.bf16.mxu0 0
          %640 = vmatmul.mubr.bf16.gmra.mxu0 %v429
          %v641 = vpop.f32.mrf.mxu0
          %v642 = vadd.f32 %v453, %v641
          %v643 = vpop.f32.mrf.mxu0
          %v644 = vpop.f32.mrf.mxu0
          %v645 = vadd.f32 %v453, %v644
          %v646 = vpop.f32.mrf.mxu0
          %647 = vmatprep.mubr.bf16.mxu0 0
          %648 = vmatmul.mubr.bf16.gmra.mxu0 %v430
          %v649 = vpop.f32.mrf.mxu0
          %v650 = vadd.f32 %v453, %v649
          %v651 = vpop.f32.mrf.mxu0
          %v652 = vpop.f32.mrf.mxu0
          %v653 = vadd.f32 %v453, %v652
          %v654 = vpop.f32.mrf.mxu0
          %655 = vmatprep.mubr.bf16.mxu0 0
          %656 = vmatmul.mubr.bf16.gmra.mxu0 %v431
          %v657 = vpop.f32.mrf.mxu0
          %v658 = vadd.f32 %v453, %v657
          %v659 = vpop.f32.mrf.mxu0
          %v660 = vpop.f32.mrf.mxu0
          %v661 = vadd.f32 %v453, %v660
          %v662 = vpop.f32.mrf.mxu0
          %663 = vdwg.mxu0
          %v664 = vmul.f32 %v538, 0.088388346
          %v665 = vmul.f32 %v541, 0.088388346
          %v666 = vmul.f32 %v546, 0.088388346
          %v667 = vmul.f32 %v549, 0.088388346
          %v668 = vmul.f32 %v554, 0.088388346
          %v669 = vmul.f32 %v557, 0.088388346
          %v670 = vmul.f32 %v562, 0.088388346
          %v671 = vmul.f32 %v565, 0.088388346
          %v672 = vmul.f32 %v570, 0.088388346
          %v673 = vmul.f32 %v573, 0.088388346
          %v674 = vmul.f32 %v578, 0.088388346
          %v675 = vmul.f32 %v581, 0.088388346
          %v676 = vmul.f32 %v586, 0.088388346
          %v677 = vmul.f32 %v589, 0.088388346
          %v678 = vmul.f32 %v594, 0.088388346
          %v679 = vmul.f32 %v597, 0.088388346
          %v680 = vmul.f32 %v602, 0.088388346
          %v681 = vmul.f32 %v605, 0.088388346
          %v682 = vmul.f32 %v610, 0.088388346
          %v683 = vmul.f32 %v613, 0.088388346
          %v684 = vmul.f32 %v618, 0.088388346
          %v685 = vmul.f32 %v621, 0.088388346
          %v686 = vmul.f32 %v626, 0.088388346
          %v687 = vmul.f32 %v629, 0.088388346
          %v688 = vmul.f32 %v634, 0.088388346
          %v689 = vmul.f32 %v637, 0.088388346
          %v690 = vmul.f32 %v642, 0.088388346
          %v691 = vmul.f32 %v645, 0.088388346
          %v692 = vmul.f32 %v650, 0.088388346
          %v693 = vmul.f32 %v653, 0.088388346
          %v694 = vmul.f32 %v658, 0.088388346
          %v695 = vmul.f32 %v661, 0.088388346
          %v696 = vpack.c.bf16 %v665, %v664
          %v697 = vpack.c.bf16 %v667, %v666
          %v698 = vpack.c.bf16 %v669, %v668
          %v699 = vpack.c.bf16 %v671, %v670
          %v700 = vpack.c.bf16 %v673, %v672
          %v701 = vpack.c.bf16 %v675, %v674
          %v702 = vpack.c.bf16 %v677, %v676
          %v703 = vpack.c.bf16 %v679, %v678
          %v704 = vpack.c.bf16 %v681, %v680
          %v705 = vpack.c.bf16 %v683, %v682
          %v706 = vpack.c.bf16 %v685, %v684
          %v707 = vpack.c.bf16 %v687, %v686
          %v708 = vpack.c.bf16 %v689, %v688
          %v709 = vpack.c.bf16 %v691, %v690
          %v710 = vpack.c.bf16 %v693, %v692
          %v711 = vpack.c.bf16 %v695, %v694
          %v728 = vunpack.c.l.b16 %v696
          %v729 = vunpack.c.h.b16 %v696
          %v730 = vunpack.c.l.b16 %v697
          %v731 = vunpack.c.h.b16 %v697
          %v732 = vunpack.c.l.b16 %v698
          %v733 = vunpack.c.h.b16 %v698
          %v734 = vunpack.c.l.b16 %v699
          %v735 = vunpack.c.h.b16 %v699
          %v736 = vunpack.c.l.b16 %v700
          %v737 = vunpack.c.h.b16 %v700
          %v738 = vunpack.c.l.b16 %v701
          %v739 = vunpack.c.h.b16 %v701
          %v740 = vunpack.c.l.b16 %v702
          %v741 = vunpack.c.h.b16 %v702
          %v742 = vunpack.c.l.b16 %v703
          %v743 = vunpack.c.h.b16 %v703
          %v744 = vunpack.c.l.b16 %v704
          %v745 = vunpack.c.h.b16 %v704
          %v746 = vunpack.c.l.b16 %v705
          %v747 = vunpack.c.h.b16 %v705
          %v748 = vunpack.c.l.b16 %v706
          %v749 = vunpack.c.h.b16 %v706
          %v750 = vunpack.c.l.b16 %v707
          %v751 = vunpack.c.h.b16 %v707
          %v752 = vunpack.c.l.b16 %v708
          %v753 = vunpack.c.h.b16 %v708
          %v754 = vunpack.c.l.b16 %v709
          %v755 = vunpack.c.h.b16 %v709
          %v756 = vunpack.c.l.b16 %v710
          %v757 = vunpack.c.h.b16 %v710
          %v758 = vunpack.c.l.b16 %v711
          %v759 = vunpack.c.h.b16 %v711
          %v760 = vpack.c.b16 %v728, %v728
          %v761 = vpack.c.b16 %v729, %v729
          %v762 = vpack.c.b16 %v730, %v730
          %v763 = vpack.c.b16 %v731, %v731
          %v764 = vpack.c.b16 %v732, %v732
          %v765 = vpack.c.b16 %v733, %v733
          %v766 = vpack.c.b16 %v734, %v734
          %v767 = vpack.c.b16 %v735, %v735
          %v768 = vpack.c.b16 %v736, %v736
          %v769 = vpack.c.b16 %v737, %v737
          %v770 = vpack.c.b16 %v738, %v738
          %v771 = vpack.c.b16 %v739, %v739
          %v772 = vpack.c.b16 %v740, %v740
          %v773 = vpack.c.b16 %v741, %v741
          %v774 = vpack.c.b16 %v742, %v742
          %v775 = vpack.c.b16 %v743, %v743
          %v776 = vpack.c.b16 %v744, %v744
          %v777 = vpack.c.b16 %v745, %v745
          %v778 = vpack.c.b16 %v746, %v746
          %v779 = vpack.c.b16 %v747, %v747
          %v780 = vpack.c.b16 %v748, %v748
          %v781 = vpack.c.b16 %v749, %v749
          %v782 = vpack.c.b16 %v750, %v750
          %v783 = vpack.c.b16 %v751, %v751
          %v784 = vpack.c.b16 %v752, %v752
          %v785 = vpack.c.b16 %v753, %v753
          %v786 = vpack.c.b16 %v754, %v754
          %v787 = vpack.c.b16 %v755, %v755
          %v788 = vpack.c.b16 %v756, %v756
          %v789 = vpack.c.b16 %v757, %v757
          %v790 = vpack.c.b16 %v758, %v758
          %v791 = vpack.c.b16 %v759, %v759
          %824 = vst [vmem:[#allocation2] sm:$0xf] %v760
          %825 = vst [vmem:[#allocation2 + $0x4] sm:$0xf] %v761
          %826 = vst [vmem:[#allocation2 + $0x8] sm:$0xf] %v762
          %827 = vst [vmem:[#allocation2 + $0xc] sm:$0xf] %v763
          %828 = vst [vmem:[#allocation2 + $0x10] sm:$0xf] %v764
          %829 = vst [vmem:[#allocation2 + $0x14] sm:$0xf] %v765
          %830 = vst [vmem:[#allocation2 + $0x18] sm:$0xf] %v766
          %831 = vst [vmem:[#allocation2 + $0x1c] sm:$0xf] %v767
          %832 = vst [vmem:[#allocation2 + $0x20] sm:$0xf] %v768
          %833 = vst [vmem:[#allocation2 + $0x24] sm:$0xf] %v769
          %834 = vst [vmem:[#allocation2 + $0x28] sm:$0xf] %v770
          %835 = vst [vmem:[#allocation2 + $0x2c] sm:$0xf] %v771
          %836 = vst [vmem:[#allocation2 + $0x30] sm:$0xf] %v772
          %837 = vst [vmem:[#allocation2 + $0x34] sm:$0xf] %v773
          %838 = vst [vmem:[#allocation2 + $0x38] sm:$0xf] %v774
          %839 = vst [vmem:[#allocation2 + $0x3c] sm:$0xf] %v775
          %840 = vst [vmem:[#allocation2 + $0x40] sm:$0xf] %v776
          %841 = vst [vmem:[#allocation2 + $0x44] sm:$0xf] %v777
          %842 = vst [vmem:[#allocation2 + $0x48] sm:$0xf] %v778
          %843 = vst [vmem:[#allocation2 + $0x4c] sm:$0xf] %v779
          %844 = vst [vmem:[#allocation2 + $0x50] sm:$0xf] %v780
          %845 = vst [vmem:[#allocation2 + $0x54] sm:$0xf] %v781
          %846 = vst [vmem:[#allocation2 + $0x58] sm:$0xf] %v782
          %847 = vst [vmem:[#allocation2 + $0x5c] sm:$0xf] %v783
          %848 = vst [vmem:[#allocation2 + $0x60] sm:$0xf] %v784
          %849 = vst [vmem:[#allocation2 + $0x64] sm:$0xf] %v785
          %850 = vst [vmem:[#allocation2 + $0x68] sm:$0xf] %v786
          %851 = vst [vmem:[#allocation2 + $0x6c] sm:$0xf] %v787
          %852 = vst [vmem:[#allocation2 + $0x70] sm:$0xf] %v788
          %853 = vst [vmem:[#allocation2 + $0x74] sm:$0xf] %v789
          %854 = vst [vmem:[#allocation2 + $0x78] sm:$0xf] %v790
          %855 = vst [vmem:[#allocation2 + $0x7c] sm:$0xf] %v791
          %vm856 = vcmask 7168
          %857 = vst.msk [vmem:[#allocation3] sm:$0xff] %vm856, -inf
          %858 = vst.msk [vmem:[#allocation3 + $0x8] sm:$0xff] %vm856, -inf
          %859 = vst.msk [vmem:[#allocation3 + $0x10] sm:$0xff] %vm856, -inf
          %860 = vst.msk [vmem:[#allocation3 + $0x18] sm:$0xff] %vm856, -inf
          %861 = vst.msk [vmem:[#allocation3 + $0x20] sm:$0xff] %vm856, -inf
          %862 = vst.msk [vmem:[#allocation3 + $0x28] sm:$0xff] %vm856, -inf
          %863 = vst.msk [vmem:[#allocation3 + $0x30] sm:$0xff] %vm856, -inf
          %864 = vst.msk [vmem:[#allocation3 + $0x38] sm:$0xff] %vm856, -inf
          %865 = vst.msk [vmem:[#allocation3 + $0x40] sm:$0xff] %vm856, -inf
          %866 = vst.msk [vmem:[#allocation3 + $0x48] sm:$0xff] %vm856, -inf
          %867 = vst.msk [vmem:[#allocation3 + $0x50] sm:$0xff] %vm856, -inf
          %868 = vst.msk [vmem:[#allocation3 + $0x58] sm:$0xff] %vm856, -inf
          %869 = vst.msk [vmem:[#allocation3 + $0x60] sm:$0xff] %vm856, -inf
          %870 = vst.msk [vmem:[#allocation3 + $0x68] sm:$0xff] %vm856, -inf
          %871 = vst.msk [vmem:[#allocation3 + $0x70] sm:$0xff] %vm856, -inf
          %872 = vst.msk [vmem:[#allocation3 + $0x78] sm:$0xff] %vm856, -inf
          %873 = vst.msk [vmem:[#allocation3 + $0x80] sm:$0xff] %vm856, -inf
          %874 = vst.msk [vmem:[#allocation3 + $0x88] sm:$0xff] %vm856, -inf
          %875 = vst.msk [vmem:[#allocation3 + $0x90] sm:$0xff] %vm856, -inf
          %876 = vst.msk [vmem:[#allocation3 + $0x98] sm:$0xff] %vm856, -inf
          %877 = vst.msk [vmem:[#allocation3 + $0xa0] sm:$0xff] %vm856, -inf
          %878 = vst.msk [vmem:[#allocation3 + $0xa8] sm:$0xff] %vm856, -inf
          %879 = vst.msk [vmem:[#allocation3 + $0xb0] sm:$0xff] %vm856, -inf
          %880 = vst.msk [vmem:[#allocation3 + $0xb8] sm:$0xff] %vm856, -inf
          %881 = vst.msk [vmem:[#allocation3 + $0xc0] sm:$0xff] %vm856, -inf
          %882 = vst.msk [vmem:[#allocation3 + $0xc8] sm:$0xff] %vm856, -inf
          %883 = vst.msk [vmem:[#allocation3 + $0xd0] sm:$0xff] %vm856, -inf
          %884 = vst.msk [vmem:[#allocation3 + $0xd8] sm:$0xff] %vm856, -inf
          %885 = vst.msk [vmem:[#allocation3 + $0xe0] sm:$0xff] %vm856, -inf
          %886 = vst.msk [vmem:[#allocation3 + $0xe8] sm:$0xff] %vm856, -inf
          %887 = vst.msk [vmem:[#allocation3 + $0xf0] sm:$0xff] %vm856, -inf
          %888 = vst.msk [vmem:[#allocation3 + $0xf8] sm:$0xff] %vm856, -inf
          %889 = vst.msk [vmem:[#allocation4] sm:$0xff] %vm856, 0.0
          %890 = vst.msk [vmem:[#allocation4 + $0x8] sm:$0xff] %vm856, 0.0
          %891 = vst.msk [vmem:[#allocation4 + $0x10] sm:$0xff] %vm856, 0.0
          %892 = vst.msk [vmem:[#allocation4 + $0x18] sm:$0xff] %vm856, 0.0
          %893 = vst.msk [vmem:[#allocation4 + $0x20] sm:$0xff] %vm856, 0.0
          %894 = vst.msk [vmem:[#allocation4 + $0x28] sm:$0xff] %vm856, 0.0
          %895 = vst.msk [vmem:[#allocation4 + $0x30] sm:$0xff] %vm856, 0.0
          %896 = vst.msk [vmem:[#allocation4 + $0x38] sm:$0xff] %vm856, 0.0
          %897 = vst.msk [vmem:[#allocation4 + $0x40] sm:$0xff] %vm856, 0.0
          %898 = vst.msk [vmem:[#allocation4 + $0x48] sm:$0xff] %vm856, 0.0
          %899 = vst.msk [vmem:[#allocation4 + $0x50] sm:$0xff] %vm856, 0.0
          %900 = vst.msk [vmem:[#allocation4 + $0x58] sm:$0xff] %vm856, 0.0
          %901 = vst.msk [vmem:[#allocation4 + $0x60] sm:$0xff] %vm856, 0.0
          %902 = vst.msk [vmem:[#allocation4 + $0x68] sm:$0xff] %vm856, 0.0
          %903 = vst.msk [vmem:[#allocation4 + $0x70] sm:$0xff] %vm856, 0.0
          %904 = vst.msk [vmem:[#allocation4 + $0x78] sm:$0xff] %vm856, 0.0
          %905 = vst.msk [vmem:[#allocation4 + $0x80] sm:$0xff] %vm856, 0.0
          %906 = vst.msk [vmem:[#allocation4 + $0x88] sm:$0xff] %vm856, 0.0
          %907 = vst.msk [vmem:[#allocation4 + $0x90] sm:$0xff] %vm856, 0.0
          %908 = vst.msk [vmem:[#allocation4 + $0x98] sm:$0xff] %vm856, 0.0
          %909 = vst.msk [vmem:[#allocation4 + $0xa0] sm:$0xff] %vm856, 0.0
          %910 = vst.msk [vmem:[#allocation4 + $0xa8] sm:$0xff] %vm856, 0.0
          %911 = vst.msk [vmem:[#allocation4 + $0xb0] sm:$0xff] %vm856, 0.0
          %912 = vst.msk [vmem:[#allocation4 + $0xb8] sm:$0xff] %vm856, 0.0
          %913 = vst.msk [vmem:[#allocation4 + $0xc0] sm:$0xff] %vm856, 0.0
          %914 = vst.msk [vmem:[#allocation4 + $0xc8] sm:$0xff] %vm856, 0.0
          %915 = vst.msk [vmem:[#allocation4 + $0xd0] sm:$0xff] %vm856, 0.0
          %916 = vst.msk [vmem:[#allocation4 + $0xd8] sm:$0xff] %vm856, 0.0
          %917 = vst.msk [vmem:[#allocation4 + $0xe0] sm:$0xff] %vm856, 0.0
          %918 = vst.msk [vmem:[#allocation4 + $0xe8] sm:$0xff] %vm856, 0.0
          %919 = vst.msk [vmem:[#allocation4 + $0xf0] sm:$0xff] %vm856, 0.0
          %920 = vst.msk [vmem:[#allocation4 + $0xf8] sm:$0xff] %vm856, 0.0
          %921 = vst [vmem:[#allocation5] sm:$0xff] 0.0
          %922 = vst [vmem:[#allocation5 + $0x8] sm:$0xff] 0.0
          %923 = vst [vmem:[#allocation5 + $0x10] sm:$0xff] 0.0
          %924 = vst [vmem:[#allocation5 + $0x18] sm:$0xff] 0.0
          %925 = vst [vmem:[#allocation5 + $0x20] sm:$0xff] 0.0
          %926 = vst [vmem:[#allocation5 + $0x28] sm:$0xff] 0.0
          %927 = vst [vmem:[#allocation5 + $0x30] sm:$0xff] 0.0
          %928 = vst [vmem:[#allocation5 + $0x38] sm:$0xff] 0.0
          %929 = vst [vmem:[#allocation5 + $0x40] sm:$0xff] 0.0
          %930 = vst [vmem:[#allocation5 + $0x48] sm:$0xff] 0.0
          %931 = vst [vmem:[#allocation5 + $0x50] sm:$0xff] 0.0
          %932 = vst [vmem:[#allocation5 + $0x58] sm:$0xff] 0.0
          %933 = vst [vmem:[#allocation5 + $0x60] sm:$0xff] 0.0
          %934 = vst [vmem:[#allocation5 + $0x68] sm:$0xff] 0.0
          %935 = vst [vmem:[#allocation5 + $0x70] sm:$0xff] 0.0
          %936 = vst [vmem:[#allocation5 + $0x78] sm:$0xff] 0.0
          %937 = vst [vmem:[#allocation5 + $0x80] sm:$0xff] 0.0
          %938 = vst [vmem:[#allocation5 + $0x88] sm:$0xff] 0.0
          %939 = vst [vmem:[#allocation5 + $0x90] sm:$0xff] 0.0
          %940 = vst [vmem:[#allocation5 + $0x98] sm:$0xff] 0.0
          %941 = vst [vmem:[#allocation5 + $0xa0] sm:$0xff] 0.0
          %942 = vst [vmem:[#allocation5 + $0xa8] sm:$0xff] 0.0
          %943 = vst [vmem:[#allocation5 + $0xb0] sm:$0xff] 0.0
          %944 = vst [vmem:[#allocation5 + $0xb8] sm:$0xff] 0.0
          %945 = vst [vmem:[#allocation5 + $0xc0] sm:$0xff] 0.0
          %946 = vst [vmem:[#allocation5 + $0xc8] sm:$0xff] 0.0
          %947 = vst [vmem:[#allocation5 + $0xd0] sm:$0xff] 0.0
          %948 = vst [vmem:[#allocation5 + $0xd8] sm:$0xff] 0.0
          %949 = vst [vmem:[#allocation5 + $0xe0] sm:$0xff] 0.0
          %950 = vst [vmem:[#allocation5 + $0xe8] sm:$0xff] 0.0
          %951 = vst [vmem:[#allocation5 + $0xf0] sm:$0xff] 0.0
          %952 = vst [vmem:[#allocation5 + $0xf8] sm:$0xff] 0.0
        $region64: #{tpu_custom_call.1} parent=43 // pred_fallthru
          _
        %p953 = scmp.eq.s32.totalorder %s33, 0
        // Predicated region
        $region65: #{tpu_custom_call.1} parent=43 // pred_check
          %p954 = pneg %p953
        $region66: #{tpu_custom_call.1} parent=43 // pred_check_branch
          %956 = sbr.rel (%p954) target = $region68
        $region67: #{tpu_custom_call.1} parent=43 // pred_region
          %v957 = vld [vmem:[%s332] sm:$0xff]
          %v958 = vld [vmem:[%s332 + $0x8] sm:$0xff]
          %v959 = vld [vmem:[%s332 + $0x10] sm:$0xff]
          %v960 = vld [vmem:[%s332 + $0x18] sm:$0xff]
          %v961 = vld [vmem:[%s332 + $0x20] sm:$0xff]
          %v962 = vld [vmem:[%s332 + $0x28] sm:$0xff]
          %v963 = vld [vmem:[%s332 + $0x30] sm:$0xff]
          %v964 = vld [vmem:[%s332 + $0x38] sm:$0xff]
          %v965 = vld [vmem:[%s332 + $0x40] sm:$0xff]
          %v966 = vld [vmem:[%s332 + $0x48] sm:$0xff]
          %v967 = vld [vmem:[%s332 + $0x50] sm:$0xff]
          %v968 = vld [vmem:[%s332 + $0x58] sm:$0xff]
          %v969 = vld [vmem:[%s332 + $0x60] sm:$0xff]
          %v970 = vld [vmem:[%s332 + $0x68] sm:$0xff]
          %v971 = vld [vmem:[%s332 + $0x70] sm:$0xff]
          %v972 = vld [vmem:[%s332 + $0x78] sm:$0xff]
          %v973 = vld [vmem:[%s332 + $0x80] sm:$0xff]
          %v974 = vld [vmem:[%s332 + $0x88] sm:$0xff]
          %v975 = vld [vmem:[%s332 + $0x90] sm:$0xff]
          %v976 = vld [vmem:[%s332 + $0x98] sm:$0xff]
          %v977 = vld [vmem:[%s332 + $0xa0] sm:$0xff]
          %v978 = vld [vmem:[%s332 + $0xa8] sm:$0xff]
          %v979 = vld [vmem:[%s332 + $0xb0] sm:$0xff]
          %v980 = vld [vmem:[%s332 + $0xb8] sm:$0xff]
          %v981 = vld [vmem:[%s332 + $0xc0] sm:$0xff]
          %v982 = vld [vmem:[%s332 + $0xc8] sm:$0xff]
          %v983 = vld [vmem:[%s332 + $0xd0] sm:$0xff]
          %v984 = vld [vmem:[%s332 + $0xd8] sm:$0xff]
          %v985 = vld [vmem:[%s332 + $0xe0] sm:$0xff]
          %v986 = vld [vmem:[%s332 + $0xe8] sm:$0xff]
          %v987 = vld [vmem:[%s332 + $0xf0] sm:$0xff]
          %v988 = vld [vmem:[%s332 + $0xf8] sm:$0xff]
          %v989 = vpack.c.bf16 %v958, %v957
          %v990 = vpack.c.bf16 %v960, %v959
          %v991 = vpack.c.bf16 %v962, %v961
          %v992 = vpack.c.bf16 %v964, %v963
          %v993 = vpack.c.bf16 %v966, %v965
          %v994 = vpack.c.bf16 %v968, %v967
          %v995 = vpack.c.bf16 %v970, %v969
          %v996 = vpack.c.bf16 %v972, %v971
          %v997 = vpack.c.bf16 %v974, %v973
          %v998 = vpack.c.bf16 %v976, %v975
          %v999 = vpack.c.bf16 %v978, %v977
          %v1000 = vpack.c.bf16 %v980, %v979
          %v1001 = vpack.c.bf16 %v982, %v981
          %v1002 = vpack.c.bf16 %v984, %v983
          %v1003 = vpack.c.bf16 %v986, %v985
          %v1004 = vpack.c.bf16 %v988, %v987
          %v1005 = vld [vmem:[#allocation14] sm:$0xff]
          %v1006 = vld [vmem:[#allocation14 + $0x8] sm:$0xff]
          %v1007 = vld [vmem:[#allocation14 + $0x10] sm:$0xff]
          %v1008 = vld [vmem:[#allocation14 + $0x18] sm:$0xff]
          %v1009 = vld [vmem:[#allocation14 + $0x20] sm:$0xff]
          %v1010 = vld [vmem:[#allocation14 + $0x28] sm:$0xff]
          %v1011 = vld [vmem:[#allocation14 + $0x30] sm:$0xff]
          %v1012 = vld [vmem:[#allocation14 + $0x38] sm:$0xff]
          %v1013 = vld [vmem:[#allocation14 + $0x40] sm:$0xff]
          %v1014 = vld [vmem:[#allocation14 + $0x48] sm:$0xff]
          %v1015 = vld [vmem:[#allocation14 + $0x50] sm:$0xff]
          %v1016 = vld [vmem:[#allocation14 + $0x58] sm:$0xff]
          %v1017 = vld [vmem:[#allocation14 + $0x60] sm:$0xff]
          %v1018 = vld [vmem:[#allocation14 + $0x68] sm:$0xff]
          %v1019 = vld [vmem:[#allocation14 + $0x70] sm:$0xff]
          %v1020 = vld [vmem:[#allocation14 + $0x78] sm:$0xff]
          %v1037 = vunpack.c.l.b16 %v1005
          %v1038 = vunpack.c.h.b16 %v1005
          %v1039 = vunpack.c.l.b16 %v1006
          %v1040 = vunpack.c.h.b16 %v1006
          %v1041 = vunpack.c.l.b16 %v1007
          %v1042 = vunpack.c.h.b16 %v1007
          %v1043 = vunpack.c.l.b16 %v1008
          %v1044 = vunpack.c.h.b16 %v1008
          %v1045 = vunpack.c.l.b16 %v1009
          %v1046 = vunpack.c.h.b16 %v1009
          %v1047 = vunpack.c.l.b16 %v1010
          %v1048 = vunpack.c.h.b16 %v1010
          %v1049 = vunpack.c.l.b16 %v1011
          %v1050 = vunpack.c.h.b16 %v1011
          %v1051 = vunpack.c.l.b16 %v1012
          %v1052 = vunpack.c.h.b16 %v1012
          %v1053 = vunpack.c.l.b16 %v1013
          %v1054 = vunpack.c.h.b16 %v1013
          %v1055 = vunpack.c.l.b16 %v1014
          %v1056 = vunpack.c.h.b16 %v1014
          %v1057 = vunpack.c.l.b16 %v1015
          %v1058 = vunpack.c.h.b16 %v1015
          %v1059 = vunpack.c.l.b16 %v1016
          %v1060 = vunpack.c.h.b16 %v1016
          %v1061 = vunpack.c.l.b16 %v1017
          %v1062 = vunpack.c.h.b16 %v1017
          %v1063 = vunpack.c.l.b16 %v1018
          %v1064 = vunpack.c.h.b16 %v1018
          %v1065 = vunpack.c.l.b16 %v1019
          %v1066 = vunpack.c.h.b16 %v1019
          %v1067 = vunpack.c.l.b16 %v1020
          %v1068 = vunpack.c.h.b16 %v1020
          %v1069 = vpack.c.b16 %v1039, %v1037
          %v1070 = vpack.c.b16 %v1040, %v1038
          %v1071 = vpack.c.b16 %v1043, %v1041
          %v1072 = vpack.c.b16 %v1044, %v1042
          %v1073 = vpack.c.b16 %v1047, %v1045
          %v1074 = vpack.c.b16 %v1048, %v1046
          %v1075 = vpack.c.b16 %v1051, %v1049
          %v1076 = vpack.c.b16 %v1052, %v1050
          %v1077 = vpack.c.b16 %v1055, %v1053
          %v1078 = vpack.c.b16 %v1056, %v1054
          %v1079 = vpack.c.b16 %v1059, %v1057
          %v1080 = vpack.c.b16 %v1060, %v1058
          %v1081 = vpack.c.b16 %v1063, %v1061
          %v1082 = vpack.c.b16 %v1064, %v1062
          %v1083 = vpack.c.b16 %v1067, %v1065
          %v1084 = vpack.c.b16 %v1068, %v1066
          %1101 = vmatprep.subr.bf16.mxu0 %v1084
          %1102 = vmatpush1.bf16.msra.mxu0 %v1083
          %1103 = vmatprep.subr.bf16.mxu0 %v1082
          %1104 = vmatpush1.bf16.msra.mxu0 %v1081
          %1105 = vmatprep.subr.bf16.mxu0 %v1080
          %1106 = vmatpush1.bf16.msra.mxu0 %v1079
          %1107 = vmatprep.subr.bf16.mxu0 %v1078
          %1108 = vmatpush1.bf16.msra.mxu0 %v1077
          %1109 = vmatprep.subr.bf16.mxu0 %v1076
          %1110 = vmatpush1.bf16.msra.mxu0 %v1075
          %1111 = vmatprep.subr.bf16.mxu0 %v1074
          %1112 = vmatpush1.bf16.msra.mxu0 %v1073
          %1113 = vmatprep.subr.bf16.mxu0 %v1072
          %1114 = vmatpush1.bf16.msra.mxu0 %v1071
          %1115 = vmatprep.subr.bf16.mxu0 %v1070
          %1116 = vmatpush1.bf16.msra.mxu0 %v1069
          %1117 = vmatprep.subr.bf16.mxu0 0
          %1118 = vmatpush2.bf16.msra.mxu0 0
          %1119 = vmatprep.subr.bf16.mxu0 0
          %1120 = vmatpush2.bf16.msra.mxu0 0
          %1121 = vmatprep.subr.bf16.mxu0 0
          %1122 = vmatpush2.bf16.msra.mxu0 0
          %1123 = vmatprep.subr.bf16.mxu0 0
          %1124 = vmatpush2.bf16.msra.mxu0 0
          %1125 = vmatprep.subr.bf16.mxu0 0
          %1126 = vmatpush2.bf16.msra.mxu0 0
          %1127 = vmatprep.subr.bf16.mxu0 0
          %1128 = vmatpush2.bf16.msra.mxu0 0
          %1129 = vmatprep.subr.bf16.mxu0 0
          %1130 = vmatpush2.bf16.msra.mxu0 0
          %1131 = vmatprep.subr.bf16.mxu0 0
          %1132 = vmatpush2.bf16.msra.mxu0 0
          %1133 = vmatprep.mubr.bf16.mxu0 0
          %1134 = vmatmul.mubr.bf16.gmra.mxu0 %v989
          %v1135 = vpop.f32.mrf.mxu0
          %v1136 = vadd.f32 0.0, %v1135
          %v1137 = vpop.f32.mrf.mxu0
          %v1138 = vadd.f32 0.0, %v1137
          %v1139 = vpop.f32.mrf.mxu0
          %v1140 = vadd.f32 0.0, %v1139
          %v1141 = vpop.f32.mrf.mxu0
          %v1142 = vadd.f32 0.0, %v1141
          %1143 = vmatprep.mubr.bf16.mxu0 0
          %1144 = vmatmul.mubr.bf16.gmra.mxu0 %v990
          %v1145 = vpop.f32.mrf.mxu0
          %v1146 = vadd.f32 0.0, %v1145
          %v1147 = vpop.f32.mrf.mxu0
          %v1148 = vadd.f32 0.0, %v1147
          %v1149 = vpop.f32.mrf.mxu0
          %v1150 = vadd.f32 0.0, %v1149
          %v1151 = vpop.f32.mrf.mxu0
          %v1152 = vadd.f32 0.0, %v1151
          %1153 = vmatprep.mubr.bf16.mxu0 0
          %1154 = vmatmul.mubr.bf16.gmra.mxu0 %v991
          %v1155 = vpop.f32.mrf.mxu0
          %v1156 = vadd.f32 0.0, %v1155
          %v1157 = vpop.f32.mrf.mxu0
          %v1158 = vadd.f32 0.0, %v1157
          %v1159 = vpop.f32.mrf.mxu0
          %v1160 = vadd.f32 0.0, %v1159
          %v1161 = vpop.f32.mrf.mxu0
          %v1162 = vadd.f32 0.0, %v1161
          %1163 = vmatprep.mubr.bf16.mxu0 0
          %1164 = vmatmul.mubr.bf16.gmra.mxu0 %v992
          %v1165 = vpop.f32.mrf.mxu0
          %v1166 = vadd.f32 0.0, %v1165
          %v1167 = vpop.f32.mrf.mxu0
          %v1168 = vadd.f32 0.0, %v1167
          %v1169 = vpop.f32.mrf.mxu0
          %v1170 = vadd.f32 0.0, %v1169
          %v1171 = vpop.f32.mrf.mxu0
          %v1172 = vadd.f32 0.0, %v1171
          %1173 = vmatprep.mubr.bf16.mxu0 0
          %1174 = vmatmul.mubr.bf16.gmra.mxu0 %v993
          %v1175 = vpop.f32.mrf.mxu0
          %v1176 = vadd.f32 0.0, %v1175
          %v1177 = vpop.f32.mrf.mxu0
          %v1178 = vadd.f32 0.0, %v1177
          %v1179 = vpop.f32.mrf.mxu0
          %v1180 = vadd.f32 0.0, %v1179
          %v1181 = vpop.f32.mrf.mxu0
          %v1182 = vadd.f32 0.0, %v1181
          %1183 = vmatprep.mubr.bf16.mxu0 0
          %1184 = vmatmul.mubr.bf16.gmra.mxu0 %v994
          %v1185 = vpop.f32.mrf.mxu0
          %v1186 = vadd.f32 0.0, %v1185
          %v1187 = vpop.f32.mrf.mxu0
          %v1188 = vadd.f32 0.0, %v1187
          %v1189 = vpop.f32.mrf.mxu0
          %v1190 = vadd.f32 0.0, %v1189
          %v1191 = vpop.f32.mrf.mxu0
          %v1192 = vadd.f32 0.0, %v1191
          %1193 = vmatprep.mubr.bf16.mxu0 0
          %1194 = vmatmul.mubr.bf16.gmra.mxu0 %v995
          %v1195 = vpop.f32.mrf.mxu0
          %v1196 = vadd.f32 0.0, %v1195
          %v1197 = vpop.f32.mrf.mxu0
          %v1198 = vadd.f32 0.0, %v1197
          %v1199 = vpop.f32.mrf.mxu0
          %v1200 = vadd.f32 0.0, %v1199
          %v1201 = vpop.f32.mrf.mxu0
          %v1202 = vadd.f32 0.0, %v1201
          %1203 = vmatprep.mubr.bf16.mxu0 0
          %1204 = vmatmul.mubr.bf16.gmra.mxu0 %v996
          %v1205 = vpop.f32.mrf.mxu0
          %v1206 = vadd.f32 0.0, %v1205
          %v1207 = vpop.f32.mrf.mxu0
          %v1208 = vadd.f32 0.0, %v1207
          %v1209 = vpop.f32.mrf.mxu0
          %v1210 = vadd.f32 0.0, %v1209
          %v1211 = vpop.f32.mrf.mxu0
          %v1212 = vadd.f32 0.0, %v1211
          %1213 = vmatprep.mubr.bf16.mxu0 0
          %1214 = vmatmul.mubr.bf16.gmra.mxu0 %v997
          %v1215 = vpop.f32.mrf.mxu0
          %v1216 = vadd.f32 0.0, %v1215
          %v1217 = vpop.f32.mrf.mxu0
          %v1218 = vadd.f32 0.0, %v1217
          %v1219 = vpop.f32.mrf.mxu0
          %v1220 = vadd.f32 0.0, %v1219
          %v1221 = vpop.f32.mrf.mxu0
          %v1222 = vadd.f32 0.0, %v1221
          %1223 = vmatprep.mubr.bf16.mxu0 0
          %1224 = vmatmul.mubr.bf16.gmra.mxu0 %v998
          %v1225 = vpop.f32.mrf.mxu0
          %v1226 = vadd.f32 0.0, %v1225
          %v1227 = vpop.f32.mrf.mxu0
          %v1228 = vadd.f32 0.0, %v1227
          %v1229 = vpop.f32.mrf.mxu0
          %v1230 = vadd.f32 0.0, %v1229
          %v1231 = vpop.f32.mrf.mxu0
          %v1232 = vadd.f32 0.0, %v1231
          %1233 = vmatprep.mubr.bf16.mxu0 0
          %1234 = vmatmul.mubr.bf16.gmra.mxu0 %v999
          %v1235 = vpop.f32.mrf.mxu0
          %v1236 = vadd.f32 0.0, %v1235
          %v1237 = vpop.f32.mrf.mxu0
          %v1238 = vadd.f32 0.0, %v1237
          %v1239 = vpop.f32.mrf.mxu0
          %v1240 = vadd.f32 0.0, %v1239
          %v1241 = vpop.f32.mrf.mxu0
          %v1242 = vadd.f32 0.0, %v1241
          %1243 = vmatprep.mubr.bf16.mxu0 0
          %1244 = vmatmul.mubr.bf16.gmra.mxu0 %v1000
          %v1245 = vpop.f32.mrf.mxu0
          %v1246 = vadd.f32 0.0, %v1245
          %v1247 = vpop.f32.mrf.mxu0
          %v1248 = vadd.f32 0.0, %v1247
          %v1249 = vpop.f32.mrf.mxu0
          %v1250 = vadd.f32 0.0, %v1249
          %v1251 = vpop.f32.mrf.mxu0
          %v1252 = vadd.f32 0.0, %v1251
          %1253 = vmatprep.mubr.bf16.mxu0 0
          %1254 = vmatmul.mubr.bf16.gmra.mxu0 %v1001
          %v1255 = vpop.f32.mrf.mxu0
          %v1256 = vadd.f32 0.0, %v1255
          %v1257 = vpop.f32.mrf.mxu0
          %v1258 = vadd.f32 0.0, %v1257
          %v1259 = vpop.f32.mrf.mxu0
          %v1260 = vadd.f32 0.0, %v1259
          %v1261 = vpop.f32.mrf.mxu0
          %v1262 = vadd.f32 0.0, %v1261
          %1263 = vmatprep.mubr.bf16.mxu0 0
          %1264 = vmatmul.mubr.bf16.gmra.mxu0 %v1002
          %v1265 = vpop.f32.mrf.mxu0
          %v1266 = vadd.f32 0.0, %v1265
          %v1267 = vpop.f32.mrf.mxu0
          %v1268 = vadd.f32 0.0, %v1267
          %v1269 = vpop.f32.mrf.mxu0
          %v1270 = vadd.f32 0.0, %v1269
          %v1271 = vpop.f32.mrf.mxu0
          %v1272 = vadd.f32 0.0, %v1271
          %1273 = vmatprep.mubr.bf16.mxu0 0
          %1274 = vmatmul.mubr.bf16.gmra.mxu0 %v1003
          %v1275 = vpop.f32.mrf.mxu0
          %v1276 = vadd.f32 0.0, %v1275
          %v1277 = vpop.f32.mrf.mxu0
          %v1278 = vadd.f32 0.0, %v1277
          %v1279 = vpop.f32.mrf.mxu0
          %v1280 = vadd.f32 0.0, %v1279
          %v1281 = vpop.f32.mrf.mxu0
          %v1282 = vadd.f32 0.0, %v1281
          %1283 = vmatprep.mubr.bf16.mxu0 0
          %1284 = vmatmul.mubr.bf16.gmra.mxu0 %v1004
          %v1285 = vpop.f32.mrf.mxu0
          %v1286 = vadd.f32 0.0, %v1285
          %v1287 = vpop.f32.mrf.mxu0
          %v1288 = vadd.f32 0.0, %v1287
          %v1289 = vpop.f32.mrf.mxu0
          %v1290 = vadd.f32 0.0, %v1289
          %v1291 = vpop.f32.mrf.mxu0
          %v1292 = vadd.f32 0.0, %v1291
          %1293 = vdwg.mxu0
          %s1294 = smul.u32 %s34, 256
          %v1295 = vpack.c.bf16 %v1140, %v1136
          %v1296 = vpack.c.bf16 %v1150, %v1146
          %v1297 = vpack.c.bf16 %v1160, %v1156
          %v1298 = vpack.c.bf16 %v1170, %v1166
          %v1299 = vpack.c.bf16 %v1180, %v1176
          %v1300 = vpack.c.bf16 %v1190, %v1186
          %v1301 = vpack.c.bf16 %v1200, %v1196
          %v1302 = vpack.c.bf16 %v1210, %v1206
          %v1303 = vpack.c.bf16 %v1220, %v1216
          %v1304 = vpack.c.bf16 %v1230, %v1226
          %v1305 = vpack.c.bf16 %v1240, %v1236
          %v1306 = vpack.c.bf16 %v1250, %v1246
          %v1307 = vpack.c.bf16 %v1260, %v1256
          %v1308 = vpack.c.bf16 %v1270, %v1266
          %v1309 = vpack.c.bf16 %v1280, %v1276
          %v1310 = vpack.c.bf16 %v1290, %v1286
          %v1327 = vunpack.c.l.b16 %v1295
          %v1328 = vunpack.c.h.b16 %v1295
          %v1329 = vunpack.c.l.b16 %v1296
          %v1330 = vunpack.c.h.b16 %v1296
          %v1331 = vunpack.c.l.b16 %v1297
          %v1332 = vunpack.c.h.b16 %v1297
          %v1333 = vunpack.c.l.b16 %v1298
          %v1334 = vunpack.c.h.b16 %v1298
          %v1335 = vunpack.c.l.b16 %v1299
          %v1336 = vunpack.c.h.b16 %v1299
          %v1337 = vunpack.c.l.b16 %v1300
          %v1338 = vunpack.c.h.b16 %v1300
          %v1339 = vunpack.c.l.b16 %v1301
          %v1340 = vunpack.c.h.b16 %v1301
          %v1341 = vunpack.c.l.b16 %v1302
          %v1342 = vunpack.c.h.b16 %v1302
          %v1343 = vunpack.c.l.b16 %v1303
          %v1344 = vunpack.c.h.b16 %v1303
          %v1345 = vunpack.c.l.b16 %v1304
          %v1346 = vunpack.c.h.b16 %v1304
          %v1347 = vunpack.c.l.b16 %v1305
          %v1348 = vunpack.c.h.b16 %v1305
          %v1349 = vunpack.c.l.b16 %v1306
          %v1350 = vunpack.c.h.b16 %v1306
          %v1351 = vunpack.c.l.b16 %v1307
          %v1352 = vunpack.c.h.b16 %v1307
          %v1353 = vunpack.c.l.b16 %v1308
          %v1354 = vunpack.c.h.b16 %v1308
          %v1355 = vunpack.c.l.b16 %v1309
          %v1356 = vunpack.c.h.b16 %v1309
          %v1357 = vunpack.c.l.b16 %v1310
          %v1358 = vunpack.c.h.b16 %v1310
          %v1359 = vpack.c.b16 %v1327, %v1327
          %v1360 = vpack.c.b16 %v1328, %v1328
          %v1361 = vpack.c.b16 %v1329, %v1329
          %v1362 = vpack.c.b16 %v1330, %v1330
          %v1363 = vpack.c.b16 %v1331, %v1331
          %v1364 = vpack.c.b16 %v1332, %v1332
          %v1365 = vpack.c.b16 %v1333, %v1333
          %v1366 = vpack.c.b16 %v1334, %v1334
          %v1367 = vpack.c.b16 %v1335, %v1335
          %v1368 = vpack.c.b16 %v1336, %v1336
          %v1369 = vpack.c.b16 %v1337, %v1337
          %v1370 = vpack.c.b16 %v1338, %v1338
          %v1371 = vpack.c.b16 %v1339, %v1339
          %v1372 = vpack.c.b16 %v1340, %v1340
          %v1373 = vpack.c.b16 %v1341, %v1341
          %v1374 = vpack.c.b16 %v1342, %v1342
          %v1375 = vpack.c.b16 %v1343, %v1343
          %v1376 = vpack.c.b16 %v1344, %v1344
          %v1377 = vpack.c.b16 %v1345, %v1345
          %v1378 = vpack.c.b16 %v1346, %v1346
          %v1379 = vpack.c.b16 %v1347, %v1347
          %v1380 = vpack.c.b16 %v1348, %v1348
          %v1381 = vpack.c.b16 %v1349, %v1349
          %v1382 = vpack.c.b16 %v1350, %v1350
          %v1383 = vpack.c.b16 %v1351, %v1351
          %v1384 = vpack.c.b16 %v1352, %v1352
          %v1385 = vpack.c.b16 %v1353, %v1353
          %v1386 = vpack.c.b16 %v1354, %v1354
          %v1387 = vpack.c.b16 %v1355, %v1355
          %v1388 = vpack.c.b16 %v1356, %v1356
          %v1389 = vpack.c.b16 %v1357, %v1357
          %v1390 = vpack.c.b16 %v1358, %v1358
          %s1423 = sshra.s32 %s1294, 3
          %s1424 = sand.u32 %s1294, 7
          %s1425 = smul.addr %s1423, 4
          %s1426 = scalar_lea.vmem [#allocation6], %s1425
          %1427 = vst [vmem:[%s1426] sm:$0xf] %v1359
          %1428 = vst [vmem:[%s1426 + $0x4] sm:$0xf] %v1360
          %1429 = vst [vmem:[%s1426 + $0x8] sm:$0xf] %v1361
          %1430 = vst [vmem:[%s1426 + $0xc] sm:$0xf] %v1362
          %1431 = vst [vmem:[%s1426 + $0x10] sm:$0xf] %v1363
          %1432 = vst [vmem:[%s1426 + $0x14] sm:$0xf] %v1364
          %1433 = vst [vmem:[%s1426 + $0x18] sm:$0xf] %v1365
          %1434 = vst [vmem:[%s1426 + $0x1c] sm:$0xf] %v1366
          %1435 = vst [vmem:[%s1426 + $0x20] sm:$0xf] %v1367
          %1436 = vst [vmem:[%s1426 + $0x24] sm:$0xf] %v1368
          %1437 = vst [vmem:[%s1426 + $0x28] sm:$0xf] %v1369
          %1438 = vst [vmem:[%s1426 + $0x2c] sm:$0xf] %v1370
          %1439 = vst [vmem:[%s1426 + $0x30] sm:$0xf] %v1371
          %1440 = vst [vmem:[%s1426 + $0x34] sm:$0xf] %v1372
          %1441 = vst [vmem:[%s1426 + $0x38] sm:$0xf] %v1373
          %1442 = vst [vmem:[%s1426 + $0x3c] sm:$0xf] %v1374
          %1443 = vst [vmem:[%s1426 + $0x40] sm:$0xf] %v1375
          %1444 = vst [vmem:[%s1426 + $0x44] sm:$0xf] %v1376
          %1445 = vst [vmem:[%s1426 + $0x48] sm:$0xf] %v1377
          %1446 = vst [vmem:[%s1426 + $0x4c] sm:$0xf] %v1378
          %1447 = vst [vmem:[%s1426 + $0x50] sm:$0xf] %v1379
          %1448 = vst [vmem:[%s1426 + $0x54] sm:$0xf] %v1380
          %1449 = vst [vmem:[%s1426 + $0x58] sm:$0xf] %v1381
          %1450 = vst [vmem:[%s1426 + $0x5c] sm:$0xf] %v1382
          %1451 = vst [vmem:[%s1426 + $0x60] sm:$0xf] %v1383
          %1452 = vst [vmem:[%s1426 + $0x64] sm:$0xf] %v1384
          %1453 = vst [vmem:[%s1426 + $0x68] sm:$0xf] %v1385
          %1454 = vst [vmem:[%s1426 + $0x6c] sm:$0xf] %v1386
          %1455 = vst [vmem:[%s1426 + $0x70] sm:$0xf] %v1387
          %1456 = vst [vmem:[%s1426 + $0x74] sm:$0xf] %v1388
          %1457 = vst [vmem:[%s1426 + $0x78] sm:$0xf] %v1389
          %1458 = vst [vmem:[%s1426 + $0x7c] sm:$0xf] %v1390
          %v1459 = vpack.c.bf16 %v1142, %v1138
          %v1460 = vpack.c.bf16 %v1152, %v1148
          %v1461 = vpack.c.bf16 %v1162, %v1158
          %v1462 = vpack.c.bf16 %v1172, %v1168
          %v1463 = vpack.c.bf16 %v1182, %v1178
          %v1464 = vpack.c.bf16 %v1192, %v1188
          %v1465 = vpack.c.bf16 %v1202, %v1198
          %v1466 = vpack.c.bf16 %v1212, %v1208
          %v1467 = vpack.c.bf16 %v1222, %v1218
          %v1468 = vpack.c.bf16 %v1232, %v1228
          %v1469 = vpack.c.bf16 %v1242, %v1238
          %v1470 = vpack.c.bf16 %v1252, %v1248
          %v1471 = vpack.c.bf16 %v1262, %v1258
          %v1472 = vpack.c.bf16 %v1272, %v1268
          %v1473 = vpack.c.bf16 %v1282, %v1278
          %v1474 = vpack.c.bf16 %v1292, %v1288
          %v1491 = vunpack.c.l.b16 %v1459
          %v1492 = vunpack.c.h.b16 %v1459
          %v1493 = vunpack.c.l.b16 %v1460
          %v1494 = vunpack.c.h.b16 %v1460
          %v1495 = vunpack.c.l.b16 %v1461
          %v1496 = vunpack.c.h.b16 %v1461
          %v1497 = vunpack.c.l.b16 %v1462
          %v1498 = vunpack.c.h.b16 %v1462
          %v1499 = vunpack.c.l.b16 %v1463
          %v1500 = vunpack.c.h.b16 %v1463
          %v1501 = vunpack.c.l.b16 %v1464
          %v1502 = vunpack.c.h.b16 %v1464
          %v1503 = vunpack.c.l.b16 %v1465
          %v1504 = vunpack.c.h.b16 %v1465
          %v1505 = vunpack.c.l.b16 %v1466
          %v1506 = vunpack.c.h.b16 %v1466
          %v1507 = vunpack.c.l.b16 %v1467
          %v1508 = vunpack.c.h.b16 %v1467
          %v1509 = vunpack.c.l.b16 %v1468
          %v1510 = vunpack.c.h.b16 %v1468
          %v1511 = vunpack.c.l.b16 %v1469
          %v1512 = vunpack.c.h.b16 %v1469
          %v1513 = vunpack.c.l.b16 %v1470
          %v1514 = vunpack.c.h.b16 %v1470
          %v1515 = vunpack.c.l.b16 %v1471
          %v1516 = vunpack.c.h.b16 %v1471
          %v1517 = vunpack.c.l.b16 %v1472
          %v1518 = vunpack.c.h.b16 %v1472
          %v1519 = vunpack.c.l.b16 %v1473
          %v1520 = vunpack.c.h.b16 %v1473
          %v1521 = vunpack.c.l.b16 %v1474
          %v1522 = vunpack.c.h.b16 %v1474
          %v1523 = vpack.c.b16 %v1491, %v1491
          %v1524 = vpack.c.b16 %v1492, %v1492
          %v1525 = vpack.c.b16 %v1493, %v1493
          %v1526 = vpack.c.b16 %v1494, %v1494
          %v1527 = vpack.c.b16 %v1495, %v1495
          %v1528 = vpack.c.b16 %v1496, %v1496
          %v1529 = vpack.c.b16 %v1497, %v1497
          %v1530 = vpack.c.b16 %v1498, %v1498
          %v1531 = vpack.c.b16 %v1499, %v1499
          %v1532 = vpack.c.b16 %v1500, %v1500
          %v1533 = vpack.c.b16 %v1501, %v1501
          %v1534 = vpack.c.b16 %v1502, %v1502
          %v1535 = vpack.c.b16 %v1503, %v1503
          %v1536 = vpack.c.b16 %v1504, %v1504
          %v1537 = vpack.c.b16 %v1505, %v1505
          %v1538 = vpack.c.b16 %v1506, %v1506
          %v1539 = vpack.c.b16 %v1507, %v1507
          %v1540 = vpack.c.b16 %v1508, %v1508
          %v1541 = vpack.c.b16 %v1509, %v1509
          %v1542 = vpack.c.b16 %v1510, %v1510
          %v1543 = vpack.c.b16 %v1511, %v1511
          %v1544 = vpack.c.b16 %v1512, %v1512
          %v1545 = vpack.c.b16 %v1513, %v1513
          %v1546 = vpack.c.b16 %v1514, %v1514
          %v1547 = vpack.c.b16 %v1515, %v1515
          %v1548 = vpack.c.b16 %v1516, %v1516
          %v1549 = vpack.c.b16 %v1517, %v1517
          %v1550 = vpack.c.b16 %v1518, %v1518
          %v1551 = vpack.c.b16 %v1519, %v1519
          %v1552 = vpack.c.b16 %v1520, %v1520
          %v1553 = vpack.c.b16 %v1521, %v1521
          %v1554 = vpack.c.b16 %v1522, %v1522
          %s1587 = smul.addr %s1423, 4
          %s1588 = scalar_lea.vmem [#allocation7], %s1587
          %1589 = vst [vmem:[%s1588] sm:$0xf] %v1523
          %1590 = vst [vmem:[%s1588 + $0x4] sm:$0xf] %v1524
          %1591 = vst [vmem:[%s1588 + $0x8] sm:$0xf] %v1525
          %1592 = vst [vmem:[%s1588 + $0xc] sm:$0xf] %v1526
          %1593 = vst [vmem:[%s1588 + $0x10] sm:$0xf] %v1527
          %1594 = vst [vmem:[%s1588 + $0x14] sm:$0xf] %v1528
          %1595 = vst [vmem:[%s1588 + $0x18] sm:$0xf] %v1529
          %1596 = vst [vmem:[%s1588 + $0x1c] sm:$0xf] %v1530
          %1597 = vst [vmem:[%s1588 + $0x20] sm:$0xf] %v1531
          %1598 = vst [vmem:[%s1588 + $0x24] sm:$0xf] %v1532
          %1599 = vst [vmem:[%s1588 + $0x28] sm:$0xf] %v1533
          %1600 = vst [vmem:[%s1588 + $0x2c] sm:$0xf] %v1534
          %1601 = vst [vmem:[%s1588 + $0x30] sm:$0xf] %v1535
          %1602 = vst [vmem:[%s1588 + $0x34] sm:$0xf] %v1536
          %1603 = vst [vmem:[%s1588 + $0x38] sm:$0xf] %v1537
          %1604 = vst [vmem:[%s1588 + $0x3c] sm:$0xf] %v1538
          %1605 = vst [vmem:[%s1588 + $0x40] sm:$0xf] %v1539
          %1606 = vst [vmem:[%s1588 + $0x44] sm:$0xf] %v1540
          %1607 = vst [vmem:[%s1588 + $0x48] sm:$0xf] %v1541
          %1608 = vst [vmem:[%s1588 + $0x4c] sm:$0xf] %v1542
          %1609 = vst [vmem:[%s1588 + $0x50] sm:$0xf] %v1543
          %1610 = vst [vmem:[%s1588 + $0x54] sm:$0xf] %v1544
          %1611 = vst [vmem:[%s1588 + $0x58] sm:$0xf] %v1545
          %1612 = vst [vmem:[%s1588 + $0x5c] sm:$0xf] %v1546
          %1613 = vst [vmem:[%s1588 + $0x60] sm:$0xf] %v1547
          %1614 = vst [vmem:[%s1588 + $0x64] sm:$0xf] %v1548
          %1615 = vst [vmem:[%s1588 + $0x68] sm:$0xf] %v1549
          %1616 = vst [vmem:[%s1588 + $0x6c] sm:$0xf] %v1550
          %1617 = vst [vmem:[%s1588 + $0x70] sm:$0xf] %v1551
          %1618 = vst [vmem:[%s1588 + $0x74] sm:$0xf] %v1552
          %1619 = vst [vmem:[%s1588 + $0x78] sm:$0xf] %v1553
          %1620 = vst [vmem:[%s1588 + $0x7c] sm:$0xf] %v1554
        $region68: #{tpu_custom_call.1} parent=43 // pred_fallthru
          _
        %s1621 = smul.u32 %s34, 256
        %s1622 = sshra.s32 %s1621, 3
        %s1623 = sand.u32 %s1621, 7
        %s1624 = smul.addr %s1622, 4
        %s1625 = scalar_lea.vmem [#allocation6], %s1624
        %v1626 = vld [vmem:[%s1625] sm:$0xf]
        %v1627 = vld [vmem:[%s1625 + $0x4] sm:$0xf]
        %v1628 = vld [vmem:[%s1625 + $0x8] sm:$0xf]
        %v1629 = vld [vmem:[%s1625 + $0xc] sm:$0xf]
        %v1630 = vld [vmem:[%s1625 + $0x10] sm:$0xf]
        %v1631 = vld [vmem:[%s1625 + $0x14] sm:$0xf]
        %v1632 = vld [vmem:[%s1625 + $0x18] sm:$0xf]
        %v1633 = vld [vmem:[%s1625 + $0x1c] sm:$0xf]
        %v1634 = vld [vmem:[%s1625 + $0x20] sm:$0xf]
        %v1635 = vld [vmem:[%s1625 + $0x24] sm:$0xf]
        %v1636 = vld [vmem:[%s1625 + $0x28] sm:$0xf]
        %v1637 = vld [vmem:[%s1625 + $0x2c] sm:$0xf]
        %v1638 = vld [vmem:[%s1625 + $0x30] sm:$0xf]
        %v1639 = vld [vmem:[%s1625 + $0x34] sm:$0xf]
        %v1640 = vld [vmem:[%s1625 + $0x38] sm:$0xf]
        %v1641 = vld [vmem:[%s1625 + $0x3c] sm:$0xf]
        %v1642 = vld [vmem:[%s1625 + $0x40] sm:$0xf]
        %v1643 = vld [vmem:[%s1625 + $0x44] sm:$0xf]
        %v1644 = vld [vmem:[%s1625 + $0x48] sm:$0xf]
        %v1645 = vld [vmem:[%s1625 + $0x4c] sm:$0xf]
        %v1646 = vld [vmem:[%s1625 + $0x50] sm:$0xf]
        %v1647 = vld [vmem:[%s1625 + $0x54] sm:$0xf]
        %v1648 = vld [vmem:[%s1625 + $0x58] sm:$0xf]
        %v1649 = vld [vmem:[%s1625 + $0x5c] sm:$0xf]
        %v1650 = vld [vmem:[%s1625 + $0x60] sm:$0xf]
        %v1651 = vld [vmem:[%s1625 + $0x64] sm:$0xf]
        %v1652 = vld [vmem:[%s1625 + $0x68] sm:$0xf]
        %v1653 = vld [vmem:[%s1625 + $0x6c] sm:$0xf]
        %v1654 = vld [vmem:[%s1625 + $0x70] sm:$0xf]
        %v1655 = vld [vmem:[%s1625 + $0x74] sm:$0xf]
        %v1656 = vld [vmem:[%s1625 + $0x78] sm:$0xf]
        %v1657 = vld [vmem:[%s1625 + $0x7c] sm:$0xf]
        %s1658 = smul.addr %s1622, 4
        %s1659 = scalar_lea.vmem [#allocation7], %s1658
        %v1660 = vld [vmem:[%s1659] sm:$0xf]
        %v1661 = vld [vmem:[%s1659 + $0x4] sm:$0xf]
        %v1662 = vld [vmem:[%s1659 + $0x8] sm:$0xf]
        %v1663 = vld [vmem:[%s1659 + $0xc] sm:$0xf]
        %v1664 = vld [vmem:[%s1659 + $0x10] sm:$0xf]
        %v1665 = vld [vmem:[%s1659 + $0x14] sm:$0xf]
        %v1666 = vld [vmem:[%s1659 + $0x18] sm:$0xf]
        %v1667 = vld [vmem:[%s1659 + $0x1c] sm:$0xf]
        %v1668 = vld [vmem:[%s1659 + $0x20] sm:$0xf]
        %v1669 = vld [vmem:[%s1659 + $0x24] sm:$0xf]
        %v1670 = vld [vmem:[%s1659 + $0x28] sm:$0xf]
        %v1671 = vld [vmem:[%s1659 + $0x2c] sm:$0xf]
        %v1672 = vld [vmem:[%s1659 + $0x30] sm:$0xf]
        %v1673 = vld [vmem:[%s1659 + $0x34] sm:$0xf]
        %v1674 = vld [vmem:[%s1659 + $0x38] sm:$0xf]
        %v1675 = vld [vmem:[%s1659 + $0x3c] sm:$0xf]
        %v1676 = vld [vmem:[%s1659 + $0x40] sm:$0xf]
        %v1677 = vld [vmem:[%s1659 + $0x44] sm:$0xf]
        %v1678 = vld [vmem:[%s1659 + $0x48] sm:$0xf]
        %v1679 = vld [vmem:[%s1659 + $0x4c] sm:$0xf]
        %v1680 = vld [vmem:[%s1659 + $0x50] sm:$0xf]
        %v1681 = vld [vmem:[%s1659 + $0x54] sm:$0xf]
        %v1682 = vld [vmem:[%s1659 + $0x58] sm:$0xf]
        %v1683 = vld [vmem:[%s1659 + $0x5c] sm:$0xf]
        %v1684 = vld [vmem:[%s1659 + $0x60] sm:$0xf]
        %v1685 = vld [vmem:[%s1659 + $0x64] sm:$0xf]
        %v1686 = vld [vmem:[%s1659 + $0x68] sm:$0xf]
        %v1687 = vld [vmem:[%s1659 + $0x6c] sm:$0xf]
        %v1688 = vld [vmem:[%s1659 + $0x70] sm:$0xf]
        %v1689 = vld [vmem:[%s1659 + $0x74] sm:$0xf]
        %v1690 = vld [vmem:[%s1659 + $0x78] sm:$0xf]
        %v1691 = vld [vmem:[%s1659 + $0x7c] sm:$0xf]
        %v1692 = vld [vmem:[#allocation2] sm:$0xf]
        %v1693 = vld [vmem:[#allocation2 + $0x4] sm:$0xf]
        %v1694 = vld [vmem:[#allocation2 + $0x8] sm:$0xf]
        %v1695 = vld [vmem:[#allocation2 + $0xc] sm:$0xf]
        %v1696 = vld [vmem:[#allocation2 + $0x10] sm:$0xf]
        %v1697 = vld [vmem:[#allocation2 + $0x14] sm:$0xf]
        %v1698 = vld [vmem:[#allocation2 + $0x18] sm:$0xf]
        %v1699 = vld [vmem:[#allocation2 + $0x1c] sm:$0xf]
        %v1700 = vld [vmem:[#allocation2 + $0x20] sm:$0xf]
        %v1701 = vld [vmem:[#allocation2 + $0x24] sm:$0xf]
        %v1702 = vld [vmem:[#allocation2 + $0x28] sm:$0xf]
        %v1703 = vld [vmem:[#allocation2 + $0x2c] sm:$0xf]
        %v1704 = vld [vmem:[#allocation2 + $0x30] sm:$0xf]
        %v1705 = vld [vmem:[#allocation2 + $0x34] sm:$0xf]
        %v1706 = vld [vmem:[#allocation2 + $0x38] sm:$0xf]
        %v1707 = vld [vmem:[#allocation2 + $0x3c] sm:$0xf]
        %v1708 = vld [vmem:[#allocation2 + $0x40] sm:$0xf]
        %v1709 = vld [vmem:[#allocation2 + $0x44] sm:$0xf]
        %v1710 = vld [vmem:[#allocation2 + $0x48] sm:$0xf]
        %v1711 = vld [vmem:[#allocation2 + $0x4c] sm:$0xf]
        %v1712 = vld [vmem:[#allocation2 + $0x50] sm:$0xf]
        %v1713 = vld [vmem:[#allocation2 + $0x54] sm:$0xf]
        %v1714 = vld [vmem:[#allocation2 + $0x58] sm:$0xf]
        %v1715 = vld [vmem:[#allocation2 + $0x5c] sm:$0xf]
        %v1716 = vld [vmem:[#allocation2 + $0x60] sm:$0xf]
        %v1717 = vld [vmem:[#allocation2 + $0x64] sm:$0xf]
        %v1718 = vld [vmem:[#allocation2 + $0x68] sm:$0xf]
        %v1719 = vld [vmem:[#allocation2 + $0x6c] sm:$0xf]
        %v1720 = vld [vmem:[#allocation2 + $0x70] sm:$0xf]
        %v1721 = vld [vmem:[#allocation2 + $0x74] sm:$0xf]
        %v1722 = vld [vmem:[#allocation2 + $0x78] sm:$0xf]
        %v1723 = vld [vmem:[#allocation2 + $0x7c] sm:$0xf]
        %v1756 = vunpack.c.l.b16 %v1692
        %v1757 = vunpack.c.l.b16 %v1693
        %v1758 = vunpack.c.l.b16 %v1694
        %v1759 = vunpack.c.l.b16 %v1695
        %v1760 = vunpack.c.l.b16 %v1696
        %v1761 = vunpack.c.l.b16 %v1697
        %v1762 = vunpack.c.l.b16 %v1698
        %v1763 = vunpack.c.l.b16 %v1699
        %v1764 = vunpack.c.l.b16 %v1700
        %v1765 = vunpack.c.l.b16 %v1701
        %v1766 = vunpack.c.l.b16 %v1702
        %v1767 = vunpack.c.l.b16 %v1703
        %v1768 = vunpack.c.l.b16 %v1704
        %v1769 = vunpack.c.l.b16 %v1705
        %v1770 = vunpack.c.l.b16 %v1706
        %v1771 = vunpack.c.l.b16 %v1707
        %v1772 = vunpack.c.l.b16 %v1708
        %v1773 = vunpack.c.l.b16 %v1709
        %v1774 = vunpack.c.l.b16 %v1710
        %v1775 = vunpack.c.l.b16 %v1711
        %v1776 = vunpack.c.l.b16 %v1712
        %v1777 = vunpack.c.l.b16 %v1713
        %v1778 = vunpack.c.l.b16 %v1714
        %v1779 = vunpack.c.l.b16 %v1715
        %v1780 = vunpack.c.l.b16 %v1716
        %v1781 = vunpack.c.l.b16 %v1717
        %v1782 = vunpack.c.l.b16 %v1718
        %v1783 = vunpack.c.l.b16 %v1719
        %v1784 = vunpack.c.l.b16 %v1720
        %v1785 = vunpack.c.l.b16 %v1721
        %v1786 = vunpack.c.l.b16 %v1722
        %v1787 = vunpack.c.l.b16 %v1723
        %v1788 = vpack.c.b16 %v1757, %v1756
        %v1789 = vpack.c.b16 %v1759, %v1758
        %v1790 = vpack.c.b16 %v1761, %v1760
        %v1791 = vpack.c.b16 %v1763, %v1762
        %v1792 = vpack.c.b16 %v1765, %v1764
        %v1793 = vpack.c.b16 %v1767, %v1766
        %v1794 = vpack.c.b16 %v1769, %v1768
        %v1795 = vpack.c.b16 %v1771, %v1770
        %v1796 = vpack.c.b16 %v1773, %v1772
        %v1797 = vpack.c.b16 %v1775, %v1774
        %v1798 = vpack.c.b16 %v1777, %v1776
        %v1799 = vpack.c.b16 %v1779, %v1778
        %v1800 = vpack.c.b16 %v1781, %v1780
        %v1801 = vpack.c.b16 %v1783, %v1782
        %v1802 = vpack.c.b16 %v1785, %v1784
        %v1803 = vpack.c.b16 %v1787, %v1786
        %v1852 = vunpack.c.l.b16 %v1626
        %v1853 = vunpack.c.l.b16 %v1627
        %v1854 = vunpack.c.l.b16 %v1628
        %v1855 = vunpack.c.l.b16 %v1629
        %v1856 = vunpack.c.l.b16 %v1630
        %v1857 = vunpack.c.l.b16 %v1631
        %v1858 = vunpack.c.l.b16 %v1632
        %v1859 = vunpack.c.l.b16 %v1633
        %v1860 = vunpack.c.l.b16 %v1634
        %v1861 = vunpack.c.l.b16 %v1635
        %v1862 = vunpack.c.l.b16 %v1636
        %v1863 = vunpack.c.l.b16 %v1637
        %v1864 = vunpack.c.l.b16 %v1638
        %v1865 = vunpack.c.l.b16 %v1639
        %v1866 = vunpack.c.l.b16 %v1640
        %v1867 = vunpack.c.l.b16 %v1641
        %v1868 = vunpack.c.l.b16 %v1642
        %v1869 = vunpack.c.l.b16 %v1643
        %v1870 = vunpack.c.l.b16 %v1644
        %v1871 = vunpack.c.l.b16 %v1645
        %v1872 = vunpack.c.l.b16 %v1646
        %v1873 = vunpack.c.l.b16 %v1647
        %v1874 = vunpack.c.l.b16 %v1648
        %v1875 = vunpack.c.l.b16 %v1649
        %v1876 = vunpack.c.l.b16 %v1650
        %v1877 = vunpack.c.l.b16 %v1651
        %v1878 = vunpack.c.l.b16 %v1652
        %v1879 = vunpack.c.l.b16 %v1653
        %v1880 = vunpack.c.l.b16 %v1654
        %v1881 = vunpack.c.l.b16 %v1655
        %v1882 = vunpack.c.l.b16 %v1656
        %v1883 = vunpack.c.l.b16 %v1657
        %v1884 = vpack.c.b16 %v1853, %v1852
        %v1885 = vpack.c.b16 %v1855, %v1854
        %v1886 = vpack.c.b16 %v1857, %v1856
        %v1887 = vpack.c.b16 %v1859, %v1858
        %v1888 = vpack.c.b16 %v1861, %v1860
        %v1889 = vpack.c.b16 %v1863, %v1862
        %v1890 = vpack.c.b16 %v1865, %v1864
        %v1891 = vpack.c.b16 %v1867, %v1866
        %v1892 = vpack.c.b16 %v1869, %v1868
        %v1893 = vpack.c.b16 %v1871, %v1870
        %v1894 = vpack.c.b16 %v1873, %v1872
        %v1895 = vpack.c.b16 %v1875, %v1874
        %v1896 = vpack.c.b16 %v1877, %v1876
        %v1897 = vpack.c.b16 %v1879, %v1878
        %v1898 = vpack.c.b16 %v1881, %v1880
        %v1899 = vpack.c.b16 %v1883, %v1882
        %1916 = vmatprep.subr.bf16.mxu0 0
        %1917 = vmatpush1.bf16.xpose.msra.mxu0 %v1891
        %1918 = vmatprep.subr.bf16.mxu0 0
        %1919 = vmatpush1.bf16.xpose.msra.mxu0 %v1890
        %1920 = vmatprep.subr.bf16.mxu0 0
        %1921 = vmatpush1.bf16.xpose.msra.mxu0 %v1889
        %1922 = vmatprep.subr.bf16.mxu0 0
        %1923 = vmatpush1.bf16.xpose.msra.mxu0 %v1888
        %1924 = vmatprep.subr.bf16.mxu0 0
        %1925 = vmatpush1.bf16.xpose.msra.mxu0 %v1887
        %1926 = vmatprep.subr.bf16.mxu0 0
        %1927 = vmatpush1.bf16.xpose.msra.mxu0 %v1886
        %1928 = vmatprep.subr.bf16.mxu0 0
        %1929 = vmatpush1.bf16.xpose.msra.mxu0 %v1885
        %1930 = vmatprep.subr.bf16.mxu0 0
        %1931 = vmatpush1.bf16.xpose.msra.mxu0 %v1884
        %1932 = vmatprep.subr.bf16.mxu0 0
        %1933 = vmatpush2.bf16.xpose.msra.mxu0 %v1899
        %1934 = vmatprep.subr.bf16.mxu0 0
        %1935 = vmatpush2.bf16.xpose.msra.mxu0 %v1898
        %1936 = vmatprep.subr.bf16.mxu0 0
        %1937 = vmatpush2.bf16.xpose.msra.mxu0 %v1897
        %1938 = vmatprep.subr.bf16.mxu0 0
        %1939 = vmatpush2.bf16.xpose.msra.mxu0 %v1896
        %1940 = vmatprep.subr.bf16.mxu0 0
        %1941 = vmatpush2.bf16.xpose.msra.mxu0 %v1895
        %1942 = vmatprep.subr.bf16.mxu0 0
        %1943 = vmatpush2.bf16.xpose.msra.mxu0 %v1894
        %1944 = vmatprep.subr.bf16.mxu0 0
        %1945 = vmatpush2.bf16.xpose.msra.mxu0 %v1893
        %1946 = vmatprep.subr.bf16.mxu0 0
        %1947 = vmatpush2.bf16.xpose.msra.mxu0 %v1892
        %1948 = vmatprep.mubr.bf16.mxu0 0
        %1949 = vmatmul.mubr.bf16.gmra.mxu0 %v1788
        %v1950 = vpop.f32.mrf.mxu0
        %v1951 = vadd.f32 0.0, %v1950
        %v1952 = vpop.f32.mrf.mxu0
        %v1953 = vadd.f32 0.0, %v1952
        %v1954 = vpop.f32.mrf.mxu0
        %v1955 = vadd.f32 0.0, %v1954
        %v1956 = vpop.f32.mrf.mxu0
        %v1957 = vadd.f32 0.0, %v1956
        %1958 = vmatprep.mubr.bf16.mxu0 0
        %1959 = vmatmul.mubr.bf16.gmra.mxu0 %v1789
        %v1960 = vpop.f32.mrf.mxu0
        %v1961 = vadd.f32 0.0, %v1960
        %v1962 = vpop.f32.mrf.mxu0
        %v1963 = vadd.f32 0.0, %v1962
        %v1964 = vpop.f32.mrf.mxu0
        %v1965 = vadd.f32 0.0, %v1964
        %v1966 = vpop.f32.mrf.mxu0
        %v1967 = vadd.f32 0.0, %v1966
        %1968 = vmatprep.mubr.bf16.mxu0 0
        %1969 = vmatmul.mubr.bf16.gmra.mxu0 %v1790
        %v1970 = vpop.f32.mrf.mxu0
        %v1971 = vadd.f32 0.0, %v1970
        %v1972 = vpop.f32.mrf.mxu0
        %v1973 = vadd.f32 0.0, %v1972
        %v1974 = vpop.f32.mrf.mxu0
        %v1975 = vadd.f32 0.0, %v1974
        %v1976 = vpop.f32.mrf.mxu0
        %v1977 = vadd.f32 0.0, %v1976
        %1978 = vmatprep.mubr.bf16.mxu0 0
        %1979 = vmatmul.mubr.bf16.gmra.mxu0 %v1791
        %v1980 = vpop.f32.mrf.mxu0
        %v1981 = vadd.f32 0.0, %v1980
        %v1982 = vpop.f32.mrf.mxu0
        %v1983 = vadd.f32 0.0, %v1982
        %v1984 = vpop.f32.mrf.mxu0
        %v1985 = vadd.f32 0.0, %v1984
        %v1986 = vpop.f32.mrf.mxu0
        %v1987 = vadd.f32 0.0, %v1986
        %1988 = vmatprep.mubr.bf16.mxu0 0
        %1989 = vmatmul.mubr.bf16.gmra.mxu0 %v1792
        %v1990 = vpop.f32.mrf.mxu0
        %v1991 = vadd.f32 0.0, %v1990
        %v1992 = vpop.f32.mrf.mxu0
        %v1993 = vadd.f32 0.0, %v1992
        %v1994 = vpop.f32.mrf.mxu0
        %v1995 = vadd.f32 0.0, %v1994
        %v1996 = vpop.f32.mrf.mxu0
        %v1997 = vadd.f32 0.0, %v1996
        %1998 = vmatprep.mubr.bf16.mxu0 0
        %1999 = vmatmul.mubr.bf16.gmra.mxu0 %v1793
        %v2000 = vpop.f32.mrf.mxu0
        %v2001 = vadd.f32 0.0, %v2000
        %v2002 = vpop.f32.mrf.mxu0
        %v2003 = vadd.f32 0.0, %v2002
        %v2004 = vpop.f32.mrf.mxu0
        %v2005 = vadd.f32 0.0, %v2004
        %v2006 = vpop.f32.mrf.mxu0
        %v2007 = vadd.f32 0.0, %v2006
        %2008 = vmatprep.mubr.bf16.mxu0 0
        %2009 = vmatmul.mubr.bf16.gmra.mxu0 %v1794
        %v2010 = vpop.f32.mrf.mxu0
        %v2011 = vadd.f32 0.0, %v2010
        %v2012 = vpop.f32.mrf.mxu0
        %v2013 = vadd.f32 0.0, %v2012
        %v2014 = vpop.f32.mrf.mxu0
        %v2015 = vadd.f32 0.0, %v2014
        %v2016 = vpop.f32.mrf.mxu0
        %v2017 = vadd.f32 0.0, %v2016
        %2018 = vmatprep.mubr.bf16.mxu0 0
        %2019 = vmatmul.mubr.bf16.gmra.mxu0 %v1795
        %v2020 = vpop.f32.mrf.mxu0
        %v2021 = vadd.f32 0.0, %v2020
        %v2022 = vpop.f32.mrf.mxu0
        %v2023 = vadd.f32 0.0, %v2022
        %v2024 = vpop.f32.mrf.mxu0
        %v2025 = vadd.f32 0.0, %v2024
        %v2026 = vpop.f32.mrf.mxu0
        %v2027 = vadd.f32 0.0, %v2026
        %2028 = vmatprep.mubr.bf16.mxu0 0
        %2029 = vmatmul.mubr.bf16.gmra.mxu0 %v1796
        %v2030 = vpop.f32.mrf.mxu0
        %v2031 = vadd.f32 0.0, %v2030
        %v2032 = vpop.f32.mrf.mxu0
        %v2033 = vadd.f32 0.0, %v2032
        %v2034 = vpop.f32.mrf.mxu0
        %v2035 = vadd.f32 0.0, %v2034
        %v2036 = vpop.f32.mrf.mxu0
        %v2037 = vadd.f32 0.0, %v2036
        %2038 = vmatprep.mubr.bf16.mxu0 0
        %2039 = vmatmul.mubr.bf16.gmra.mxu0 %v1797
        %v2040 = vpop.f32.mrf.mxu0
        %v2041 = vadd.f32 0.0, %v2040
        %v2042 = vpop.f32.mrf.mxu0
        %v2043 = vadd.f32 0.0, %v2042
        %v2044 = vpop.f32.mrf.mxu0
        %v2045 = vadd.f32 0.0, %v2044
        %v2046 = vpop.f32.mrf.mxu0
        %v2047 = vadd.f32 0.0, %v2046
        %2048 = vmatprep.mubr.bf16.mxu0 0
        %2049 = vmatmul.mubr.bf16.gmra.mxu0 %v1798
        %v2050 = vpop.f32.mrf.mxu0
        %v2051 = vadd.f32 0.0, %v2050
        %v2052 = vpop.f32.mrf.mxu0
        %v2053 = vadd.f32 0.0, %v2052
        %v2054 = vpop.f32.mrf.mxu0
        %v2055 = vadd.f32 0.0, %v2054
        %v2056 = vpop.f32.mrf.mxu0
        %v2057 = vadd.f32 0.0, %v2056
        %2058 = vmatprep.mubr.bf16.mxu0 0
        %2059 = vmatmul.mubr.bf16.gmra.mxu0 %v1799
        %v2060 = vpop.f32.mrf.mxu0
        %v2061 = vadd.f32 0.0, %v2060
        %v2062 = vpop.f32.mrf.mxu0
        %v2063 = vadd.f32 0.0, %v2062
        %v2064 = vpop.f32.mrf.mxu0
        %v2065 = vadd.f32 0.0, %v2064
        %v2066 = vpop.f32.mrf.mxu0
        %v2067 = vadd.f32 0.0, %v2066
        %2068 = vmatprep.mubr.bf16.mxu0 0
        %2069 = vmatmul.mubr.bf16.gmra.mxu0 %v1800
        %v2070 = vpop.f32.mrf.mxu0
        %v2071 = vadd.f32 0.0, %v2070
        %v2072 = vpop.f32.mrf.mxu0
        %v2073 = vadd.f32 0.0, %v2072
        %v2074 = vpop.f32.mrf.mxu0
        %v2075 = vadd.f32 0.0, %v2074
        %v2076 = vpop.f32.mrf.mxu0
        %v2077 = vadd.f32 0.0, %v2076
        %2078 = vmatprep.mubr.bf16.mxu0 0
        %2079 = vmatmul.mubr.bf16.gmra.mxu0 %v1801
        %v2080 = vpop.f32.mrf.mxu0
        %v2081 = vadd.f32 0.0, %v2080
        %v2082 = vpop.f32.mrf.mxu0
        %v2083 = vadd.f32 0.0, %v2082
        %v2084 = vpop.f32.mrf.mxu0
        %v2085 = vadd.f32 0.0, %v2084
        %v2086 = vpop.f32.mrf.mxu0
        %v2087 = vadd.f32 0.0, %v2086
        %2088 = vmatprep.mubr.bf16.mxu0 0
        %2089 = vmatmul.mubr.bf16.gmra.mxu0 %v1802
        %v2090 = vpop.f32.mrf.mxu0
        %v2091 = vadd.f32 0.0, %v2090
        %v2092 = vpop.f32.mrf.mxu0
        %v2093 = vadd.f32 0.0, %v2092
        %v2094 = vpop.f32.mrf.mxu0
        %v2095 = vadd.f32 0.0, %v2094
        %v2096 = vpop.f32.mrf.mxu0
        %v2097 = vadd.f32 0.0, %v2096
        %2098 = vmatprep.mubr.bf16.mxu0 0
        %2099 = vmatmul.mubr.bf16.gmra.mxu0 %v1803
        %v2100 = vpop.f32.mrf.mxu0
        %v2101 = vadd.f32 0.0, %v2100
        %v2102 = vpop.f32.mrf.mxu0
        %v2103 = vadd.f32 0.0, %v2102
        %v2104 = vpop.f32.mrf.mxu0
        %v2105 = vadd.f32 0.0, %v2104
        %v2106 = vpop.f32.mrf.mxu0
        %v2107 = vadd.f32 0.0, %v2106
        %2108 = vdwg.mxu0
        %v2109 = vld [vmem:[#allocation3] sm:$0xff]
        %v2110 = vld [vmem:[#allocation3 + $0x8] sm:$0xff]
        %v2111 = vld [vmem:[#allocation3 + $0x10] sm:$0xff]
        %v2112 = vld [vmem:[#allocation3 + $0x18] sm:$0xff]
        %v2113 = vld [vmem:[#allocation3 + $0x20] sm:$0xff]
        %v2114 = vld [vmem:[#allocation3 + $0x28] sm:$0xff]
        %v2115 = vld [vmem:[#allocation3 + $0x30] sm:$0xff]
        %v2116 = vld [vmem:[#allocation3 + $0x38] sm:$0xff]
        %v2117 = vld [vmem:[#allocation3 + $0x40] sm:$0xff]
        %v2118 = vld [vmem:[#allocation3 + $0x48] sm:$0xff]
        %v2119 = vld [vmem:[#allocation3 + $0x50] sm:$0xff]
        %v2120 = vld [vmem:[#allocation3 + $0x58] sm:$0xff]
        %v2121 = vld [vmem:[#allocation3 + $0x60] sm:$0xff]
        %v2122 = vld [vmem:[#allocation3 + $0x68] sm:$0xff]
        %v2123 = vld [vmem:[#allocation3 + $0x70] sm:$0xff]
        %v2124 = vld [vmem:[#allocation3 + $0x78] sm:$0xff]
        %v2125 = vld [vmem:[#allocation3 + $0x80] sm:$0xff]
        %v2126 = vld [vmem:[#allocation3 + $0x88] sm:$0xff]
        %v2127 = vld [vmem:[#allocation3 + $0x90] sm:$0xff]
        %v2128 = vld [vmem:[#allocation3 + $0x98] sm:$0xff]
        %v2129 = vld [vmem:[#allocation3 + $0xa0] sm:$0xff]
        %v2130 = vld [vmem:[#allocation3 + $0xa8] sm:$0xff]
        %v2131 = vld [vmem:[#allocation3 + $0xb0] sm:$0xff]
        %v2132 = vld [vmem:[#allocation3 + $0xb8] sm:$0xff]
        %v2133 = vld [vmem:[#allocation3 + $0xc0] sm:$0xff]
        %v2134 = vld [vmem:[#allocation3 + $0xc8] sm:$0xff]
        %v2135 = vld [vmem:[#allocation3 + $0xd0] sm:$0xff]
        %v2136 = vld [vmem:[#allocation3 + $0xd8] sm:$0xff]
        %v2137 = vld [vmem:[#allocation3 + $0xe0] sm:$0xff]
        %v2138 = vld [vmem:[#allocation3 + $0xe8] sm:$0xff]
        %v2139 = vld [vmem:[#allocation3 + $0xf0] sm:$0xff]
        %v2140 = vld [vmem:[#allocation3 + $0xf8] sm:$0xff]
        %v2141 = vmax.f32 %v1951, %v1953
        %2142 = vmax.xlane.f32.xlu0 %v2141
        %v2143 = vpop.xlane.xlu0 %2142
        %v2144 = vmax.f32 %v1955, %v1957
        %2145 = vmax.xlane.f32.xlu0 %v2144
        %v2146 = vpop.xlane.xlu0 %2145
        %v2147 = vmax.f32 %v1961, %v1963
        %2148 = vmax.xlane.f32.xlu0 %v2147
        %v2149 = vpop.xlane.xlu0 %2148
        %v2150 = vmax.f32 %v1965, %v1967
        %2151 = vmax.xlane.f32.xlu0 %v2150
        %v2152 = vpop.xlane.xlu0 %2151
        %v2153 = vmax.f32 %v1971, %v1973
        %2154 = vmax.xlane.f32.xlu0 %v2153
        %v2155 = vpop.xlane.xlu0 %2154
        %v2156 = vmax.f32 %v1975, %v1977
        %2157 = vmax.xlane.f32.xlu0 %v2156
        %v2158 = vpop.xlane.xlu0 %2157
        %v2159 = vmax.f32 %v1981, %v1983
        %2160 = vmax.xlane.f32.xlu0 %v2159
        %v2161 = vpop.xlane.xlu0 %2160
        %v2162 = vmax.f32 %v1985, %v1987
        %2163 = vmax.xlane.f32.xlu0 %v2162
        %v2164 = vpop.xlane.xlu0 %2163
        %v2165 = vmax.f32 %v1991, %v1993
        %2166 = vmax.xlane.f32.xlu0 %v2165
        %v2167 = vpop.xlane.xlu0 %2166
        %v2168 = vmax.f32 %v1995, %v1997
        %2169 = vmax.xlane.f32.xlu0 %v2168
        %v2170 = vpop.xlane.xlu0 %2169
        %v2171 = vmax.f32 %v2001, %v2003
        %2172 = vmax.xlane.f32.xlu0 %v2171
        %v2173 = vpop.xlane.xlu0 %2172
        %v2174 = vmax.f32 %v2005, %v2007
        %2175 = vmax.xlane.f32.xlu0 %v2174
        %v2176 = vpop.xlane.xlu0 %2175
        %v2177 = vmax.f32 %v2011, %v2013
        %2178 = vmax.xlane.f32.xlu0 %v2177
        %v2179 = vpop.xlane.xlu0 %2178
        %v2180 = vmax.f32 %v2015, %v2017
        %2181 = vmax.xlane.f32.xlu0 %v2180
        %v2182 = vpop.xlane.xlu0 %2181
        %v2183 = vmax.f32 %v2021, %v2023
        %2184 = vmax.xlane.f32.xlu0 %v2183
        %v2185 = vpop.xlane.xlu0 %2184
        %v2186 = vmax.f32 %v2025, %v2027
        %2187 = vmax.xlane.f32.xlu0 %v2186
        %v2188 = vpop.xlane.xlu0 %2187
        %v2189 = vmax.f32 %v2031, %v2033
        %2190 = vmax.xlane.f32.xlu0 %v2189
        %v2191 = vpop.xlane.xlu0 %2190
        %v2192 = vmax.f32 %v2035, %v2037
        %2193 = vmax.xlane.f32.xlu0 %v2192
        %v2194 = vpop.xlane.xlu0 %2193
        %v2195 = vmax.f32 %v2041, %v2043
        %2196 = vmax.xlane.f32.xlu0 %v2195
        %v2197 = vpop.xlane.xlu0 %2196
        %v2198 = vmax.f32 %v2045, %v2047
        %2199 = vmax.xlane.f32.xlu0 %v2198
        %v2200 = vpop.xlane.xlu0 %2199
        %v2201 = vmax.f32 %v2051, %v2053
        %2202 = vmax.xlane.f32.xlu0 %v2201
        %v2203 = vpop.xlane.xlu0 %2202
        %v2204 = vmax.f32 %v2055, %v2057
        %2205 = vmax.xlane.f32.xlu0 %v2204
        %v2206 = vpop.xlane.xlu0 %2205
        %v2207 = vmax.f32 %v2061, %v2063
        %2208 = vmax.xlane.f32.xlu0 %v2207
        %v2209 = vpop.xlane.xlu0 %2208
        %v2210 = vmax.f32 %v2065, %v2067
        %2211 = vmax.xlane.f32.xlu0 %v2210
        %v2212 = vpop.xlane.xlu0 %2211
        %v2213 = vmax.f32 %v2071, %v2073
        %2214 = vmax.xlane.f32.xlu0 %v2213
        %v2215 = vpop.xlane.xlu0 %2214
        %v2216 = vmax.f32 %v2075, %v2077
        %2217 = vmax.xlane.f32.xlu0 %v2216
        %v2218 = vpop.xlane.xlu0 %2217
        %v2219 = vmax.f32 %v2081, %v2083
        %2220 = vmax.xlane.f32.xlu0 %v2219
        %v2221 = vpop.xlane.xlu0 %2220
        %v2222 = vmax.f32 %v2085, %v2087
        %2223 = vmax.xlane.f32.xlu0 %v2222
        %v2224 = vpop.xlane.xlu0 %2223
        %v2225 = vmax.f32 %v2091, %v2093
        %2226 = vmax.xlane.f32.xlu0 %v2225
        %v2227 = vpop.xlane.xlu0 %2226
        %v2228 = vmax.f32 %v2095, %v2097
        %2229 = vmax.xlane.f32.xlu0 %v2228
        %v2230 = vpop.xlane.xlu0 %2229
        %v2231 = vmax.f32 %v2101, %v2103
        %2232 = vmax.xlane.f32.xlu0 %v2231
        %v2233 = vpop.xlane.xlu0 %2232
        %v2234 = vmax.f32 %v2105, %v2107
        %2235 = vmax.xlane.f32.xlu0 %v2234
        %v2236 = vpop.xlane.xlu0 %2235
        %v2237 = vmax.f32 %v2109, %v2143
        %v2238 = vmax.f32 %v2110, %v2146
        %v2239 = vmax.f32 %v2111, %v2149
        %v2240 = vmax.f32 %v2112, %v2152
        %v2241 = vmax.f32 %v2113, %v2155
        %v2242 = vmax.f32 %v2114, %v2158
        %v2243 = vmax.f32 %v2115, %v2161
        %v2244 = vmax.f32 %v2116, %v2164
        %v2245 = vmax.f32 %v2117, %v2167
        %v2246 = vmax.f32 %v2118, %v2170
        %v2247 = vmax.f32 %v2119, %v2173
        %v2248 = vmax.f32 %v2120, %v2176
        %v2249 = vmax.f32 %v2121, %v2179
        %v2250 = vmax.f32 %v2122, %v2182
        %v2251 = vmax.f32 %v2123, %v2185
        %v2252 = vmax.f32 %v2124, %v2188
        %v2253 = vmax.f32 %v2125, %v2191
        %v2254 = vmax.f32 %v2126, %v2194
        %v2255 = vmax.f32 %v2127, %v2197
        %v2256 = vmax.f32 %v2128, %v2200
        %v2257 = vmax.f32 %v2129, %v2203
        %v2258 = vmax.f32 %v2130, %v2206
        %v2259 = vmax.f32 %v2131, %v2209
        %v2260 = vmax.f32 %v2132, %v2212
        %v2261 = vmax.f32 %v2133, %v2215
        %v2262 = vmax.f32 %v2134, %v2218
        %v2263 = vmax.f32 %v2135, %v2221
        %v2264 = vmax.f32 %v2136, %v2224
        %v2265 = vmax.f32 %v2137, %v2227
        %v2266 = vmax.f32 %v2138, %v2230
        %v2267 = vmax.f32 %v2139, %v2233
        %v2268 = vmax.f32 %v2140, %v2236
        %v2269 = vsub.f32 %v2109, %v2237
        %v2270 = vsub.f32 %v2110, %v2238
        %v2271 = vsub.f32 %v2111, %v2239
        %v2272 = vsub.f32 %v2112, %v2240
        %v2273 = vsub.f32 %v2113, %v2241
        %v2274 = vsub.f32 %v2114, %v2242
        %v2275 = vsub.f32 %v2115, %v2243
        %v2276 = vsub.f32 %v2116, %v2244
        %v2277 = vsub.f32 %v2117, %v2245
        %v2278 = vsub.f32 %v2118, %v2246
        %v2279 = vsub.f32 %v2119, %v2247
        %v2280 = vsub.f32 %v2120, %v2248
        %v2281 = vsub.f32 %v2121, %v2249
        %v2282 = vsub.f32 %v2122, %v2250
        %v2283 = vsub.f32 %v2123, %v2251
        %v2284 = vsub.f32 %v2124, %v2252
        %v2285 = vsub.f32 %v2125, %v2253
        %v2286 = vsub.f32 %v2126, %v2254
        %v2287 = vsub.f32 %v2127, %v2255
        %v2288 = vsub.f32 %v2128, %v2256
        %v2289 = vsub.f32 %v2129, %v2257
        %v2290 = vsub.f32 %v2130, %v2258
        %v2291 = vsub.f32 %v2131, %v2259
        %v2292 = vsub.f32 %v2132, %v2260
        %v2293 = vsub.f32 %v2133, %v2261
        %v2294 = vsub.f32 %v2134, %v2262
        %v2295 = vsub.f32 %v2135, %v2263
        %v2296 = vsub.f32 %v2136, %v2264
        %v2297 = vsub.f32 %v2137, %v2265
        %v2298 = vsub.f32 %v2138, %v2266
        %v2299 = vsub.f32 %v2139, %v2267
        %v2300 = vsub.f32 %v2140, %v2268
        %v2301 = vmul.f32 %v2269, 1.442695
        %v2302 = vpow.pop %v2301
        %v2303 = vmul.f32 %v2270, 1.442695
        %v2304 = vpow.pop %v2303
        %v2305 = vmul.f32 %v2271, 1.442695
        %v2306 = vpow.pop %v2305
        %v2307 = vmul.f32 %v2272, 1.442695
        %v2308 = vpow.pop %v2307
        %v2309 = vmul.f32 %v2273, 1.442695
        %v2310 = vpow.pop %v2309
        %v2311 = vmul.f32 %v2274, 1.442695
        %v2312 = vpow.pop %v2311
        %v2313 = vmul.f32 %v2275, 1.442695
        %v2314 = vpow.pop %v2313
        %v2315 = vmul.f32 %v2276, 1.442695
        %v2316 = vpow.pop %v2315
        %v2317 = vmul.f32 %v2277, 1.442695
        %v2318 = vpow.pop %v2317
        %v2319 = vmul.f32 %v2278, 1.442695
        %v2320 = vpow.pop %v2319
        %v2321 = vmul.f32 %v2279, 1.442695
        %v2322 = vpow.pop %v2321
        %v2323 = vmul.f32 %v2280, 1.442695
        %v2324 = vpow.pop %v2323
        %v2325 = vmul.f32 %v2281, 1.442695
        %v2326 = vpow.pop %v2325
        %v2327 = vmul.f32 %v2282, 1.442695
        %v2328 = vpow.pop %v2327
        %v2329 = vmul.f32 %v2283, 1.442695
        %v2330 = vpow.pop %v2329
        %v2331 = vmul.f32 %v2284, 1.442695
        %v2332 = vpow.pop %v2331
        %v2333 = vmul.f32 %v2285, 1.442695
        %v2334 = vpow.pop %v2333
        %v2335 = vmul.f32 %v2286, 1.442695
        %v2336 = vpow.pop %v2335
        %v2337 = vmul.f32 %v2287, 1.442695
        %v2338 = vpow.pop %v2337
        %v2339 = vmul.f32 %v2288, 1.442695
        %v2340 = vpow.pop %v2339
        %v2341 = vmul.f32 %v2289, 1.442695
        %v2342 = vpow.pop %v2341
        %v2343 = vmul.f32 %v2290, 1.442695
        %v2344 = vpow.pop %v2343
        %v2345 = vmul.f32 %v2291, 1.442695
        %v2346 = vpow.pop %v2345
        %v2347 = vmul.f32 %v2292, 1.442695
        %v2348 = vpow.pop %v2347
        %v2349 = vmul.f32 %v2293, 1.442695
        %v2350 = vpow.pop %v2349
        %v2351 = vmul.f32 %v2294, 1.442695
        %v2352 = vpow.pop %v2351
        %v2353 = vmul.f32 %v2295, 1.442695
        %v2354 = vpow.pop %v2353
        %v2355 = vmul.f32 %v2296, 1.442695
        %v2356 = vpow.pop %v2355
        %v2357 = vmul.f32 %v2297, 1.442695
        %v2358 = vpow.pop %v2357
        %v2359 = vmul.f32 %v2298, 1.442695
        %v2360 = vpow.pop %v2359
        %v2361 = vmul.f32 %v2299, 1.442695
        %v2362 = vpow.pop %v2361
        %v2363 = vmul.f32 %v2300, 1.442695
        %v2364 = vpow.pop %v2363
        %2366 = vset.pattern.permute.xlu0 0
        %2367 = vperm.xlu0 %2366, %v2237
        %v2368 = vpop.permute.xlu0 %2367
        %2371 = vset.pattern.permute.xlu0 0
        %2372 = vperm.xlu0 %2371, %v2238
        %v2373 = vpop.permute.xlu0 %2372
        %2376 = vset.pattern.permute.xlu0 0
        %2377 = vperm.xlu0 %2376, %v2239
        %v2378 = vpop.permute.xlu0 %2377
        %2381 = vset.pattern.permute.xlu0 0
        %2382 = vperm.xlu0 %2381, %v2240
        %v2383 = vpop.permute.xlu0 %2382
        %2386 = vset.pattern.permute.xlu0 0
        %2387 = vperm.xlu0 %2386, %v2241
        %v2388 = vpop.permute.xlu0 %2387
        %2391 = vset.pattern.permute.xlu0 0
        %2392 = vperm.xlu0 %2391, %v2242
        %v2393 = vpop.permute.xlu0 %2392
        %2396 = vset.pattern.permute.xlu0 0
        %2397 = vperm.xlu0 %2396, %v2243
        %v2398 = vpop.permute.xlu0 %2397
        %2401 = vset.pattern.permute.xlu0 0
        %2402 = vperm.xlu0 %2401, %v2244
        %v2403 = vpop.permute.xlu0 %2402
        %2406 = vset.pattern.permute.xlu0 0
        %2407 = vperm.xlu0 %2406, %v2245
        %v2408 = vpop.permute.xlu0 %2407
        %2411 = vset.pattern.permute.xlu0 0
        %2412 = vperm.xlu0 %2411, %v2246
        %v2413 = vpop.permute.xlu0 %2412
        %2416 = vset.pattern.permute.xlu0 0
        %2417 = vperm.xlu0 %2416, %v2247
        %v2418 = vpop.permute.xlu0 %2417
        %2421 = vset.pattern.permute.xlu0 0
        %2422 = vperm.xlu0 %2421, %v2248
        %v2423 = vpop.permute.xlu0 %2422
        %2426 = vset.pattern.permute.xlu0 0
        %2427 = vperm.xlu0 %2426, %v2249
        %v2428 = vpop.permute.xlu0 %2427
        %2431 = vset.pattern.permute.xlu0 0
        %2432 = vperm.xlu0 %2431, %v2250
        %v2433 = vpop.permute.xlu0 %2432
        %2436 = vset.pattern.permute.xlu0 0
        %2437 = vperm.xlu0 %2436, %v2251
        %v2438 = vpop.permute.xlu0 %2437
        %2441 = vset.pattern.permute.xlu0 0
        %2442 = vperm.xlu0 %2441, %v2252
        %v2443 = vpop.permute.xlu0 %2442
        %2446 = vset.pattern.permute.xlu0 0
        %2447 = vperm.xlu0 %2446, %v2253
        %v2448 = vpop.permute.xlu0 %2447
        %2451 = vset.pattern.permute.xlu0 0
        %2452 = vperm.xlu0 %2451, %v2254
        %v2453 = vpop.permute.xlu0 %2452
        %2456 = vset.pattern.permute.xlu0 0
        %2457 = vperm.xlu0 %2456, %v2255
        %v2458 = vpop.permute.xlu0 %2457
        %2461 = vset.pattern.permute.xlu0 0
        %2462 = vperm.xlu0 %2461, %v2256
        %v2463 = vpop.permute.xlu0 %2462
        %2466 = vset.pattern.permute.xlu0 0
        %2467 = vperm.xlu0 %2466, %v2257
        %v2468 = vpop.permute.xlu0 %2467
        %2471 = vset.pattern.permute.xlu0 0
        %2472 = vperm.xlu0 %2471, %v2258
        %v2473 = vpop.permute.xlu0 %2472
        %2476 = vset.pattern.permute.xlu0 0
        %2477 = vperm.xlu0 %2476, %v2259
        %v2478 = vpop.permute.xlu0 %2477
        %2481 = vset.pattern.permute.xlu0 0
        %2482 = vperm.xlu0 %2481, %v2260
        %v2483 = vpop.permute.xlu0 %2482
        %2486 = vset.pattern.permute.xlu0 0
        %2487 = vperm.xlu0 %2486, %v2261
        %v2488 = vpop.permute.xlu0 %2487
        %2491 = vset.pattern.permute.xlu0 0
        %2492 = vperm.xlu0 %2491, %v2262
        %v2493 = vpop.permute.xlu0 %2492
        %2496 = vset.pattern.permute.xlu0 0
        %2497 = vperm.xlu0 %2496, %v2263
        %v2498 = vpop.permute.xlu0 %2497
        %2501 = vset.pattern.permute.xlu0 0
        %2502 = vperm.xlu0 %2501, %v2264
        %v2503 = vpop.permute.xlu0 %2502
        %2506 = vset.pattern.permute.xlu0 0
        %2507 = vperm.xlu0 %2506, %v2265
        %v2508 = vpop.permute.xlu0 %2507
        %2511 = vset.pattern.permute.xlu0 0
        %2512 = vperm.xlu0 %2511, %v2266
        %v2513 = vpop.permute.xlu0 %2512
        %2516 = vset.pattern.permute.xlu0 0
        %2517 = vperm.xlu0 %2516, %v2267
        %v2518 = vpop.permute.xlu0 %2517
        %2521 = vset.pattern.permute.xlu0 0
        %2522 = vperm.xlu0 %2521, %v2268
        %v2523 = vpop.permute.xlu0 %2522
        %v2525 = vsub.f32 %v1951, %v2368
        %v2526 = vsub.f32 %v1953, %v2368
        %v2527 = vsub.f32 %v1955, %v2373
        %v2528 = vsub.f32 %v1957, %v2373
        %v2529 = vsub.f32 %v1961, %v2378
        %v2530 = vsub.f32 %v1963, %v2378
        %v2531 = vsub.f32 %v1965, %v2383
        %v2532 = vsub.f32 %v1967, %v2383
        %v2533 = vsub.f32 %v1971, %v2388
        %v2534 = vsub.f32 %v1973, %v2388
        %v2535 = vsub.f32 %v1975, %v2393
        %v2536 = vsub.f32 %v1977, %v2393
        %v2537 = vsub.f32 %v1981, %v2398
        %v2538 = vsub.f32 %v1983, %v2398
        %v2539 = vsub.f32 %v1985, %v2403
        %v2540 = vsub.f32 %v1987, %v2403
        %v2541 = vsub.f32 %v1991, %v2408
        %v2542 = vsub.f32 %v1993, %v2408
        %v2543 = vsub.f32 %v1995, %v2413
        %v2544 = vsub.f32 %v1997, %v2413
        %v2545 = vsub.f32 %v2001, %v2418
        %v2546 = vsub.f32 %v2003, %v2418
        %v2547 = vsub.f32 %v2005, %v2423
        %v2548 = vsub.f32 %v2007, %v2423
        %v2549 = vsub.f32 %v2011, %v2428
        %v2550 = vsub.f32 %v2013, %v2428
        %v2551 = vsub.f32 %v2015, %v2433
        %v2552 = vsub.f32 %v2017, %v2433
        %v2553 = vsub.f32 %v2021, %v2438
        %v2554 = vsub.f32 %v2023, %v2438
        %v2555 = vsub.f32 %v2025, %v2443
        %v2556 = vsub.f32 %v2027, %v2443
        %v2557 = vsub.f32 %v2031, %v2448
        %v2558 = vsub.f32 %v2033, %v2448
        %v2559 = vsub.f32 %v2035, %v2453
        %v2560 = vsub.f32 %v2037, %v2453
        %v2561 = vsub.f32 %v2041, %v2458
        %v2562 = vsub.f32 %v2043, %v2458
        %v2563 = vsub.f32 %v2045, %v2463
        %v2564 = vsub.f32 %v2047, %v2463
        %v2565 = vsub.f32 %v2051, %v2468
        %v2566 = vsub.f32 %v2053, %v2468
        %v2567 = vsub.f32 %v2055, %v2473
        %v2568 = vsub.f32 %v2057, %v2473
        %v2569 = vsub.f32 %v2061, %v2478
        %v2570 = vsub.f32 %v2063, %v2478
        %v2571 = vsub.f32 %v2065, %v2483
        %v2572 = vsub.f32 %v2067, %v2483
        %v2573 = vsub.f32 %v2071, %v2488
        %v2574 = vsub.f32 %v2073, %v2488
        %v2575 = vsub.f32 %v2075, %v2493
        %v2576 = vsub.f32 %v2077, %v2493
        %v2577 = vsub.f32 %v2081, %v2498
        %v2578 = vsub.f32 %v2083, %v2498
        %v2579 = vsub.f32 %v2085, %v2503
        %v2580 = vsub.f32 %v2087, %v2503
        %v2581 = vsub.f32 %v2091, %v2508
        %v2582 = vsub.f32 %v2093, %v2508
        %v2583 = vsub.f32 %v2095, %v2513
        %v2584 = vsub.f32 %v2097, %v2513
        %v2585 = vsub.f32 %v2101, %v2518
        %v2586 = vsub.f32 %v2103, %v2518
        %v2587 = vsub.f32 %v2105, %v2523
        %v2588 = vsub.f32 %v2107, %v2523
        %v2589 = vmul.f32 %v2525, 1.442695
        %v2590 = vpow.pop %v2589
        %v2591 = vmul.f32 %v2526, 1.442695
        %v2592 = vpow.pop %v2591
        %v2593 = vmul.f32 %v2527, 1.442695
        %v2594 = vpow.pop %v2593
        %v2595 = vmul.f32 %v2528, 1.442695
        %v2596 = vpow.pop %v2595
        %v2597 = vmul.f32 %v2529, 1.442695
        %v2598 = vpow.pop %v2597
        %v2599 = vmul.f32 %v2530, 1.442695
        %v2600 = vpow.pop %v2599
        %v2601 = vmul.f32 %v2531, 1.442695
        %v2602 = vpow.pop %v2601
        %v2603 = vmul.f32 %v2532, 1.442695
        %v2604 = vpow.pop %v2603
        %v2605 = vmul.f32 %v2533, 1.442695
        %v2606 = vpow.pop %v2605
        %v2607 = vmul.f32 %v2534, 1.442695
        %v2608 = vpow.pop %v2607
        %v2609 = vmul.f32 %v2535, 1.442695
        %v2610 = vpow.pop %v2609
        %v2611 = vmul.f32 %v2536, 1.442695
        %v2612 = vpow.pop %v2611
        %v2613 = vmul.f32 %v2537, 1.442695
        %v2614 = vpow.pop %v2613
        %v2615 = vmul.f32 %v2538, 1.442695
        %v2616 = vpow.pop %v2615
        %v2617 = vmul.f32 %v2539, 1.442695
        %v2618 = vpow.pop %v2617
        %v2619 = vmul.f32 %v2540, 1.442695
        %v2620 = vpow.pop %v2619
        %v2621 = vmul.f32 %v2541, 1.442695
        %v2622 = vpow.pop %v2621
        %v2623 = vmul.f32 %v2542, 1.442695
        %v2624 = vpow.pop %v2623
        %v2625 = vmul.f32 %v2543, 1.442695
        %v2626 = vpow.pop %v2625
        %v2627 = vmul.f32 %v2544, 1.442695
        %v2628 = vpow.pop %v2627
        %v2629 = vmul.f32 %v2545, 1.442695
        %v2630 = vpow.pop %v2629
        %v2631 = vmul.f32 %v2546, 1.442695
        %v2632 = vpow.pop %v2631
        %v2633 = vmul.f32 %v2547, 1.442695
        %v2634 = vpow.pop %v2633
        %v2635 = vmul.f32 %v2548, 1.442695
        %v2636 = vpow.pop %v2635
        %v2637 = vmul.f32 %v2549, 1.442695
        %v2638 = vpow.pop %v2637
        %v2639 = vmul.f32 %v2550, 1.442695
        %v2640 = vpow.pop %v2639
        %v2641 = vmul.f32 %v2551, 1.442695
        %v2642 = vpow.pop %v2641
        %v2643 = vmul.f32 %v2552, 1.442695
        %v2644 = vpow.pop %v2643
        %v2645 = vmul.f32 %v2553, 1.442695
        %v2646 = vpow.pop %v2645
        %v2647 = vmul.f32 %v2554, 1.442695
        %v2648 = vpow.pop %v2647
        %v2649 = vmul.f32 %v2555, 1.442695
        %v2650 = vpow.pop %v2649
        %v2651 = vmul.f32 %v2556, 1.442695
        %v2652 = vpow.pop %v2651
        %v2653 = vmul.f32 %v2557, 1.442695
        %v2654 = vpow.pop %v2653
        %v2655 = vmul.f32 %v2558, 1.442695
        %v2656 = vpow.pop %v2655
        %v2657 = vmul.f32 %v2559, 1.442695
        %v2658 = vpow.pop %v2657
        %v2659 = vmul.f32 %v2560, 1.442695
        %v2660 = vpow.pop %v2659
        %v2661 = vmul.f32 %v2561, 1.442695
        %v2662 = vpow.pop %v2661
        %v2663 = vmul.f32 %v2562, 1.442695
        %v2664 = vpow.pop %v2663
        %v2665 = vmul.f32 %v2563, 1.442695
        %v2666 = vpow.pop %v2665
        %v2667 = vmul.f32 %v2564, 1.442695
        %v2668 = vpow.pop %v2667
        %v2669 = vmul.f32 %v2565, 1.442695
        %v2670 = vpow.pop %v2669
        %v2671 = vmul.f32 %v2566, 1.442695
        %v2672 = vpow.pop %v2671
        %v2673 = vmul.f32 %v2567, 1.442695
        %v2674 = vpow.pop %v2673
        %v2675 = vmul.f32 %v2568, 1.442695
        %v2676 = vpow.pop %v2675
        %v2677 = vmul.f32 %v2569, 1.442695
        %v2678 = vpow.pop %v2677
        %v2679 = vmul.f32 %v2570, 1.442695
        %v2680 = vpow.pop %v2679
        %v2681 = vmul.f32 %v2571, 1.442695
        %v2682 = vpow.pop %v2681
        %v2683 = vmul.f32 %v2572, 1.442695
        %v2684 = vpow.pop %v2683
        %v2685 = vmul.f32 %v2573, 1.442695
        %v2686 = vpow.pop %v2685
        %v2687 = vmul.f32 %v2574, 1.442695
        %v2688 = vpow.pop %v2687
        %v2689 = vmul.f32 %v2575, 1.442695
        %v2690 = vpow.pop %v2689
        %v2691 = vmul.f32 %v2576, 1.442695
        %v2692 = vpow.pop %v2691
        %v2693 = vmul.f32 %v2577, 1.442695
        %v2694 = vpow.pop %v2693
        %v2695 = vmul.f32 %v2578, 1.442695
        %v2696 = vpow.pop %v2695
        %v2697 = vmul.f32 %v2579, 1.442695
        %v2698 = vpow.pop %v2697
        %v2699 = vmul.f32 %v2580, 1.442695
        %v2700 = vpow.pop %v2699
        %v2701 = vmul.f32 %v2581, 1.442695
        %v2702 = vpow.pop %v2701
        %v2703 = vmul.f32 %v2582, 1.442695
        %v2704 = vpow.pop %v2703
        %v2705 = vmul.f32 %v2583, 1.442695
        %v2706 = vpow.pop %v2705
        %v2707 = vmul.f32 %v2584, 1.442695
        %v2708 = vpow.pop %v2707
        %v2709 = vmul.f32 %v2585, 1.442695
        %v2710 = vpow.pop %v2709
        %v2711 = vmul.f32 %v2586, 1.442695
        %v2712 = vpow.pop %v2711
        %v2713 = vmul.f32 %v2587, 1.442695
        %v2714 = vpow.pop %v2713
        %v2715 = vmul.f32 %v2588, 1.442695
        %v2716 = vpow.pop %v2715
        %v2717 = vld [vmem:[#allocation4] sm:$0xff]
        %v2718 = vld [vmem:[#allocation4 + $0x8] sm:$0xff]
        %v2719 = vld [vmem:[#allocation4 + $0x10] sm:$0xff]
        %v2720 = vld [vmem:[#allocation4 + $0x18] sm:$0xff]
        %v2721 = vld [vmem:[#allocation4 + $0x20] sm:$0xff]
        %v2722 = vld [vmem:[#allocation4 + $0x28] sm:$0xff]
        %v2723 = vld [vmem:[#allocation4 + $0x30] sm:$0xff]
        %v2724 = vld [vmem:[#allocation4 + $0x38] sm:$0xff]
        %v2725 = vld [vmem:[#allocation4 + $0x40] sm:$0xff]
        %v2726 = vld [vmem:[#allocation4 + $0x48] sm:$0xff]
        %v2727 = vld [vmem:[#allocation4 + $0x50] sm:$0xff]
        %v2728 = vld [vmem:[#allocation4 + $0x58] sm:$0xff]
        %v2729 = vld [vmem:[#allocation4 + $0x60] sm:$0xff]
        %v2730 = vld [vmem:[#allocation4 + $0x68] sm:$0xff]
        %v2731 = vld [vmem:[#allocation4 + $0x70] sm:$0xff]
        %v2732 = vld [vmem:[#allocation4 + $0x78] sm:$0xff]
        %v2733 = vld [vmem:[#allocation4 + $0x80] sm:$0xff]
        %v2734 = vld [vmem:[#allocation4 + $0x88] sm:$0xff]
        %v2735 = vld [vmem:[#allocation4 + $0x90] sm:$0xff]
        %v2736 = vld [vmem:[#allocation4 + $0x98] sm:$0xff]
        %v2737 = vld [vmem:[#allocation4 + $0xa0] sm:$0xff]
        %v2738 = vld [vmem:[#allocation4 + $0xa8] sm:$0xff]
        %v2739 = vld [vmem:[#allocation4 + $0xb0] sm:$0xff]
        %v2740 = vld [vmem:[#allocation4 + $0xb8] sm:$0xff]
        %v2741 = vld [vmem:[#allocation4 + $0xc0] sm:$0xff]
        %v2742 = vld [vmem:[#allocation4 + $0xc8] sm:$0xff]
        %v2743 = vld [vmem:[#allocation4 + $0xd0] sm:$0xff]
        %v2744 = vld [vmem:[#allocation4 + $0xd8] sm:$0xff]
        %v2745 = vld [vmem:[#allocation4 + $0xe0] sm:$0xff]
        %v2746 = vld [vmem:[#allocation4 + $0xe8] sm:$0xff]
        %v2747 = vld [vmem:[#allocation4 + $0xf0] sm:$0xff]
        %v2748 = vld [vmem:[#allocation4 + $0xf8] sm:$0xff]
        %v2749 = vmul.f32 %v2302, %v2717
        %v2750 = vmul.f32 %v2304, %v2718
        %v2751 = vmul.f32 %v2306, %v2719
        %v2752 = vmul.f32 %v2308, %v2720
        %v2753 = vmul.f32 %v2310, %v2721
        %v2754 = vmul.f32 %v2312, %v2722
        %v2755 = vmul.f32 %v2314, %v2723
        %v2756 = vmul.f32 %v2316, %v2724
        %v2757 = vmul.f32 %v2318, %v2725
        %v2758 = vmul.f32 %v2320, %v2726
        %v2759 = vmul.f32 %v2322, %v2727
        %v2760 = vmul.f32 %v2324, %v2728
        %v2761 = vmul.f32 %v2326, %v2729
        %v2762 = vmul.f32 %v2328, %v2730
        %v2763 = vmul.f32 %v2330, %v2731
        %v2764 = vmul.f32 %v2332, %v2732
        %v2765 = vmul.f32 %v2334, %v2733
        %v2766 = vmul.f32 %v2336, %v2734
        %v2767 = vmul.f32 %v2338, %v2735
        %v2768 = vmul.f32 %v2340, %v2736
        %v2769 = vmul.f32 %v2342, %v2737
        %v2770 = vmul.f32 %v2344, %v2738
        %v2771 = vmul.f32 %v2346, %v2739
        %v2772 = vmul.f32 %v2348, %v2740
        %v2773 = vmul.f32 %v2350, %v2741
        %v2774 = vmul.f32 %v2352, %v2742
        %v2775 = vmul.f32 %v2354, %v2743
        %v2776 = vmul.f32 %v2356, %v2744
        %v2777 = vmul.f32 %v2358, %v2745
        %v2778 = vmul.f32 %v2360, %v2746
        %v2779 = vmul.f32 %v2362, %v2747
        %v2780 = vmul.f32 %v2364, %v2748
        %v2781 = vadd.f32 %v2590, %v2592
        %2782 = vadd.xlane.f32.xlu0 %v2781
        %v2783 = vpop.xlane.xlu0 %2782
        %v2784 = vadd.f32 %v2594, %v2596
        %2785 = vadd.xlane.f32.xlu0 %v2784
        %v2786 = vpop.xlane.xlu0 %2785
        %v2787 = vadd.f32 %v2598, %v2600
        %2788 = vadd.xlane.f32.xlu0 %v2787
        %v2789 = vpop.xlane.xlu0 %2788
        %v2790 = vadd.f32 %v2602, %v2604
        %2791 = vadd.xlane.f32.xlu0 %v2790
        %v2792 = vpop.xlane.xlu0 %2791
        %v2793 = vadd.f32 %v2606, %v2608
        %2794 = vadd.xlane.f32.xlu0 %v2793
        %v2795 = vpop.xlane.xlu0 %2794
        %v2796 = vadd.f32 %v2610, %v2612
        %2797 = vadd.xlane.f32.xlu0 %v2796
        %v2798 = vpop.xlane.xlu0 %2797
        %v2799 = vadd.f32 %v2614, %v2616
        %2800 = vadd.xlane.f32.xlu0 %v2799
        %v2801 = vpop.xlane.xlu0 %2800
        %v2802 = vadd.f32 %v2618, %v2620
        %2803 = vadd.xlane.f32.xlu0 %v2802
        %v2804 = vpop.xlane.xlu0 %2803
        %v2805 = vadd.f32 %v2622, %v2624
        %2806 = vadd.xlane.f32.xlu0 %v2805
        %v2807 = vpop.xlane.xlu0 %2806
        %v2808 = vadd.f32 %v2626, %v2628
        %2809 = vadd.xlane.f32.xlu0 %v2808
        %v2810 = vpop.xlane.xlu0 %2809
        %v2811 = vadd.f32 %v2630, %v2632
        %2812 = vadd.xlane.f32.xlu0 %v2811
        %v2813 = vpop.xlane.xlu0 %2812
        %v2814 = vadd.f32 %v2634, %v2636
        %2815 = vadd.xlane.f32.xlu0 %v2814
        %v2816 = vpop.xlane.xlu0 %2815
        %v2817 = vadd.f32 %v2638, %v2640
        %2818 = vadd.xlane.f32.xlu0 %v2817
        %v2819 = vpop.xlane.xlu0 %2818
        %v2820 = vadd.f32 %v2642, %v2644
        %2821 = vadd.xlane.f32.xlu0 %v2820
        %v2822 = vpop.xlane.xlu0 %2821
        %v2823 = vadd.f32 %v2646, %v2648
        %2824 = vadd.xlane.f32.xlu0 %v2823
        %v2825 = vpop.xlane.xlu0 %2824
        %v2826 = vadd.f32 %v2650, %v2652
        %2827 = vadd.xlane.f32.xlu0 %v2826
        %v2828 = vpop.xlane.xlu0 %2827
        %v2829 = vadd.f32 %v2654, %v2656
        %2830 = vadd.xlane.f32.xlu0 %v2829
        %v2831 = vpop.xlane.xlu0 %2830
        %v2832 = vadd.f32 %v2658, %v2660
        %2833 = vadd.xlane.f32.xlu0 %v2832
        %v2834 = vpop.xlane.xlu0 %2833
        %v2835 = vadd.f32 %v2662, %v2664
        %2836 = vadd.xlane.f32.xlu0 %v2835
        %v2837 = vpop.xlane.xlu0 %2836
        %v2838 = vadd.f32 %v2666, %v2668
        %2839 = vadd.xlane.f32.xlu0 %v2838
        %v2840 = vpop.xlane.xlu0 %2839
        %v2841 = vadd.f32 %v2670, %v2672
        %2842 = vadd.xlane.f32.xlu0 %v2841
        %v2843 = vpop.xlane.xlu0 %2842
        %v2844 = vadd.f32 %v2674, %v2676
        %2845 = vadd.xlane.f32.xlu0 %v2844
        %v2846 = vpop.xlane.xlu0 %2845
        %v2847 = vadd.f32 %v2678, %v2680
        %2848 = vadd.xlane.f32.xlu0 %v2847
        %v2849 = vpop.xlane.xlu0 %2848
        %v2850 = vadd.f32 %v2682, %v2684
        %2851 = vadd.xlane.f32.xlu0 %v2850
        %v2852 = vpop.xlane.xlu0 %2851
        %v2853 = vadd.f32 %v2686, %v2688
        %2854 = vadd.xlane.f32.xlu0 %v2853
        %v2855 = vpop.xlane.xlu0 %2854
        %v2856 = vadd.f32 %v2690, %v2692
        %2857 = vadd.xlane.f32.xlu0 %v2856
        %v2858 = vpop.xlane.xlu0 %2857
        %v2859 = vadd.f32 %v2694, %v2696
        %2860 = vadd.xlane.f32.xlu0 %v2859
        %v2861 = vpop.xlane.xlu0 %2860
        %v2862 = vadd.f32 %v2698, %v2700
        %2863 = vadd.xlane.f32.xlu0 %v2862
        %v2864 = vpop.xlane.xlu0 %2863
        %v2865 = vadd.f32 %v2702, %v2704
        %2866 = vadd.xlane.f32.xlu0 %v2865
        %v2867 = vpop.xlane.xlu0 %2866
        %v2868 = vadd.f32 %v2706, %v2708
        %2869 = vadd.xlane.f32.xlu0 %v2868
        %v2870 = vpop.xlane.xlu0 %2869
        %v2871 = vadd.f32 %v2710, %v2712
        %2872 = vadd.xlane.f32.xlu0 %v2871
        %v2873 = vpop.xlane.xlu0 %2872
        %v2874 = vadd.f32 %v2714, %v2716
        %2875 = vadd.xlane.f32.xlu0 %v2874
        %v2876 = vpop.xlane.xlu0 %2875
        %v2877 = vadd.f32 %v2749, %v2783
        %v2878 = vadd.f32 %v2750, %v2786
        %v2879 = vadd.f32 %v2751, %v2789
        %v2880 = vadd.f32 %v2752, %v2792
        %v2881 = vadd.f32 %v2753, %v2795
        %v2882 = vadd.f32 %v2754, %v2798
        %v2883 = vadd.f32 %v2755, %v2801
        %v2884 = vadd.f32 %v2756, %v2804
        %v2885 = vadd.f32 %v2757, %v2807
        %v2886 = vadd.f32 %v2758, %v2810
        %v2887 = vadd.f32 %v2759, %v2813
        %v2888 = vadd.f32 %v2760, %v2816
        %v2889 = vadd.f32 %v2761, %v2819
        %v2890 = vadd.f32 %v2762, %v2822
        %v2891 = vadd.f32 %v2763, %v2825
        %v2892 = vadd.f32 %v2764, %v2828
        %v2893 = vadd.f32 %v2765, %v2831
        %v2894 = vadd.f32 %v2766, %v2834
        %v2895 = vadd.f32 %v2767, %v2837
        %v2896 = vadd.f32 %v2768, %v2840
        %v2897 = vadd.f32 %v2769, %v2843
        %v2898 = vadd.f32 %v2770, %v2846
        %v2899 = vadd.f32 %v2771, %v2849
        %v2900 = vadd.f32 %v2772, %v2852
        %v2901 = vadd.f32 %v2773, %v2855
        %v2902 = vadd.f32 %v2774, %v2858
        %v2903 = vadd.f32 %v2775, %v2861
        %v2904 = vadd.f32 %v2776, %v2864
        %v2905 = vadd.f32 %v2777, %v2867
        %v2906 = vadd.f32 %v2778, %v2870
        %v2907 = vadd.f32 %v2779, %v2873
        %v2908 = vadd.f32 %v2780, %v2876
        %vm2909 = vcmask 7168
        %2910 = vst.msk [vmem:[#allocation4] sm:$0xff] %vm2909, %v2877
        %2911 = vst.msk [vmem:[#allocation4 + $0x8] sm:$0xff] %vm2909, %v2878
        %2912 = vst.msk [vmem:[#allocation4 + $0x10] sm:$0xff] %vm2909, %v2879
        %2913 = vst.msk [vmem:[#allocation4 + $0x18] sm:$0xff] %vm2909, %v2880
        %2914 = vst.msk [vmem:[#allocation4 + $0x20] sm:$0xff] %vm2909, %v2881
        %2915 = vst.msk [vmem:[#allocation4 + $0x28] sm:$0xff] %vm2909, %v2882
        %2916 = vst.msk [vmem:[#allocation4 + $0x30] sm:$0xff] %vm2909, %v2883
        %2917 = vst.msk [vmem:[#allocation4 + $0x38] sm:$0xff] %vm2909, %v2884
        %2918 = vst.msk [vmem:[#allocation4 + $0x40] sm:$0xff] %vm2909, %v2885
        %2919 = vst.msk [vmem:[#allocation4 + $0x48] sm:$0xff] %vm2909, %v2886
        %2920 = vst.msk [vmem:[#allocation4 + $0x50] sm:$0xff] %vm2909, %v2887
        %2921 = vst.msk [vmem:[#allocation4 + $0x58] sm:$0xff] %vm2909, %v2888
        %2922 = vst.msk [vmem:[#allocation4 + $0x60] sm:$0xff] %vm2909, %v2889
        %2923 = vst.msk [vmem:[#allocation4 + $0x68] sm:$0xff] %vm2909, %v2890
        %2924 = vst.msk [vmem:[#allocation4 + $0x70] sm:$0xff] %vm2909, %v2891
        %2925 = vst.msk [vmem:[#allocation4 + $0x78] sm:$0xff] %vm2909, %v2892
        %2926 = vst.msk [vmem:[#allocation4 + $0x80] sm:$0xff] %vm2909, %v2893
        %2927 = vst.msk [vmem:[#allocation4 + $0x88] sm:$0xff] %vm2909, %v2894
        %2928 = vst.msk [vmem:[#allocation4 + $0x90] sm:$0xff] %vm2909, %v2895
        %2929 = vst.msk [vmem:[#allocation4 + $0x98] sm:$0xff] %vm2909, %v2896
        %2930 = vst.msk [vmem:[#allocation4 + $0xa0] sm:$0xff] %vm2909, %v2897
        %2931 = vst.msk [vmem:[#allocation4 + $0xa8] sm:$0xff] %vm2909, %v2898
        %2932 = vst.msk [vmem:[#allocation4 + $0xb0] sm:$0xff] %vm2909, %v2899
        %2933 = vst.msk [vmem:[#allocation4 + $0xb8] sm:$0xff] %vm2909, %v2900
        %2934 = vst.msk [vmem:[#allocation4 + $0xc0] sm:$0xff] %vm2909, %v2901
        %2935 = vst.msk [vmem:[#allocation4 + $0xc8] sm:$0xff] %vm2909, %v2902
        %2936 = vst.msk [vmem:[#allocation4 + $0xd0] sm:$0xff] %vm2909, %v2903
        %2937 = vst.msk [vmem:[#allocation4 + $0xd8] sm:$0xff] %vm2909, %v2904
        %2938 = vst.msk [vmem:[#allocation4 + $0xe0] sm:$0xff] %vm2909, %v2905
        %2939 = vst.msk [vmem:[#allocation4 + $0xe8] sm:$0xff] %vm2909, %v2906
        %2940 = vst.msk [vmem:[#allocation4 + $0xf0] sm:$0xff] %vm2909, %v2907
        %2941 = vst.msk [vmem:[#allocation4 + $0xf8] sm:$0xff] %vm2909, %v2908
        %v2942 = vld [vmem:[#allocation5] sm:$0xff]
        %v2943 = vld [vmem:[#allocation5 + $0x8] sm:$0xff]
        %v2944 = vld [vmem:[#allocation5 + $0x10] sm:$0xff]
        %v2945 = vld [vmem:[#allocation5 + $0x18] sm:$0xff]
        %v2946 = vld [vmem:[#allocation5 + $0x20] sm:$0xff]
        %v2947 = vld [vmem:[#allocation5 + $0x28] sm:$0xff]
        %v2948 = vld [vmem:[#allocation5 + $0x30] sm:$0xff]
        %v2949 = vld [vmem:[#allocation5 + $0x38] sm:$0xff]
        %v2950 = vld [vmem:[#allocation5 + $0x40] sm:$0xff]
        %v2951 = vld [vmem:[#allocation5 + $0x48] sm:$0xff]
        %v2952 = vld [vmem:[#allocation5 + $0x50] sm:$0xff]
        %v2953 = vld [vmem:[#allocation5 + $0x58] sm:$0xff]
        %v2954 = vld [vmem:[#allocation5 + $0x60] sm:$0xff]
        %v2955 = vld [vmem:[#allocation5 + $0x68] sm:$0xff]
        %v2956 = vld [vmem:[#allocation5 + $0x70] sm:$0xff]
        %v2957 = vld [vmem:[#allocation5 + $0x78] sm:$0xff]
        %v2958 = vld [vmem:[#allocation5 + $0x80] sm:$0xff]
        %v2959 = vld [vmem:[#allocation5 + $0x88] sm:$0xff]
        %v2960 = vld [vmem:[#allocation5 + $0x90] sm:$0xff]
        %v2961 = vld [vmem:[#allocation5 + $0x98] sm:$0xff]
        %v2962 = vld [vmem:[#allocation5 + $0xa0] sm:$0xff]
        %v2963 = vld [vmem:[#allocation5 + $0xa8] sm:$0xff]
        %v2964 = vld [vmem:[#allocation5 + $0xb0] sm:$0xff]
        %v2965 = vld [vmem:[#allocation5 + $0xb8] sm:$0xff]
        %v2966 = vld [vmem:[#allocation5 + $0xc0] sm:$0xff]
        %v2967 = vld [vmem:[#allocation5 + $0xc8] sm:$0xff]
        %v2968 = vld [vmem:[#allocation5 + $0xd0] sm:$0xff]
        %v2969 = vld [vmem:[#allocation5 + $0xd8] sm:$0xff]
        %v2970 = vld [vmem:[#allocation5 + $0xe0] sm:$0xff]
        %v2971 = vld [vmem:[#allocation5 + $0xe8] sm:$0xff]
        %v2972 = vld [vmem:[#allocation5 + $0xf0] sm:$0xff]
        %v2973 = vld [vmem:[#allocation5 + $0xf8] sm:$0xff]
        %2975 = vset.pattern.permute.xlu0 0
        %2976 = vperm.xlu0 %2975, %v2302
        %v2977 = vpop.permute.xlu0 %2976
        %2980 = vset.pattern.permute.xlu0 0
        %2981 = vperm.xlu0 %2980, %v2304
        %v2982 = vpop.permute.xlu0 %2981
        %2985 = vset.pattern.permute.xlu0 0
        %2986 = vperm.xlu0 %2985, %v2306
        %v2987 = vpop.permute.xlu0 %2986
        %2990 = vset.pattern.permute.xlu0 0
        %2991 = vperm.xlu0 %2990, %v2308
        %v2992 = vpop.permute.xlu0 %2991
        %2995 = vset.pattern.permute.xlu0 0
        %2996 = vperm.xlu0 %2995, %v2310
        %v2997 = vpop.permute.xlu0 %2996
        %3000 = vset.pattern.permute.xlu0 0
        %3001 = vperm.xlu0 %3000, %v2312
        %v3002 = vpop.permute.xlu0 %3001
        %3005 = vset.pattern.permute.xlu0 0
        %3006 = vperm.xlu0 %3005, %v2314
        %v3007 = vpop.permute.xlu0 %3006
        %3010 = vset.pattern.permute.xlu0 0
        %3011 = vperm.xlu0 %3010, %v2316
        %v3012 = vpop.permute.xlu0 %3011
        %3015 = vset.pattern.permute.xlu0 0
        %3016 = vperm.xlu0 %3015, %v2318
        %v3017 = vpop.permute.xlu0 %3016
        %3020 = vset.pattern.permute.xlu0 0
        %3021 = vperm.xlu0 %3020, %v2320
        %v3022 = vpop.permute.xlu0 %3021
        %3025 = vset.pattern.permute.xlu0 0
        %3026 = vperm.xlu0 %3025, %v2322
        %v3027 = vpop.permute.xlu0 %3026
        %3030 = vset.pattern.permute.xlu0 0
        %3031 = vperm.xlu0 %3030, %v2324
        %v3032 = vpop.permute.xlu0 %3031
        %3035 = vset.pattern.permute.xlu0 0
        %3036 = vperm.xlu0 %3035, %v2326
        %v3037 = vpop.permute.xlu0 %3036
        %3040 = vset.pattern.permute.xlu0 0
        %3041 = vperm.xlu0 %3040, %v2328
        %v3042 = vpop.permute.xlu0 %3041
        %3045 = vset.pattern.permute.xlu0 0
        %3046 = vperm.xlu0 %3045, %v2330
        %v3047 = vpop.permute.xlu0 %3046
        %3050 = vset.pattern.permute.xlu0 0
        %3051 = vperm.xlu0 %3050, %v2332
        %v3052 = vpop.permute.xlu0 %3051
        %3055 = vset.pattern.permute.xlu0 0
        %3056 = vperm.xlu0 %3055, %v2334
        %v3057 = vpop.permute.xlu0 %3056
        %3060 = vset.pattern.permute.xlu0 0
        %3061 = vperm.xlu0 %3060, %v2336
        %v3062 = vpop.permute.xlu0 %3061
        %3065 = vset.pattern.permute.xlu0 0
        %3066 = vperm.xlu0 %3065, %v2338
        %v3067 = vpop.permute.xlu0 %3066
        %3070 = vset.pattern.permute.xlu0 0
        %3071 = vperm.xlu0 %3070, %v2340
        %v3072 = vpop.permute.xlu0 %3071
        %3075 = vset.pattern.permute.xlu0 0
        %3076 = vperm.xlu0 %3075, %v2342
        %v3077 = vpop.permute.xlu0 %3076
        %3080 = vset.pattern.permute.xlu0 0
        %3081 = vperm.xlu0 %3080, %v2344
        %v3082 = vpop.permute.xlu0 %3081
        %3085 = vset.pattern.permute.xlu0 0
        %3086 = vperm.xlu0 %3085, %v2346
        %v3087 = vpop.permute.xlu0 %3086
        %3090 = vset.pattern.permute.xlu0 0
        %3091 = vperm.xlu0 %3090, %v2348
        %v3092 = vpop.permute.xlu0 %3091
        %3095 = vset.pattern.permute.xlu0 0
        %3096 = vperm.xlu0 %3095, %v2350
        %v3097 = vpop.permute.xlu0 %3096
        %3100 = vset.pattern.permute.xlu0 0
        %3101 = vperm.xlu0 %3100, %v2352
        %v3102 = vpop.permute.xlu0 %3101
        %3105 = vset.pattern.permute.xlu0 0
        %3106 = vperm.xlu0 %3105, %v2354
        %v3107 = vpop.permute.xlu0 %3106
        %3110 = vset.pattern.permute.xlu0 0
        %3111 = vperm.xlu0 %3110, %v2356
        %v3112 = vpop.permute.xlu0 %3111
        %3115 = vset.pattern.permute.xlu0 0
        %3116 = vperm.xlu0 %3115, %v2358
        %v3117 = vpop.permute.xlu0 %3116
        %3120 = vset.pattern.permute.xlu0 0
        %3121 = vperm.xlu0 %3120, %v2360
        %v3122 = vpop.permute.xlu0 %3121
        %3125 = vset.pattern.permute.xlu0 0
        %3126 = vperm.xlu0 %3125, %v2362
        %v3127 = vpop.permute.xlu0 %3126
        %3130 = vset.pattern.permute.xlu0 0
        %3131 = vperm.xlu0 %3130, %v2364
        %v3132 = vpop.permute.xlu0 %3131
        %v3134 = vmul.f32 %v2977, %v2942
        %v3135 = vmul.f32 %v2982, %v2943
        %v3136 = vmul.f32 %v2987, %v2944
        %v3137 = vmul.f32 %v2992, %v2945
        %v3138 = vmul.f32 %v2997, %v2946
        %v3139 = vmul.f32 %v3002, %v2947
        %v3140 = vmul.f32 %v3007, %v2948
        %v3141 = vmul.f32 %v3012, %v2949
        %v3142 = vmul.f32 %v3017, %v2950
        %v3143 = vmul.f32 %v3022, %v2951
        %v3144 = vmul.f32 %v3027, %v2952
        %v3145 = vmul.f32 %v3032, %v2953
        %v3146 = vmul.f32 %v3037, %v2954
        %v3147 = vmul.f32 %v3042, %v2955
        %v3148 = vmul.f32 %v3047, %v2956
        %v3149 = vmul.f32 %v3052, %v2957
        %v3150 = vmul.f32 %v3057, %v2958
        %v3151 = vmul.f32 %v3062, %v2959
        %v3152 = vmul.f32 %v3067, %v2960
        %v3153 = vmul.f32 %v3072, %v2961
        %v3154 = vmul.f32 %v3077, %v2962
        %v3155 = vmul.f32 %v3082, %v2963
        %v3156 = vmul.f32 %v3087, %v2964
        %v3157 = vmul.f32 %v3092, %v2965
        %v3158 = vmul.f32 %v3097, %v2966
        %v3159 = vmul.f32 %v3102, %v2967
        %v3160 = vmul.f32 %v3107, %v2968
        %v3161 = vmul.f32 %v3112, %v2969
        %v3162 = vmul.f32 %v3117, %v2970
        %v3163 = vmul.f32 %v3122, %v2971
        %v3164 = vmul.f32 %v3127, %v2972
        %v3165 = vmul.f32 %v3132, %v2973
        %v3166 = vpack.c.bf16 %v2594, %v2590
        %v3167 = vpack.c.bf16 %v2596, %v2592
        %v3168 = vpack.c.bf16 %v2602, %v2598
        %v3169 = vpack.c.bf16 %v2604, %v2600
        %v3170 = vpack.c.bf16 %v2610, %v2606
        %v3171 = vpack.c.bf16 %v2612, %v2608
        %v3172 = vpack.c.bf16 %v2618, %v2614
        %v3173 = vpack.c.bf16 %v2620, %v2616
        %v3174 = vpack.c.bf16 %v2626, %v2622
        %v3175 = vpack.c.bf16 %v2628, %v2624
        %v3176 = vpack.c.bf16 %v2634, %v2630
        %v3177 = vpack.c.bf16 %v2636, %v2632
        %v3178 = vpack.c.bf16 %v2642, %v2638
        %v3179 = vpack.c.bf16 %v2644, %v2640
        %v3180 = vpack.c.bf16 %v2650, %v2646
        %v3181 = vpack.c.bf16 %v2652, %v2648
        %v3182 = vpack.c.bf16 %v2658, %v2654
        %v3183 = vpack.c.bf16 %v2660, %v2656
        %v3184 = vpack.c.bf16 %v2666, %v2662
        %v3185 = vpack.c.bf16 %v2668, %v2664
        %v3186 = vpack.c.bf16 %v2674, %v2670
        %v3187 = vpack.c.bf16 %v2676, %v2672
        %v3188 = vpack.c.bf16 %v2682, %v2678
        %v3189 = vpack.c.bf16 %v2684, %v2680
        %v3190 = vpack.c.bf16 %v2690, %v2686
        %v3191 = vpack.c.bf16 %v2692, %v2688
        %v3192 = vpack.c.bf16 %v2698, %v2694
        %v3193 = vpack.c.bf16 %v2700, %v2696
        %v3194 = vpack.c.bf16 %v2706, %v2702
        %v3195 = vpack.c.bf16 %v2708, %v2704
        %v3196 = vpack.c.bf16 %v2714, %v2710
        %v3197 = vpack.c.bf16 %v2716, %v2712
        %v3230 = vunpack.c.l.b16 %v1660
        %v3231 = vunpack.c.l.b16 %v1661
        %v3232 = vunpack.c.l.b16 %v1662
        %v3233 = vunpack.c.l.b16 %v1663
        %v3234 = vunpack.c.l.b16 %v1664
        %v3235 = vunpack.c.l.b16 %v1665
        %v3236 = vunpack.c.l.b16 %v1666
        %v3237 = vunpack.c.l.b16 %v1667
        %v3238 = vunpack.c.l.b16 %v1668
        %v3239 = vunpack.c.l.b16 %v1669
        %v3240 = vunpack.c.l.b16 %v1670
        %v3241 = vunpack.c.l.b16 %v1671
        %v3242 = vunpack.c.l.b16 %v1672
        %v3243 = vunpack.c.l.b16 %v1673
        %v3244 = vunpack.c.l.b16 %v1674
        %v3245 = vunpack.c.l.b16 %v1675
        %v3246 = vunpack.c.l.b16 %v1676
        %v3247 = vunpack.c.l.b16 %v1677
        %v3248 = vunpack.c.l.b16 %v1678
        %v3249 = vunpack.c.l.b16 %v1679
        %v3250 = vunpack.c.l.b16 %v1680
        %v3251 = vunpack.c.l.b16 %v1681
        %v3252 = vunpack.c.l.b16 %v1682
        %v3253 = vunpack.c.l.b16 %v1683
        %v3254 = vunpack.c.l.b16 %v1684
        %v3255 = vunpack.c.l.b16 %v1685
        %v3256 = vunpack.c.l.b16 %v1686
        %v3257 = vunpack.c.l.b16 %v1687
        %v3258 = vunpack.c.l.b16 %v1688
        %v3259 = vunpack.c.l.b16 %v1689
        %v3260 = vunpack.c.l.b16 %v1690
        %v3261 = vunpack.c.l.b16 %v1691
        %v3262 = vpack.c.b16 %v3231, %v3230
        %v3263 = vpack.c.b16 %v3233, %v3232
        %v3264 = vpack.c.b16 %v3235, %v3234
        %v3265 = vpack.c.b16 %v3237, %v3236
        %v3266 = vpack.c.b16 %v3239, %v3238
        %v3267 = vpack.c.b16 %v3241, %v3240
        %v3268 = vpack.c.b16 %v3243, %v3242
        %v3269 = vpack.c.b16 %v3245, %v3244
        %v3270 = vpack.c.b16 %v3247, %v3246
        %v3271 = vpack.c.b16 %v3249, %v3248
        %v3272 = vpack.c.b16 %v3251, %v3250
        %v3273 = vpack.c.b16 %v3253, %v3252
        %v3274 = vpack.c.b16 %v3255, %v3254
        %v3275 = vpack.c.b16 %v3257, %v3256
        %v3276 = vpack.c.b16 %v3259, %v3258
        %v3277 = vpack.c.b16 %v3261, %v3260
        %3294 = vmatprep.subr.bf16.mxu0 0
        %3295 = vmatpush1.bf16.msra.mxu0 %v3269
        %3296 = vmatprep.subr.bf16.mxu0 0
        %3297 = vmatpush1.bf16.msra.mxu0 %v3268
        %3298 = vmatprep.subr.bf16.mxu0 0
        %3299 = vmatpush1.bf16.msra.mxu0 %v3267
        %3300 = vmatprep.subr.bf16.mxu0 0
        %3301 = vmatpush1.bf16.msra.mxu0 %v3266
        %3302 = vmatprep.subr.bf16.mxu0 0
        %3303 = vmatpush1.bf16.msra.mxu0 %v3265
        %3304 = vmatprep.subr.bf16.mxu0 0
        %3305 = vmatpush1.bf16.msra.mxu0 %v3264
        %3306 = vmatprep.subr.bf16.mxu0 0
        %3307 = vmatpush1.bf16.msra.mxu0 %v3263
        %3308 = vmatprep.subr.bf16.mxu0 0
        %3309 = vmatpush1.bf16.msra.mxu0 %v3262
        %3310 = vmatprep.subr.bf16.mxu0 0
        %3311 = vmatpush2.bf16.msra.mxu0 %v3277
        %3312 = vmatprep.subr.bf16.mxu0 0
        %3313 = vmatpush2.bf16.msra.mxu0 %v3276
        %3314 = vmatprep.subr.bf16.mxu0 0
        %3315 = vmatpush2.bf16.msra.mxu0 %v3275
        %3316 = vmatprep.subr.bf16.mxu0 0
        %3317 = vmatpush2.bf16.msra.mxu0 %v3274
        %3318 = vmatprep.subr.bf16.mxu0 0
        %3319 = vmatpush2.bf16.msra.mxu0 %v3273
        %3320 = vmatprep.subr.bf16.mxu0 0
        %3321 = vmatpush2.bf16.msra.mxu0 %v3272
        %3322 = vmatprep.subr.bf16.mxu0 0
        %3323 = vmatpush2.bf16.msra.mxu0 %v3271
        %3324 = vmatprep.subr.bf16.mxu0 0
        %3325 = vmatpush2.bf16.msra.mxu0 %v3270
        %3326 = vmatprep.mubr.bf16.mxu0 %v3167
        %3327 = vmatmul.mubr.bf16.gmra.mxu0 %v3166
        %v3328 = vpop.f32.mrf.mxu0
        %v3329 = vadd.f32 0.0, %v3328
        %v3330 = vpop.f32.mrf.mxu0
        %v3331 = vpop.f32.mrf.mxu0
        %v3332 = vadd.f32 0.0, %v3331
        %v3333 = vpop.f32.mrf.mxu0
        %3334 = vmatprep.mubr.bf16.mxu0 %v3169
        %3335 = vmatmul.mubr.bf16.gmra.mxu0 %v3168
        %v3336 = vpop.f32.mrf.mxu0
        %v3337 = vadd.f32 0.0, %v3336
        %v3338 = vpop.f32.mrf.mxu0
        %v3339 = vpop.f32.mrf.mxu0
        %v3340 = vadd.f32 0.0, %v3339
        %v3341 = vpop.f32.mrf.mxu0
        %3342 = vmatprep.mubr.bf16.mxu0 %v3171
        %3343 = vmatmul.mubr.bf16.gmra.mxu0 %v3170
        %v3344 = vpop.f32.mrf.mxu0
        %v3345 = vadd.f32 0.0, %v3344
        %v3346 = vpop.f32.mrf.mxu0
        %v3347 = vpop.f32.mrf.mxu0
        %v3348 = vadd.f32 0.0, %v3347
        %v3349 = vpop.f32.mrf.mxu0
        %3350 = vmatprep.mubr.bf16.mxu0 %v3173
        %3351 = vmatmul.mubr.bf16.gmra.mxu0 %v3172
        %v3352 = vpop.f32.mrf.mxu0
        %v3353 = vadd.f32 0.0, %v3352
        %v3354 = vpop.f32.mrf.mxu0
        %v3355 = vpop.f32.mrf.mxu0
        %v3356 = vadd.f32 0.0, %v3355
        %v3357 = vpop.f32.mrf.mxu0
        %3358 = vmatprep.mubr.bf16.mxu0 %v3175
        %3359 = vmatmul.mubr.bf16.gmra.mxu0 %v3174
        %v3360 = vpop.f32.mrf.mxu0
        %v3361 = vadd.f32 0.0, %v3360
        %v3362 = vpop.f32.mrf.mxu0
        %v3363 = vpop.f32.mrf.mxu0
        %v3364 = vadd.f32 0.0, %v3363
        %v3365 = vpop.f32.mrf.mxu0
        %3366 = vmatprep.mubr.bf16.mxu0 %v3177
        %3367 = vmatmul.mubr.bf16.gmra.mxu0 %v3176
        %v3368 = vpop.f32.mrf.mxu0
        %v3369 = vadd.f32 0.0, %v3368
        %v3370 = vpop.f32.mrf.mxu0
        %v3371 = vpop.f32.mrf.mxu0
        %v3372 = vadd.f32 0.0, %v3371
        %v3373 = vpop.f32.mrf.mxu0
        %3374 = vmatprep.mubr.bf16.mxu0 %v3179
        %3375 = vmatmul.mubr.bf16.gmra.mxu0 %v3178
        %v3376 = vpop.f32.mrf.mxu0
        %v3377 = vadd.f32 0.0, %v3376
        %v3378 = vpop.f32.mrf.mxu0
        %v3379 = vpop.f32.mrf.mxu0
        %v3380 = vadd.f32 0.0, %v3379
        %v3381 = vpop.f32.mrf.mxu0
        %3382 = vmatprep.mubr.bf16.mxu0 %v3181
        %3383 = vmatmul.mubr.bf16.gmra.mxu0 %v3180
        %v3384 = vpop.f32.mrf.mxu0
        %v3385 = vadd.f32 0.0, %v3384
        %v3386 = vpop.f32.mrf.mxu0
        %v3387 = vpop.f32.mrf.mxu0
        %v3388 = vadd.f32 0.0, %v3387
        %v3389 = vpop.f32.mrf.mxu0
        %3390 = vmatprep.mubr.bf16.mxu0 %v3183
        %3391 = vmatmul.mubr.bf16.gmra.mxu0 %v3182
        %v3392 = vpop.f32.mrf.mxu0
        %v3393 = vadd.f32 0.0, %v3392
        %v3394 = vpop.f32.mrf.mxu0
        %v3395 = vpop.f32.mrf.mxu0
        %v3396 = vadd.f32 0.0, %v3395
        %v3397 = vpop.f32.mrf.mxu0
        %3398 = vmatprep.mubr.bf16.mxu0 %v3185
        %3399 = vmatmul.mubr.bf16.gmra.mxu0 %v3184
        %v3400 = vpop.f32.mrf.mxu0
        %v3401 = vadd.f32 0.0, %v3400
        %v3402 = vpop.f32.mrf.mxu0
        %v3403 = vpop.f32.mrf.mxu0
        %v3404 = vadd.f32 0.0, %v3403
        %v3405 = vpop.f32.mrf.mxu0
        %3406 = vmatprep.mubr.bf16.mxu0 %v3187
        %3407 = vmatmul.mubr.bf16.gmra.mxu0 %v3186
        %v3408 = vpop.f32.mrf.mxu0
        %v3409 = vadd.f32 0.0, %v3408
        %v3410 = vpop.f32.mrf.mxu0
        %v3411 = vpop.f32.mrf.mxu0
        %v3412 = vadd.f32 0.0, %v3411
        %v3413 = vpop.f32.mrf.mxu0
        %3414 = vmatprep.mubr.bf16.mxu0 %v3189
        %3415 = vmatmul.mubr.bf16.gmra.mxu0 %v3188
        %v3416 = vpop.f32.mrf.mxu0
        %v3417 = vadd.f32 0.0, %v3416
        %v3418 = vpop.f32.mrf.mxu0
        %v3419 = vpop.f32.mrf.mxu0
        %v3420 = vadd.f32 0.0, %v3419
        %v3421 = vpop.f32.mrf.mxu0
        %3422 = vmatprep.mubr.bf16.mxu0 %v3191
        %3423 = vmatmul.mubr.bf16.gmra.mxu0 %v3190
        %v3424 = vpop.f32.mrf.mxu0
        %v3425 = vadd.f32 0.0, %v3424
        %v3426 = vpop.f32.mrf.mxu0
        %v3427 = vpop.f32.mrf.mxu0
        %v3428 = vadd.f32 0.0, %v3427
        %v3429 = vpop.f32.mrf.mxu0
        %3430 = vmatprep.mubr.bf16.mxu0 %v3193
        %3431 = vmatmul.mubr.bf16.gmra.mxu0 %v3192
        %v3432 = vpop.f32.mrf.mxu0
        %v3433 = vadd.f32 0.0, %v3432
        %v3434 = vpop.f32.mrf.mxu0
        %v3435 = vpop.f32.mrf.mxu0
        %v3436 = vadd.f32 0.0, %v3435
        %v3437 = vpop.f32.mrf.mxu0
        %3438 = vmatprep.mubr.bf16.mxu0 %v3195
        %3439 = vmatmul.mubr.bf16.gmra.mxu0 %v3194
        %v3440 = vpop.f32.mrf.mxu0
        %v3441 = vadd.f32 0.0, %v3440
        %v3442 = vpop.f32.mrf.mxu0
        %v3443 = vpop.f32.mrf.mxu0
        %v3444 = vadd.f32 0.0, %v3443
        %v3445 = vpop.f32.mrf.mxu0
        %3446 = vmatprep.mubr.bf16.mxu0 %v3197
        %3447 = vmatmul.mubr.bf16.gmra.mxu0 %v3196
        %v3448 = vpop.f32.mrf.mxu0
        %v3449 = vadd.f32 0.0, %v3448
        %v3450 = vpop.f32.mrf.mxu0
        %v3451 = vpop.f32.mrf.mxu0
        %v3452 = vadd.f32 0.0, %v3451
        %v3453 = vpop.f32.mrf.mxu0
        %3454 = vdwg.mxu0
        %v3455 = vadd.f32 %v3134, %v3329
        %v3456 = vadd.f32 %v3135, %v3332
        %v3457 = vadd.f32 %v3136, %v3337
        %v3458 = vadd.f32 %v3137, %v3340
        %v3459 = vadd.f32 %v3138, %v3345
        %v3460 = vadd.f32 %v3139, %v3348
        %v3461 = vadd.f32 %v3140, %v3353
        %v3462 = vadd.f32 %v3141, %v3356
        %v3463 = vadd.f32 %v3142, %v3361
        %v3464 = vadd.f32 %v3143, %v3364
        %v3465 = vadd.f32 %v3144, %v3369
        %v3466 = vadd.f32 %v3145, %v3372
        %v3467 = vadd.f32 %v3146, %v3377
        %v3468 = vadd.f32 %v3147, %v3380
        %v3469 = vadd.f32 %v3148, %v3385
        %v3470 = vadd.f32 %v3149, %v3388
        %v3471 = vadd.f32 %v3150, %v3393
        %v3472 = vadd.f32 %v3151, %v3396
        %v3473 = vadd.f32 %v3152, %v3401
        %v3474 = vadd.f32 %v3153, %v3404
        %v3475 = vadd.f32 %v3154, %v3409
        %v3476 = vadd.f32 %v3155, %v3412
        %v3477 = vadd.f32 %v3156, %v3417
        %v3478 = vadd.f32 %v3157, %v3420
        %v3479 = vadd.f32 %v3158, %v3425
        %v3480 = vadd.f32 %v3159, %v3428
        %v3481 = vadd.f32 %v3160, %v3433
        %v3482 = vadd.f32 %v3161, %v3436
        %v3483 = vadd.f32 %v3162, %v3441
        %v3484 = vadd.f32 %v3163, %v3444
        %v3485 = vadd.f32 %v3164, %v3449
        %v3486 = vadd.f32 %v3165, %v3452
        %3487 = vst [vmem:[#allocation5] sm:$0xff] %v3455
        %3488 = vst [vmem:[#allocation5 + $0x8] sm:$0xff] %v3456
        %3489 = vst [vmem:[#allocation5 + $0x10] sm:$0xff] %v3457
        %3490 = vst [vmem:[#allocation5 + $0x18] sm:$0xff] %v3458
        %3491 = vst [vmem:[#allocation5 + $0x20] sm:$0xff] %v3459
        %3492 = vst [vmem:[#allocation5 + $0x28] sm:$0xff] %v3460
        %3493 = vst [vmem:[#allocation5 + $0x30] sm:$0xff] %v3461
        %3494 = vst [vmem:[#allocation5 + $0x38] sm:$0xff] %v3462
        %3495 = vst [vmem:[#allocation5 + $0x40] sm:$0xff] %v3463
        %3496 = vst [vmem:[#allocation5 + $0x48] sm:$0xff] %v3464
        %3497 = vst [vmem:[#allocation5 + $0x50] sm:$0xff] %v3465
        %3498 = vst [vmem:[#allocation5 + $0x58] sm:$0xff] %v3466
        %3499 = vst [vmem:[#allocation5 + $0x60] sm:$0xff] %v3467
        %3500 = vst [vmem:[#allocation5 + $0x68] sm:$0xff] %v3468
        %3501 = vst [vmem:[#allocation5 + $0x70] sm:$0xff] %v3469
        %3502 = vst [vmem:[#allocation5 + $0x78] sm:$0xff] %v3470
        %3503 = vst [vmem:[#allocation5 + $0x80] sm:$0xff] %v3471
        %3504 = vst [vmem:[#allocation5 + $0x88] sm:$0xff] %v3472
        %3505 = vst [vmem:[#allocation5 + $0x90] sm:$0xff] %v3473
        %3506 = vst [vmem:[#allocation5 + $0x98] sm:$0xff] %v3474
        %3507 = vst [vmem:[#allocation5 + $0xa0] sm:$0xff] %v3475
        %3508 = vst [vmem:[#allocation5 + $0xa8] sm:$0xff] %v3476
        %3509 = vst [vmem:[#allocation5 + $0xb0] sm:$0xff] %v3477
        %3510 = vst [vmem:[#allocation5 + $0xb8] sm:$0xff] %v3478
        %3511 = vst [vmem:[#allocation5 + $0xc0] sm:$0xff] %v3479
        %3512 = vst [vmem:[#allocation5 + $0xc8] sm:$0xff] %v3480
        %3513 = vst [vmem:[#allocation5 + $0xd0] sm:$0xff] %v3481
        %3514 = vst [vmem:[#allocation5 + $0xd8] sm:$0xff] %v3482
        %3515 = vst [vmem:[#allocation5 + $0xe0] sm:$0xff] %v3483
        %3516 = vst [vmem:[#allocation5 + $0xe8] sm:$0xff] %v3484
        %3517 = vst [vmem:[#allocation5 + $0xf0] sm:$0xff] %v3485
        %3518 = vst [vmem:[#allocation5 + $0xf8] sm:$0xff] %v3486
        %3519 = vst.msk [vmem:[#allocation3] sm:$0xff] %vm2909, %v2237
        %3520 = vst.msk [vmem:[#allocation3 + $0x8] sm:$0xff] %vm2909, %v2238
        %3521 = vst.msk [vmem:[#allocation3 + $0x10] sm:$0xff] %vm2909, %v2239
        %3522 = vst.msk [vmem:[#allocation3 + $0x18] sm:$0xff] %vm2909, %v2240
        %3523 = vst.msk [vmem:[#allocation3 + $0x20] sm:$0xff] %vm2909, %v2241
        %3524 = vst.msk [vmem:[#allocation3 + $0x28] sm:$0xff] %vm2909, %v2242
        %3525 = vst.msk [vmem:[#allocation3 + $0x30] sm:$0xff] %vm2909, %v2243
        %3526 = vst.msk [vmem:[#allocation3 + $0x38] sm:$0xff] %vm2909, %v2244
        %3527 = vst.msk [vmem:[#allocation3 + $0x40] sm:$0xff] %vm2909, %v2245
        %3528 = vst.msk [vmem:[#allocation3 + $0x48] sm:$0xff] %vm2909, %v2246
        %3529 = vst.msk [vmem:[#allocation3 + $0x50] sm:$0xff] %vm2909, %v2247
        %3530 = vst.msk [vmem:[#allocation3 + $0x58] sm:$0xff] %vm2909, %v2248
        %3531 = vst.msk [vmem:[#allocation3 + $0x60] sm:$0xff] %vm2909, %v2249
        %3532 = vst.msk [vmem:[#allocation3 + $0x68] sm:$0xff] %vm2909, %v2250
        %3533 = vst.msk [vmem:[#allocation3 + $0x70] sm:$0xff] %vm2909, %v2251
        %3534 = vst.msk [vmem:[#allocation3 + $0x78] sm:$0xff] %vm2909, %v2252
        %3535 = vst.msk [vmem:[#allocation3 + $0x80] sm:$0xff] %vm2909, %v2253
        %3536 = vst.msk [vmem:[#allocation3 + $0x88] sm:$0xff] %vm2909, %v2254
        %3537 = vst.msk [vmem:[#allocation3 + $0x90] sm:$0xff] %vm2909, %v2255
        %3538 = vst.msk [vmem:[#allocation3 + $0x98] sm:$0xff] %vm2909, %v2256
        %3539 = vst.msk [vmem:[#allocation3 + $0xa0] sm:$0xff] %vm2909, %v2257
        %3540 = vst.msk [vmem:[#allocation3 + $0xa8] sm:$0xff] %vm2909, %v2258
        %3541 = vst.msk [vmem:[#allocation3 + $0xb0] sm:$0xff] %vm2909, %v2259
        %3542 = vst.msk [vmem:[#allocation3 + $0xb8] sm:$0xff] %vm2909, %v2260
        %3543 = vst.msk [vmem:[#allocation3 + $0xc0] sm:$0xff] %vm2909, %v2261
        %3544 = vst.msk [vmem:[#allocation3 + $0xc8] sm:$0xff] %vm2909, %v2262
        %3545 = vst.msk [vmem:[#allocation3 + $0xd0] sm:$0xff] %vm2909, %v2263
        %3546 = vst.msk [vmem:[#allocation3 + $0xd8] sm:$0xff] %vm2909, %v2264
        %3547 = vst.msk [vmem:[#allocation3 + $0xe0] sm:$0xff] %vm2909, %v2265
        %3548 = vst.msk [vmem:[#allocation3 + $0xe8] sm:$0xff] %vm2909, %v2266
        %3549 = vst.msk [vmem:[#allocation3 + $0xf0] sm:$0xff] %vm2909, %v2267
        %3550 = vst.msk [vmem:[#allocation3 + $0xf8] sm:$0xff] %vm2909, %v2268
        %p3551 = scmp.eq.s32.totalorder %s34, 1
        // Predicated region
        $region69: #{tpu_custom_call.1} parent=43 // pred_check
          %p3552 = pneg %p3551
        $region70: #{tpu_custom_call.1} parent=43 // pred_check_branch
          %3554 = sbr.rel (%p3552) target = $region72
        $region71: #{tpu_custom_call.1} parent=43 // pred_region
          %v3555 = vld [vmem:[#allocation4] sm:$0xff]
          %v3556 = vld [vmem:[#allocation4 + $0x8] sm:$0xff]
          %v3557 = vld [vmem:[#allocation4 + $0x10] sm:$0xff]
          %v3558 = vld [vmem:[#allocation4 + $0x18] sm:$0xff]
          %v3559 = vld [vmem:[#allocation4 + $0x20] sm:$0xff]
          %v3560 = vld [vmem:[#allocation4 + $0x28] sm:$0xff]
          %v3561 = vld [vmem:[#allocation4 + $0x30] sm:$0xff]
          %v3562 = vld [vmem:[#allocation4 + $0x38] sm:$0xff]
          %v3563 = vld [vmem:[#allocation4 + $0x40] sm:$0xff]
          %v3564 = vld [vmem:[#allocation4 + $0x48] sm:$0xff]
          %v3565 = vld [vmem:[#allocation4 + $0x50] sm:$0xff]
          %v3566 = vld [vmem:[#allocation4 + $0x58] sm:$0xff]
          %v3567 = vld [vmem:[#allocation4 + $0x60] sm:$0xff]
          %v3568 = vld [vmem:[#allocation4 + $0x68] sm:$0xff]
          %v3569 = vld [vmem:[#allocation4 + $0x70] sm:$0xff]
          %v3570 = vld [vmem:[#allocation4 + $0x78] sm:$0xff]
          %v3571 = vld [vmem:[#allocation4 + $0x80] sm:$0xff]
          %v3572 = vld [vmem:[#allocation4 + $0x88] sm:$0xff]
          %v3573 = vld [vmem:[#allocation4 + $0x90] sm:$0xff]
          %v3574 = vld [vmem:[#allocation4 + $0x98] sm:$0xff]
          %v3575 = vld [vmem:[#allocation4 + $0xa0] sm:$0xff]
          %v3576 = vld [vmem:[#allocation4 + $0xa8] sm:$0xff]
          %v3577 = vld [vmem:[#allocation4 + $0xb0] sm:$0xff]
          %v3578 = vld [vmem:[#allocation4 + $0xb8] sm:$0xff]
          %v3579 = vld [vmem:[#allocation4 + $0xc0] sm:$0xff]
          %v3580 = vld [vmem:[#allocation4 + $0xc8] sm:$0xff]
          %v3581 = vld [vmem:[#allocation4 + $0xd0] sm:$0xff]
          %v3582 = vld [vmem:[#allocation4 + $0xd8] sm:$0xff]
          %v3583 = vld [vmem:[#allocation4 + $0xe0] sm:$0xff]
          %v3584 = vld [vmem:[#allocation4 + $0xe8] sm:$0xff]
          %v3585 = vld [vmem:[#allocation4 + $0xf0] sm:$0xff]
          %v3586 = vld [vmem:[#allocation4 + $0xf8] sm:$0xff]
          %v3587 = vrcp.pop %v3555
          %v3588 = vrcp.pop %v3556
          %v3589 = vrcp.pop %v3557
          %v3590 = vrcp.pop %v3558
          %v3591 = vrcp.pop %v3559
          %v3592 = vrcp.pop %v3560
          %v3593 = vrcp.pop %v3561
          %v3594 = vrcp.pop %v3562
          %v3595 = vrcp.pop %v3563
          %v3596 = vrcp.pop %v3564
          %v3597 = vrcp.pop %v3565
          %v3598 = vrcp.pop %v3566
          %v3599 = vrcp.pop %v3567
          %v3600 = vrcp.pop %v3568
          %v3601 = vrcp.pop %v3569
          %v3602 = vrcp.pop %v3570
          %v3603 = vrcp.pop %v3571
          %v3604 = vrcp.pop %v3572
          %v3605 = vrcp.pop %v3573
          %v3606 = vrcp.pop %v3574
          %v3607 = vrcp.pop %v3575
          %v3608 = vrcp.pop %v3576
          %v3609 = vrcp.pop %v3577
          %v3610 = vrcp.pop %v3578
          %v3611 = vrcp.pop %v3579
          %v3612 = vrcp.pop %v3580
          %v3613 = vrcp.pop %v3581
          %v3614 = vrcp.pop %v3582
          %v3615 = vrcp.pop %v3583
          %v3616 = vrcp.pop %v3584
          %v3617 = vrcp.pop %v3585
          %v3618 = vrcp.pop %v3586
          %v3619 = vld [vmem:[#allocation5] sm:$0xff]
          %v3620 = vld [vmem:[#allocation5 + $0x8] sm:$0xff]
          %v3621 = vld [vmem:[#allocation5 + $0x10] sm:$0xff]
          %v3622 = vld [vmem:[#allocation5 + $0x18] sm:$0xff]
          %v3623 = vld [vmem:[#allocation5 + $0x20] sm:$0xff]
          %v3624 = vld [vmem:[#allocation5 + $0x28] sm:$0xff]
          %v3625 = vld [vmem:[#allocation5 + $0x30] sm:$0xff]
          %v3626 = vld [vmem:[#allocation5 + $0x38] sm:$0xff]
          %v3627 = vld [vmem:[#allocation5 + $0x40] sm:$0xff]
          %v3628 = vld [vmem:[#allocation5 + $0x48] sm:$0xff]
          %v3629 = vld [vmem:[#allocation5 + $0x50] sm:$0xff]
          %v3630 = vld [vmem:[#allocation5 + $0x58] sm:$0xff]
          %v3631 = vld [vmem:[#allocation5 + $0x60] sm:$0xff]
          %v3632 = vld [vmem:[#allocation5 + $0x68] sm:$0xff]
          %v3633 = vld [vmem:[#allocation5 + $0x70] sm:$0xff]
          %v3634 = vld [vmem:[#allocation5 + $0x78] sm:$0xff]
          %v3635 = vld [vmem:[#allocation5 + $0x80] sm:$0xff]
          %v3636 = vld [vmem:[#allocation5 + $0x88] sm:$0xff]
          %v3637 = vld [vmem:[#allocation5 + $0x90] sm:$0xff]
          %v3638 = vld [vmem:[#allocation5 + $0x98] sm:$0xff]
          %v3639 = vld [vmem:[#allocation5 + $0xa0] sm:$0xff]
          %v3640 = vld [vmem:[#allocation5 + $0xa8] sm:$0xff]
          %v3641 = vld [vmem:[#allocation5 + $0xb0] sm:$0xff]
          %v3642 = vld [vmem:[#allocation5 + $0xb8] sm:$0xff]
          %v3643 = vld [vmem:[#allocation5 + $0xc0] sm:$0xff]
          %v3644 = vld [vmem:[#allocation5 + $0xc8] sm:$0xff]
          %v3645 = vld [vmem:[#allocation5 + $0xd0] sm:$0xff]
          %v3646 = vld [vmem:[#allocation5 + $0xd8] sm:$0xff]
          %v3647 = vld [vmem:[#allocation5 + $0xe0] sm:$0xff]
          %v3648 = vld [vmem:[#allocation5 + $0xe8] sm:$0xff]
          %v3649 = vld [vmem:[#allocation5 + $0xf0] sm:$0xff]
          %v3650 = vld [vmem:[#allocation5 + $0xf8] sm:$0xff]
          %3652 = vset.pattern.permute.xlu0 0
          %3653 = vperm.xlu0 %3652, %v3587
          %v3654 = vpop.permute.xlu0 %3653
          %3657 = vset.pattern.permute.xlu0 0
          %3658 = vperm.xlu0 %3657, %v3588
          %v3659 = vpop.permute.xlu0 %3658
          %3662 = vset.pattern.permute.xlu0 0
          %3663 = vperm.xlu0 %3662, %v3589
          %v3664 = vpop.permute.xlu0 %3663
          %3667 = vset.pattern.permute.xlu0 0
          %3668 = vperm.xlu0 %3667, %v3590
          %v3669 = vpop.permute.xlu0 %3668
          %3672 = vset.pattern.permute.xlu0 0
          %3673 = vperm.xlu0 %3672, %v3591
          %v3674 = vpop.permute.xlu0 %3673
          %3677 = vset.pattern.permute.xlu0 0
          %3678 = vperm.xlu0 %3677, %v3592
          %v3679 = vpop.permute.xlu0 %3678
          %3682 = vset.pattern.permute.xlu0 0
          %3683 = vperm.xlu0 %3682, %v3593
          %v3684 = vpop.permute.xlu0 %3683
          %3687 = vset.pattern.permute.xlu0 0
          %3688 = vperm.xlu0 %3687, %v3594
          %v3689 = vpop.permute.xlu0 %3688
          %3692 = vset.pattern.permute.xlu0 0
          %3693 = vperm.xlu0 %3692, %v3595
          %v3694 = vpop.permute.xlu0 %3693
          %3697 = vset.pattern.permute.xlu0 0
          %3698 = vperm.xlu0 %3697, %v3596
          %v3699 = vpop.permute.xlu0 %3698
          %3702 = vset.pattern.permute.xlu0 0
          %3703 = vperm.xlu0 %3702, %v3597
          %v3704 = vpop.permute.xlu0 %3703
          %3707 = vset.pattern.permute.xlu0 0
          %3708 = vperm.xlu0 %3707, %v3598
          %v3709 = vpop.permute.xlu0 %3708
          %3712 = vset.pattern.permute.xlu0 0
          %3713 = vperm.xlu0 %3712, %v3599
          %v3714 = vpop.permute.xlu0 %3713
          %3717 = vset.pattern.permute.xlu0 0
          %3718 = vperm.xlu0 %3717, %v3600
          %v3719 = vpop.permute.xlu0 %3718
          %3722 = vset.pattern.permute.xlu0 0
          %3723 = vperm.xlu0 %3722, %v3601
          %v3724 = vpop.permute.xlu0 %3723
          %3727 = vset.pattern.permute.xlu0 0
          %3728 = vperm.xlu0 %3727, %v3602
          %v3729 = vpop.permute.xlu0 %3728
          %3732 = vset.pattern.permute.xlu0 0
          %3733 = vperm.xlu0 %3732, %v3603
          %v3734 = vpop.permute.xlu0 %3733
          %3737 = vset.pattern.permute.xlu0 0
          %3738 = vperm.xlu0 %3737, %v3604
          %v3739 = vpop.permute.xlu0 %3738
          %3742 = vset.pattern.permute.xlu0 0
          %3743 = vperm.xlu0 %3742, %v3605
          %v3744 = vpop.permute.xlu0 %3743
          %3747 = vset.pattern.permute.xlu0 0
          %3748 = vperm.xlu0 %3747, %v3606
          %v3749 = vpop.permute.xlu0 %3748
          %3752 = vset.pattern.permute.xlu0 0
          %3753 = vperm.xlu0 %3752, %v3607
          %v3754 = vpop.permute.xlu0 %3753
          %3757 = vset.pattern.permute.xlu0 0
          %3758 = vperm.xlu0 %3757, %v3608
          %v3759 = vpop.permute.xlu0 %3758
          %3762 = vset.pattern.permute.xlu0 0
          %3763 = vperm.xlu0 %3762, %v3609
          %v3764 = vpop.permute.xlu0 %3763
          %3767 = vset.pattern.permute.xlu0 0
          %3768 = vperm.xlu0 %3767, %v3610
          %v3769 = vpop.permute.xlu0 %3768
          %3772 = vset.pattern.permute.xlu0 0
          %3773 = vperm.xlu0 %3772, %v3611
          %v3774 = vpop.permute.xlu0 %3773
          %3777 = vset.pattern.permute.xlu0 0
          %3778 = vperm.xlu0 %3777, %v3612
          %v3779 = vpop.permute.xlu0 %3778
          %3782 = vset.pattern.permute.xlu0 0
          %3783 = vperm.xlu0 %3782, %v3613
          %v3784 = vpop.permute.xlu0 %3783
          %3787 = vset.pattern.permute.xlu0 0
          %3788 = vperm.xlu0 %3787, %v3614
          %v3789 = vpop.permute.xlu0 %3788
          %3792 = vset.pattern.permute.xlu0 0
          %3793 = vperm.xlu0 %3792, %v3615
          %v3794 = vpop.permute.xlu0 %3793
          %3797 = vset.pattern.permute.xlu0 0
          %3798 = vperm.xlu0 %3797, %v3616
          %v3799 = vpop.permute.xlu0 %3798
          %3802 = vset.pattern.permute.xlu0 0
          %3803 = vperm.xlu0 %3802, %v3617
          %v3804 = vpop.permute.xlu0 %3803
          %3807 = vset.pattern.permute.xlu0 0
          %3808 = vperm.xlu0 %3807, %v3618
          %v3809 = vpop.permute.xlu0 %3808
          %v3811 = vmul.f32 %v3619, %v3654
          %v3812 = vmul.f32 %v3620, %v3659
          %v3813 = vmul.f32 %v3621, %v3664
          %v3814 = vmul.f32 %v3622, %v3669
          %v3815 = vmul.f32 %v3623, %v3674
          %v3816 = vmul.f32 %v3624, %v3679
          %v3817 = vmul.f32 %v3625, %v3684
          %v3818 = vmul.f32 %v3626, %v3689
          %v3819 = vmul.f32 %v3627, %v3694
          %v3820 = vmul.f32 %v3628, %v3699
          %v3821 = vmul.f32 %v3629, %v3704
          %v3822 = vmul.f32 %v3630, %v3709
          %v3823 = vmul.f32 %v3631, %v3714
          %v3824 = vmul.f32 %v3632, %v3719
          %v3825 = vmul.f32 %v3633, %v3724
          %v3826 = vmul.f32 %v3634, %v3729
          %v3827 = vmul.f32 %v3635, %v3734
          %v3828 = vmul.f32 %v3636, %v3739
          %v3829 = vmul.f32 %v3637, %v3744
          %v3830 = vmul.f32 %v3638, %v3749
          %v3831 = vmul.f32 %v3639, %v3754
          %v3832 = vmul.f32 %v3640, %v3759
          %v3833 = vmul.f32 %v3641, %v3764
          %v3834 = vmul.f32 %v3642, %v3769
          %v3835 = vmul.f32 %v3643, %v3774
          %v3836 = vmul.f32 %v3644, %v3779
          %v3837 = vmul.f32 %v3645, %v3784
          %v3838 = vmul.f32 %v3646, %v3789
          %v3839 = vmul.f32 %v3647, %v3794
          %v3840 = vmul.f32 %v3648, %v3799
          %v3841 = vmul.f32 %v3649, %v3804
          %v3842 = vmul.f32 %v3650, %v3809
          %v3843 = vld [vmem:[%s5] sm:$0x1]
          %v3845 = vlaneseq
          %v3846 = vshrl.u32 %v3845, 7
          %v3847 = vsub.s32 0, %v3846
          %v3848 = vrot.slane %v3843, %v3847
          %v3850 = vadd.f32 %v3811, %v3848
          %v3851 = vadd.f32 %v3812, %v3848
          %v3852 = vadd.f32 %v3813, %v3848
          %v3853 = vadd.f32 %v3814, %v3848
          %v3854 = vadd.f32 %v3815, %v3848
          %v3855 = vadd.f32 %v3816, %v3848
          %v3856 = vadd.f32 %v3817, %v3848
          %v3857 = vadd.f32 %v3818, %v3848
          %v3858 = vadd.f32 %v3819, %v3848
          %v3859 = vadd.f32 %v3820, %v3848
          %v3860 = vadd.f32 %v3821, %v3848
          %v3861 = vadd.f32 %v3822, %v3848
          %v3862 = vadd.f32 %v3823, %v3848
          %v3863 = vadd.f32 %v3824, %v3848
          %v3864 = vadd.f32 %v3825, %v3848
          %v3865 = vadd.f32 %v3826, %v3848
          %v3866 = vadd.f32 %v3827, %v3848
          %v3867 = vadd.f32 %v3828, %v3848
          %v3868 = vadd.f32 %v3829, %v3848
          %v3869 = vadd.f32 %v3830, %v3848
          %v3870 = vadd.f32 %v3831, %v3848
          %v3871 = vadd.f32 %v3832, %v3848
          %v3872 = vadd.f32 %v3833, %v3848
          %v3873 = vadd.f32 %v3834, %v3848
          %v3874 = vadd.f32 %v3835, %v3848
          %v3875 = vadd.f32 %v3836, %v3848
          %v3876 = vadd.f32 %v3837, %v3848
          %v3877 = vadd.f32 %v3838, %v3848
          %v3878 = vadd.f32 %v3839, %v3848
          %v3879 = vadd.f32 %v3840, %v3848
          %v3880 = vadd.f32 %v3841, %v3848
          %v3881 = vadd.f32 %v3842, %v3848
          %3882 = vst [vmem:[%s373] sm:$0xff] %v3850
          %3883 = vst [vmem:[%s373 + $0x8] sm:$0xff] %v3851
          %3884 = vst [vmem:[%s373 + $0x10] sm:$0xff] %v3852
          %3885 = vst [vmem:[%s373 + $0x18] sm:$0xff] %v3853
          %3886 = vst [vmem:[%s373 + $0x20] sm:$0xff] %v3854
          %3887 = vst [vmem:[%s373 + $0x28] sm:$0xff] %v3855
          %3888 = vst [vmem:[%s373 + $0x30] sm:$0xff] %v3856
          %3889 = vst [vmem:[%s373 + $0x38] sm:$0xff] %v3857
          %3890 = vst [vmem:[%s373 + $0x40] sm:$0xff] %v3858
          %3891 = vst [vmem:[%s373 + $0x48] sm:$0xff] %v3859
          %3892 = vst [vmem:[%s373 + $0x50] sm:$0xff] %v3860
          %3893 = vst [vmem:[%s373 + $0x58] sm:$0xff] %v3861
          %3894 = vst [vmem:[%s373 + $0x60] sm:$0xff] %v3862
          %3895 = vst [vmem:[%s373 + $0x68] sm:$0xff] %v3863
          %3896 = vst [vmem:[%s373 + $0x70] sm:$0xff] %v3864
          %3897 = vst [vmem:[%s373 + $0x78] sm:$0xff] %v3865
          %3898 = vst [vmem:[%s373 + $0x80] sm:$0xff] %v3866
          %3899 = vst [vmem:[%s373 + $0x88] sm:$0xff] %v3867
          %3900 = vst [vmem:[%s373 + $0x90] sm:$0xff] %v3868
          %3901 = vst [vmem:[%s373 + $0x98] sm:$0xff] %v3869
          %3902 = vst [vmem:[%s373 + $0xa0] sm:$0xff] %v3870
          %3903 = vst [vmem:[%s373 + $0xa8] sm:$0xff] %v3871
          %3904 = vst [vmem:[%s373 + $0xb0] sm:$0xff] %v3872
          %3905 = vst [vmem:[%s373 + $0xb8] sm:$0xff] %v3873
          %3906 = vst [vmem:[%s373 + $0xc0] sm:$0xff] %v3874
          %3907 = vst [vmem:[%s373 + $0xc8] sm:$0xff] %v3875
          %3908 = vst [vmem:[%s373 + $0xd0] sm:$0xff] %v3876
          %3909 = vst [vmem:[%s373 + $0xd8] sm:$0xff] %v3877
          %3910 = vst [vmem:[%s373 + $0xe0] sm:$0xff] %v3878
          %3911 = vst [vmem:[%s373 + $0xe8] sm:$0xff] %v3879
          %3912 = vst [vmem:[%s373 + $0xf0] sm:$0xff] %v3880
          %3913 = vst [vmem:[%s373 + $0xf8] sm:$0xff] %v3881
        $region72: #{tpu_custom_call.1} parent=43 // pred_fallthru
          _
        %s3914 = sand.u32 %s200, 1
        %s3915 = scalar_lea.sflag [#allocation10], %s3914
        %s3916 = sand.u32 %s200, 1
        %s3917 = smul.addr %s3916, 256
        %s3918 = scalar_lea.vmem [#allocation16], %s3917
        // Predicated region
        $region73: #{tpu_custom_call.1} parent=43 // pred_check
          %p3919 = pneg %p210
        $region74: #{tpu_custom_call.1} parent=43 // pred_check_branch
          %3921 = sbr.rel (%p3919) target = $region76
        $region75: #{tpu_custom_call.1} parent=43 // pred_region
          %s3922 = smul.u32 32, %s33
          %s3924 = ssub.s32 4096, 4096
          %3925 = vsyncadd %s3915, %s3924
          %s3926 = smul.addr %s32, 64
          %s3927 = sadd.s32 %s3922, %s3926
          %s3928 = smul.addr %s3927, 128
          %s3929 = scalar_lea.hbm %s6, %s3928
          %s3930 = sshll.u32 %s3918, 4
          %s3931 = int_to_ptr.vmem [resolvable:$true] %s3930
          %3936 = dma.vmem_to_hbm [thread:$0]  %s3931, 4096, %s3929, %s3915, 128, 128, 8
        $region76: #{tpu_custom_call.1} parent=43 // pred_fallthru
          _
      $region44: #{tpu_custom_call.1} parent=5 // pred_fallthru
        _
      %p3937 = scmp.le.s32.totalorder 2, %s22
      // Predicated region
      $region77: #{tpu_custom_call.1} parent=5 // pred_check
        %p3938 = pneg %p3937
      $region78: #{tpu_custom_call.1} parent=5 // pred_check_branch
        %3940 = sbr.rel (%p3938) target = $region80
      $region79: #{tpu_custom_call.1} parent=5 // pred_region
        %s3941 = ssub.s32 %s22, 2
        // Predicated region
        $region81: #{tpu_custom_call.1} parent=79 // pred_check
          %p3942 = pneg %p216
        $region82: #{tpu_custom_call.1} parent=79 // pred_check_branch
          %3944 = sbr.rel (%p3942) target = $region84
        $region83: #{tpu_custom_call.1} parent=79 // pred_region
          %s3945 = sand.u32 %s201, 1
          %s3946 = scalar_lea.sflag [#allocation10], %s3945
          %s3947 = sand.u32 %s201, 1
          %s3948 = smul.addr %s3947, 256
          %s3949 = scalar_lea.vmem [#allocation16], %s3948
          %3950 = dma.done %s3946, 4096
        $region84: #{tpu_custom_call.1} parent=79 // pred_fallthru
          _
      $region80: #{tpu_custom_call.1} parent=5 // pred_fallthru
        _
    $region6: #{tpu_custom_call.1} parent=1 // loop_footer
      %s26 = sadd.s32 1, %s22
    $region7: #{tpu_custom_call.1} parent=1 // loop_footer_branch
      %21 = sbr.rel target = $region3
    $region8: #{tpu_custom_call.1} parent=1 // loop_exit
      _
    %3951 = vsyncpa [#allocation9], 1
    %s3952 = scalar_lea.sflag [#allocation9], 1
    %3953 = vsyncpa %s3952, 1
    %3954 = vsyncpa [#allocation12], 1
    %s3955 = scalar_lea.sflag [#allocation12], 1
    %3956 = vsyncpa %s3955, 1
    %3957 = vsyncpa [#allocation15], 1
    %3958 = vsyncpa [#allocation10], 1
    %s3959 = scalar_lea.sflag [#allocation10], 1
    %3960 = vsyncpa %s3959, 1

</llo_original>
